<compile_context>
chip_gen: v5e
topology: v5e:2x2
jax: 0.10.0
libtpu: 0.0.40
codegen_flags: <defaults>
</compile_context>

<pallas_src>
import jax
import jax.numpy as jnp
import numpy as np
from jax.experimental import pallas as pl
from jax.experimental.pallas import tpu as pltpu


def residual_block_kernel(x_ref, w1_ref, w2_ref,
                          s1_ref, b1_ref, s2_ref, b2_ref,
                          o_ref, pad_ref):
    # x_ref:  (Nb, H, W, C)       bf16  unpadded input block (also the residual shortcut)
    # w*_ref: (9, C, C)           bf16  3x3 conv weights, tap-major (t = dy*3+dx), cin x cout
    # s*/b*:  (1, C)              f32   folded BatchNorm scale / bias
    # o_ref:  (Nb, H, W, C)             output block
    # pad_ref (scratch): (Nb, H+2, W+2, C) bf16  zero-padded activation, reused by both convs
    Nb, H, W, C = x_ref.shape
    Hp, Wp = H + 2, W + 2
    M = Nb * H * W

    # ---- stage the padded input: zero only the 1-pixel border, copy the interior ----
    pad_ref[:, 0:1, :, :] = jnp.zeros((Nb, 1, Wp, C), jnp.bfloat16)
    pad_ref[:, Hp - 1:Hp, :, :] = jnp.zeros((Nb, 1, Wp, C), jnp.bfloat16)
    pad_ref[:, 1:1 + H, 0:1, :] = jnp.zeros((Nb, H, 1, C), jnp.bfloat16)
    pad_ref[:, 1:1 + H, Wp - 1:Wp, :] = jnp.zeros((Nb, H, 1, C), jnp.bfloat16)
    pad_ref[:, 1:1 + H, 1:1 + W, :] = x_ref[...]

    def conv3x3(w_ref):
        # 3x3 conv as 9 accumulating MXU matmuls; each tap window is sliced directly
        # off the padded scratch ref (never materialized whole in vregs).
        acc = None
        for dy in range(3):
            for dx in range(3):
                t = dy * 3 + dx
                win = pad_ref[:, dy:dy + H, dx:dx + W, :]              # (Nb,H,W,C) bf16
                part = jnp.dot(win.reshape(M, C), w_ref[t],
                               preferred_element_type=jnp.float32)      # (M,C) f32
                acc = part if acc is None else acc + part
        return acc

    # ---- conv1 -> bn1 (folded) -> relu, f32 accumulation / epilogue ----
    h = jnp.maximum(conv3x3(w1_ref) * s1_ref[...] + b1_ref[...], 0.0)

    # overwrite the scratch interior with the intermediate (border is still zero)
    pad_ref[:, 1:1 + H, 1:1 + W, :] = h.reshape(Nb, H, W, C).astype(jnp.bfloat16)

    # ---- conv2 -> bn2 (folded) ----
    y = conv3x3(w2_ref) * s2_ref[...] + b2_ref[...]
    # Dropout(p=0.1) in eval mode = identity.
    # TODO(synk): training-mode stochastic dropout mask intentionally omitted.

    # ---- residual add + relu against the unpadded input block ----
    shortcut = x_ref[...].astype(jnp.float32).reshape(M, C)
    o_ref[...] = jnp.maximum(y + shortcut, 0.0).reshape(Nb, H, W, C).astype(o_ref.dtype)


def _pick_batch_block(N, H, W, C):
    """Largest divisor of N keeping the per-step VMEM footprint modest, preferring
    Nb*H*W >= 512 matmul rows (fills a 256x256 / 4x128x128 MXU M-dimension)."""
    best = 1
    for nb in range(1, N + 1):
        if N % nb:
            continue
        step_bytes = (2 * nb * H * W * C * 2            # bf16 input, double-buffered
                      + 2 * nb * H * W * C * 4          # f32 output, double-buffered
                      + nb * (H + 2) * (W + 2) * C * 2)  # padded bf16 scratch
        if step_bytes > 24 * 1024 * 1024:
            break
        best = nb
        if nb * H * W >= 512:
            break
    return best


def residual_block(x_nhwc, w1_hwio, w2_hwio, bn1, bn2, eps=1e-5, out_dtype=jnp.float32):
    """x_nhwc: (N,H,W,C) f32; w*_hwio: (3,3,C,C); bn* = (gamma, beta, mean, var)."""
    N, H, W, C = x_nhwc.shape

    def fold_bn(gamma, beta, mean, var):
        scale = gamma / jnp.sqrt(var + eps)
        bias = beta - mean * scale
        return (scale.reshape(1, C).astype(jnp.float32),
                bias.reshape(1, C).astype(jnp.float32))

    s1, b1 = fold_bn(*bn1)
    s2, b2 = fold_bn(*bn2)

    # Single bf16 input stream (padding happens in-kernel); tap-major conv weights.
    x_bf = x_nhwc.astype(jnp.bfloat16)
    w1 = w1_hwio.reshape(9, C, C).astype(jnp.bfloat16)   # [t, cin, cout], t = dy*3+dx
    w2 = w2_hwio.reshape(9, C, C).astype(jnp.bfloat16)

    nb = _pick_batch_block(N, H, W, C)
    grid = (N // nb,)

    # TODO(synk): for large spatial sizes (esp. v7x's 64 MiB VMEM) add a row-block grid
    # axis with a 2-row halo instead of whole-image blocks.
    # TODO(synk): for production filters=320, pad the channel/lane dim to 384 (3*128) so
    # VPU ops and output stores are lane-dense.
    # TODO(synk): on v7x, mark w1/w2 and BN params pipeline_mode=pl.Buffered(1) (constant
    # index maps) to drop the duplicate resident weight buffers.
    return pl.pallas_call(
        residual_block_kernel,
        out_shape=jax.ShapeDtypeStruct((N, H, W, C), out_dtype),
        grid=grid,
        in_specs=[
            pl.BlockSpec((nb, H, W, C), lambda n: (n, 0, 0, 0)),   # x (conv input + shortcut)
            pl.BlockSpec((9, C, C), lambda n: (0, 0, 0)),          # w1 (resident across grid)
            pl.BlockSpec((9, C, C), lambda n: (0, 0, 0)),          # w2 (resident across grid)
            pl.BlockSpec((1, C), lambda n: (0, 0)),                # bn1 scale
            pl.BlockSpec((1, C), lambda n: (0, 0)),                # bn1 bias
            pl.BlockSpec((1, C), lambda n: (0, 0)),                # bn2 scale
            pl.BlockSpec((1, C), lambda n: (0, 0)),                # bn2 bias
        ],
        out_specs=pl.BlockSpec((nb, H, W, C), lambda n: (n, 0, 0, 0)),
        scratch_shapes=[
            pltpu.VMEM((nb, H + 2, W + 2, C), jnp.bfloat16),       # padded activation (shared)
        ],
        compiler_params=pltpu.CompilerParams(
            dimension_semantics=("parallel",),      # megacore-shard the batch-block axis
            vmem_limit_bytes=64 * 1024 * 1024),
    )(x_bf, w1, w2, s1, b1, s2, b2)


def residual_block_reference(x_nhwc, w1_hwio, w2_hwio, bn1, bn2, eps=1e-5):
    """Pure-JAX reference matching torch semantics (eval mode)."""
    def conv(x, w):
        return jax.lax.conv_general_dilated(
            x, w, window_strides=(1, 1), padding="SAME",
            dimension_numbers=("NHWC", "HWIO", "NHWC"))

    def bn(x, p):
        g, b, m, v = p
        return (x - m) / jnp.sqrt(v + eps) * g + b

    h = jax.nn.relu(bn(conv(x_nhwc, w1_hwio), bn1))
    y = bn(conv(h, w2_hwio), bn2)          # dropout eval -> identity
    return jax.nn.relu(y + x_nhwc)


if __name__ == "__main__":
    # small stand-in for filters=320 (synthetic shapes)
    N, H, W, C = 2, 8, 8, 32
    key = jax.random.PRNGKey(0)
    ks = jax.random.split(key, 12)

    # x as it would arrive in PyTorch: NCHW -> transpose to NHWC for the kernel
    x_nchw = jax.random.normal(ks[0], (N, C, H, W), jnp.float32)
    x_nhwc = jnp.transpose(x_nchw, (0, 2, 3, 1))

    # deterministic parameter init (kaiming-ish std for 3x3 convs, no bias)
    std = (2.0 / (9 * C)) ** 0.5
    w1 = jax.random.normal(ks[1], (3, 3, C, C), jnp.float32) * std   # HWIO
    w2 = jax.random.normal(ks[2], (3, 3, C, C), jnp.float32) * std   # HWIO

    # Quantize activations & conv weights to bf16-representable values so the bf16-MXU
    # kernel and the f32 reference see identical parameters (remaining difference is
    # the bf16 cast of the intermediate activation / shortcut stream).
    q = lambda a: a.astype(jnp.bfloat16).astype(jnp.float32)
    x_nhwc, w1, w2 = q(x_nhwc), q(w1), q(w2)

    bn1 = (jax.random.uniform(ks[3], (C,), jnp.float32, 0.5, 1.5),   # gamma
           0.1 * jax.random.normal(ks[4], (C,), jnp.float32),        # beta
           0.1 * jax.random.normal(ks[5], (C,), jnp.float32),        # running_mean
           jax.random.uniform(ks[6], (C,), jnp.float32, 0.5, 1.5))   # running_var
    bn2 = (jax.random.uniform(ks[7], (C,), jnp.float32, 0.5, 1.5),
           0.1 * jax.random.normal(ks[8], (C,), jnp.float32),
           0.1 * jax.random.normal(ks[9], (C,), jnp.float32),
           jax.random.uniform(ks[10], (C,), jnp.float32, 0.5, 1.5))

    out = jax.block_until_ready(residual_block(x_nhwc, w1, w2, bn1, bn2))
    ref = residual_block_reference(x_nhwc, w1, w2, bn1, bn2)
    np.testing.assert_allclose(np.asarray(out), np.asarray(ref), rtol=2e-2, atol=2e-2)
    print("KERNEL_OK")
</pallas_src>

<mosaic_0001>
module attributes {stable_mosaic.version = 11 : i64} {
  func.func @residual_block_kernel(%arg0: i32, %arg1: memref<2x8x8x32xbf16, #tpu.memory_space<vmem>>, %arg2: memref<9x32x32xbf16, #tpu.memory_space<vmem>>, %arg3: memref<9x32x32xbf16, #tpu.memory_space<vmem>>, %arg4: memref<1x32xf32, #tpu.memory_space<vmem>>, %arg5: memref<1x32xf32, #tpu.memory_space<vmem>>, %arg6: memref<1x32xf32, #tpu.memory_space<vmem>>, %arg7: memref<1x32xf32, #tpu.memory_space<vmem>>, %arg8: memref<2x8x8x32xf32, #tpu.memory_space<vmem>>, %arg9: memref<2x10x10x32xbf16, #tpu.memory_space<vmem>>) attributes {dimension_semantics = [#tpu.dimension_semantics<parallel>], iteration_bounds = array<i64: 1>, scalar_prefetch = 0 : i64, scratch_operands = 1 : i64, tpu.core_type = #tpu.core_type<tc>, window_params = [{transform_indices = @transform_0, window_bounds = array<i64: 2, 8, 8, 32>}, {pipeline_mode = #tpu.pipeline_mode<synchronous>, transform_indices = @transform_1, window_bounds = array<i64: 9, 32, 32>}, {pipeline_mode = #tpu.pipeline_mode<synchronous>, transform_indices = @transform_2, window_bounds = array<i64: 9, 32, 32>}, {pipeline_mode = #tpu.pipeline_mode<synchronous>, transform_indices = @transform_3, window_bounds = array<i64: 1, 32>}, {pipeline_mode = #tpu.pipeline_mode<synchronous>, transform_indices = @transform_4, window_bounds = array<i64: 1, 32>}, {pipeline_mode = #tpu.pipeline_mode<synchronous>, transform_indices = @transform_5, window_bounds = array<i64: 1, 32>}, {pipeline_mode = #tpu.pipeline_mode<synchronous>, transform_indices = @transform_6, window_bounds = array<i64: 1, 32>}, {transform_indices = @transform_7, window_bounds = array<i64: 2, 8, 8, 32>}]} {
    %cst = arith.constant 0.000000e+00 : bf16
    %0 = vector.broadcast %cst : bf16 to vector<2x1x10x32xbf16>
    %c0 = arith.constant 0 : index
    %c0_0 = arith.constant 0 : index
    %c0_1 = arith.constant 0 : index
    %c0_2 = arith.constant 0 : index
    %1 = vector.load %arg9[%c0, %c0_0, %c0_1, %c0_2] : memref<2x10x10x32xbf16, #tpu.memory_space<vmem>>, vector<2x1x10x32xbf16>
    tpu.vector_store %arg9[%c0, %c0_0, %c0_1, %c0_2], %0 {strides = array<i32>} : memref<2x10x10x32xbf16, #tpu.memory_space<vmem>>, vector<2x1x10x32xbf16>,
    %cst_3 = arith.constant 0.000000e+00 : bf16
    %2 = vector.broadcast %cst_3 : bf16 to vector<2x1x10x32xbf16>
    %c0_4 = arith.constant 0 : index
    %c9 = arith.constant 9 : index
    %c0_5 = arith.constant 0 : index
    %c0_6 = arith.constant 0 : index
    %3 = vector.load %arg9[%c0_4, %c9, %c0_5, %c0_6] : memref<2x10x10x32xbf16, #tpu.memory_space<vmem>>, vector<2x1x10x32xbf16>
    tpu.vector_store %arg9[%c0_4, %c9, %c0_5, %c0_6], %2 {strides = array<i32>} : memref<2x10x10x32xbf16, #tpu.memory_space<vmem>>, vector<2x1x10x32xbf16>,
    %cst_7 = arith.constant 0.000000e+00 : bf16
    %4 = vector.broadcast %cst_7 : bf16 to vector<2x8x1x32xbf16>
    %c0_8 = arith.constant 0 : index
    %c1 = arith.constant 1 : index
    %c0_9 = arith.constant 0 : index
    %c0_10 = arith.constant 0 : index
    %5 = vector.load %arg9[%c0_8, %c1, %c0_9, %c0_10] : memref<2x10x10x32xbf16, #tpu.memory_space<vmem>>, vector<2x8x1x32xbf16>
    tpu.vector_store %arg9[%c0_8, %c1, %c0_9, %c0_10], %4 {strides = array<i32>} : memref<2x10x10x32xbf16, #tpu.memory_space<vmem>>, vector<2x8x1x32xbf16>,
    %cst_11 = arith.constant 0.000000e+00 : bf16
    %6 = vector.broadcast %cst_11 : bf16 to vector<2x8x1x32xbf16>
    %c0_12 = arith.constant 0 : index
    %c1_13 = arith.constant 1 : index
    %c9_14 = arith.constant 9 : index
    %c0_15 = arith.constant 0 : index
    %7 = vector.load %arg9[%c0_12, %c1_13, %c9_14, %c0_15] : memref<2x10x10x32xbf16, #tpu.memory_space<vmem>>, vector<2x8x1x32xbf16>
    tpu.vector_store %arg9[%c0_12, %c1_13, %c9_14, %c0_15], %6 {strides = array<i32>} : memref<2x10x10x32xbf16, #tpu.memory_space<vmem>>, vector<2x8x1x32xbf16>,
    %c0_16 = arith.constant 0 : index
    %c0_17 = arith.constant 0 : index
    %c0_18 = arith.constant 0 : index
    %c0_19 = arith.constant 0 : index
    %8 = vector.load %arg1[%c0_16, %c0_17, %c0_18, %c0_19] : memref<2x8x8x32xbf16, #tpu.memory_space<vmem>>, vector<2x8x8x32xbf16>
    %c0_20 = arith.constant 0 : index
    %c1_21 = arith.constant 1 : index
    %c1_22 = arith.constant 1 : index
    %c0_23 = arith.constant 0 : index
    %9 = vector.load %arg9[%c0_20, %c1_21, %c1_22, %c0_23] : memref<2x10x10x32xbf16, #tpu.memory_space<vmem>>, vector<2x8x8x32xbf16>
    tpu.vector_store %arg9[%c0_20, %c1_21, %c1_22, %c0_23], %8 {strides = array<i32>} : memref<2x10x10x32xbf16, #tpu.memory_space<vmem>>, vector<2x8x8x32xbf16>,
    %c0_24 = arith.constant 0 : index
    %c0_25 = arith.constant 0 : index
    %c0_26 = arith.constant 0 : index
    %c0_27 = arith.constant 0 : index
    %10 = vector.load %arg9[%c0_24, %c0_25, %c0_26, %c0_27] : memref<2x10x10x32xbf16, #tpu.memory_space<vmem>>, vector<2x8x8x32xbf16>
    %11 = vector.shape_cast %10 : vector<2x8x8x32xbf16> to vector<128x32xbf16>
    %c0_28 = arith.constant 0 : index
    %c0_29 = arith.constant 0 : index
    %c0_30 = arith.constant 0 : index
    %12 = vector.load %arg2[%c0_28, %c0_29, %c0_30] : memref<9x32x32xbf16, #tpu.memory_space<vmem>>, vector<1x32x32xbf16>
    %13 = vector.shape_cast %12 : vector<1x32x32xbf16> to vector<32x32xbf16>
    %cst_31 = arith.constant dense<0.000000e+00> : vector<128x32xf32>
    %14 = tpu.matmul %11, %13, %cst_31 {dimension_numbers = #tpu.dot_dimension_numbers<[1], [0], [0], [1], [0, 0, 1, 1], [], []>} : vector<128x32xbf16>, vector<32x32xbf16>, vector<128x32xf32> -> vector<128x32xf32>
    %c0_32 = arith.constant 0 : index
    %c0_33 = arith.constant 0 : index
    %c1_34 = arith.constant 1 : index
    %c0_35 = arith.constant 0 : index
    %15 = vector.load %arg9[%c0_32, %c0_33, %c1_34, %c0_35] : memref<2x10x10x32xbf16, #tpu.memory_space<vmem>>, vector<2x8x8x32xbf16>
    %16 = vector.shape_cast %15 : vector<2x8x8x32xbf16> to vector<128x32xbf16>
    %c1_36 = arith.constant 1 : index
    %c0_37 = arith.constant 0 : index
    %c0_38 = arith.constant 0 : index
    %17 = vector.load %arg2[%c1_36, %c0_37, %c0_38] : memref<9x32x32xbf16, #tpu.memory_space<vmem>>, vector<1x32x32xbf16>
    %18 = vector.shape_cast %17 : vector<1x32x32xbf16> to vector<32x32xbf16>
    %cst_39 = arith.constant dense<0.000000e+00> : vector<128x32xf32>
    %19 = tpu.matmul %16, %18, %cst_39 {dimension_numbers = #tpu.dot_dimension_numbers<[1], [0], [0], [1], [0, 0, 1, 1], [], []>} : vector<128x32xbf16>, vector<32x32xbf16>, vector<128x32xf32> -> vector<128x32xf32>
    %20 = arith.addf %14, %19 : vector<128x32xf32>
    %c0_40 = arith.constant 0 : index
    %c0_41 = arith.constant 0 : index
    %c2 = arith.constant 2 : index
    %c0_42 = arith.constant 0 : index
    %21 = vector.load %arg9[%c0_40, %c0_41, %c2, %c0_42] : memref<2x10x10x32xbf16, #tpu.memory_space<vmem>>, vector<2x8x8x32xbf16>
    %22 = vector.shape_cast %21 : vector<2x8x8x32xbf16> to vector<128x32xbf16>
    %c2_43 = arith.constant 2 : index
    %c0_44 = arith.constant 0 : index
    %c0_45 = arith.constant 0 : index
    %23 = vector.load %arg2[%c2_43, %c0_44, %c0_45] : memref<9x32x32xbf16, #tpu.memory_space<vmem>>, vector<1x32x32xbf16>
    %24 = vector.shape_cast %23 : vector<1x32x32xbf16> to vector<32x32xbf16>
    %cst_46 = arith.constant dense<0.000000e+00> : vector<128x32xf32>
    %25 = tpu.matmul %22, %24, %cst_46 {dimension_numbers = #tpu.dot_dimension_numbers<[1], [0], [0], [1], [0, 0, 1, 1], [], []>} : vector<128x32xbf16>, vector<32x32xbf16>, vector<128x32xf32> -> vector<128x32xf32>
    %26 = arith.addf %20, %25 : vector<128x32xf32>
    %c0_47 = arith.constant 0 : index
    %c1_48 = arith.constant 1 : index
    %c0_49 = arith.constant 0 : index
    %c0_50 = arith.constant 0 : index
    %27 = vector.load %arg9[%c0_47, %c1_48, %c0_49, %c0_50] : memref<2x10x10x32xbf16, #tpu.memory_space<vmem>>, vector<2x8x8x32xbf16>
    %28 = vector.shape_cast %27 : vector<2x8x8x32xbf16> to vector<128x32xbf16>
    %c3 = arith.constant 3 : index
    %c0_51 = arith.constant 0 : index
    %c0_52 = arith.constant 0 : index
    %29 = vector.load %arg2[%c3, %c0_51, %c0_52] : memref<9x32x32xbf16, #tpu.memory_space<vmem>>, vector<1x32x32xbf16>
    %30 = vector.shape_cast %29 : vector<1x32x32xbf16> to vector<32x32xbf16>
    %cst_53 = arith.constant dense<0.000000e+00> : vector<128x32xf32>
    %31 = tpu.matmul %28, %30, %cst_53 {dimension_numbers = #tpu.dot_dimension_numbers<[1], [0], [0], [1], [0, 0, 1, 1], [], []>} : vector<128x32xbf16>, vector<32x32xbf16>, vector<128x32xf32> -> vector<128x32xf32>
    %32 = arith.addf %26, %31 : vector<128x32xf32>
    %c0_54 = arith.constant 0 : index
    %c1_55 = arith.constant 1 : index
    %c1_56 = arith.constant 1 : index
    %c0_57 = arith.constant 0 : index
    %33 = vector.load %arg9[%c0_54, %c1_55, %c1_56, %c0_57] : memref<2x10x10x32xbf16, #tpu.memory_space<vmem>>, vector<2x8x8x32xbf16>
    %34 = vector.shape_cast %33 : vector<2x8x8x32xbf16> to vector<128x32xbf16>
    %c4 = arith.constant 4 : index
    %c0_58 = arith.constant 0 : index
    %c0_59 = arith.constant 0 : index
    %35 = vector.load %arg2[%c4, %c0_58, %c0_59] : memref<9x32x32xbf16, #tpu.memory_space<vmem>>, vector<1x32x32xbf16>
    %36 = vector.shape_cast %35 : vector<1x32x32xbf16> to vector<32x32xbf16>
    %cst_60 = arith.constant dense<0.000000e+00> : vector<128x32xf32>
    %37 = tpu.matmul %34, %36, %cst_60 {dimension_numbers = #tpu.dot_dimension_numbers<[1], [0], [0], [1], [0, 0, 1, 1], [], []>} : vector<128x32xbf16>, vector<32x32xbf16>, vector<128x32xf32> -> vector<128x32xf32>
    %38 = arith.addf %32, %37 : vector<128x32xf32>
    %c0_61 = arith.constant 0 : index
    %c1_62 = arith.constant 1 : index
    %c2_63 = arith.constant 2 : index
    %c0_64 = arith.constant 0 : index
    %39 = vector.load %arg9[%c0_61, %c1_62, %c2_63, %c0_64] : memref<2x10x10x32xbf16, #tpu.memory_space<vmem>>, vector<2x8x8x32xbf16>
    %40 = vector.shape_cast %39 : vector<2x8x8x32xbf16> to vector<128x32xbf16>
    %c5 = arith.constant 5 : index
    %c0_65 = arith.constant 0 : index
    %c0_66 = arith.constant 0 : index
    %41 = vector.load %arg2[%c5, %c0_65, %c0_66] : memref<9x32x32xbf16, #tpu.memory_space<vmem>>, vector<1x32x32xbf16>
    %42 = vector.shape_cast %41 : vector<1x32x32xbf16> to vector<32x32xbf16>
    %cst_67 = arith.constant dense<0.000000e+00> : vector<128x32xf32>
    %43 = tpu.matmul %40, %42, %cst_67 {dimension_numbers = #tpu.dot_dimension_numbers<[1], [0], [0], [1], [0, 0, 1, 1], [], []>} : vector<128x32xbf16>, vector<32x32xbf16>, vector<128x32xf32> -> vector<128x32xf32>
    %44 = arith.addf %38, %43 : vector<128x32xf32>
    %c0_68 = arith.constant 0 : index
    %c2_69 = arith.constant 2 : index
    %c0_70 = arith.constant 0 : index
    %c0_71 = arith.constant 0 : index
    %45 = vector.load %arg9[%c0_68, %c2_69, %c0_70, %c0_71] : memref<2x10x10x32xbf16, #tpu.memory_space<vmem>>, vector<2x8x8x32xbf16>
    %46 = vector.shape_cast %45 : vector<2x8x8x32xbf16> to vector<128x32xbf16>
    %c6 = arith.constant 6 : index
    %c0_72 = arith.constant 0 : index
    %c0_73 = arith.constant 0 : index
    %47 = vector.load %arg2[%c6, %c0_72, %c0_73] : memref<9x32x32xbf16, #tpu.memory_space<vmem>>, vector<1x32x32xbf16>
    %48 = vector.shape_cast %47 : vector<1x32x32xbf16> to vector<32x32xbf16>
    %cst_74 = arith.constant dense<0.000000e+00> : vector<128x32xf32>
    %49 = tpu.matmul %46, %48, %cst_74 {dimension_numbers = #tpu.dot_dimension_numbers<[1], [0], [0], [1], [0, 0, 1, 1], [], []>} : vector<128x32xbf16>, vector<32x32xbf16>, vector<128x32xf32> -> vector<128x32xf32>
    %50 = arith.addf %44, %49 : vector<128x32xf32>
    %c0_75 = arith.constant 0 : index
    %c2_76 = arith.constant 2 : index
    %c1_77 = arith.constant 1 : index
    %c0_78 = arith.constant 0 : index
    %51 = vector.load %arg9[%c0_75, %c2_76, %c1_77, %c0_78] : memref<2x10x10x32xbf16, #tpu.memory_space<vmem>>, vector<2x8x8x32xbf16>
    %52 = vector.shape_cast %51 : vector<2x8x8x32xbf16> to vector<128x32xbf16>
    %c7 = arith.constant 7 : index
    %c0_79 = arith.constant 0 : index
    %c0_80 = arith.constant 0 : index
    %53 = vector.load %arg2[%c7, %c0_79, %c0_80] : memref<9x32x32xbf16, #tpu.memory_space<vmem>>, vector<1x32x32xbf16>
    %54 = vector.shape_cast %53 : vector<1x32x32xbf16> to vector<32x32xbf16>
    %cst_81 = arith.constant dense<0.000000e+00> : vector<128x32xf32>
    %55 = tpu.matmul %52, %54, %cst_81 {dimension_numbers = #tpu.dot_dimension_numbers<[1], [0], [0], [1], [0, 0, 1, 1], [], []>} : vector<128x32xbf16>, vector<32x32xbf16>, vector<128x32xf32> -> vector<128x32xf32>
    %56 = arith.addf %50, %55 : vector<128x32xf32>
    %c0_82 = arith.constant 0 : index
    %c2_83 = arith.constant 2 : index
    %c2_84 = arith.constant 2 : index
    %c0_85 = arith.constant 0 : index
    %57 = vector.load %arg9[%c0_82, %c2_83, %c2_84, %c0_85] : memref<2x10x10x32xbf16, #tpu.memory_space<vmem>>, vector<2x8x8x32xbf16>
    %58 = vector.shape_cast %57 : vector<2x8x8x32xbf16> to vector<128x32xbf16>
    %c8 = arith.constant 8 : index
    %c0_86 = arith.constant 0 : index
    %c0_87 = arith.constant 0 : index
    %59 = vector.load %arg2[%c8, %c0_86, %c0_87] : memref<9x32x32xbf16, #tpu.memory_space<vmem>>, vector<1x32x32xbf16>
    %60 = vector.shape_cast %59 : vector<1x32x32xbf16> to vector<32x32xbf16>
    %cst_88 = arith.constant dense<0.000000e+00> : vector<128x32xf32>
    %61 = tpu.matmul %58, %60, %cst_88 {dimension_numbers = #tpu.dot_dimension_numbers<[1], [0], [0], [1], [0, 0, 1, 1], [], []>} : vector<128x32xbf16>, vector<32x32xbf16>, vector<128x32xf32> -> vector<128x32xf32>
    %62 = arith.addf %56, %61 : vector<128x32xf32>
    %c0_89 = arith.constant 0 : index
    %c0_90 = arith.constant 0 : index
    %63 = vector.load %arg4[%c0_89, %c0_90] : memref<1x32xf32, #tpu.memory_space<vmem>>, vector<1x32xf32>
    %64 = vector.broadcast %63 : vector<1x32xf32> to vector<128x32xf32>
    %65 = arith.mulf %62, %64 : vector<128x32xf32>
    %c0_91 = arith.constant 0 : index
    %c0_92 = arith.constant 0 : index
    %66 = vector.load %arg5[%c0_91, %c0_92] : memref<1x32xf32, #tpu.memory_space<vmem>>, vector<1x32xf32>
    %67 = vector.broadcast %66 : vector<1x32xf32> to vector<128x32xf32>
    %68 = arith.addf %65, %67 : vector<128x32xf32>
    %cst_93 = arith.constant 0.000000e+00 : f32
    %69 = vector.broadcast %cst_93 : f32 to vector<128x32xf32>
    %70 = arith.maximumf %68, %69 : vector<128x32xf32>
    %71 = vector.shape_cast %70 : vector<128x32xf32> to vector<2x8x8x32xf32>
    %72 = arith.truncf %71 : vector<2x8x8x32xf32> to vector<2x8x8x32xbf16>
    %c0_94 = arith.constant 0 : index
    %c1_95 = arith.constant 1 : index
    %c1_96 = arith.constant 1 : index
    %c0_97 = arith.constant 0 : index
    %73 = vector.load %arg9[%c0_94, %c1_95, %c1_96, %c0_97] : memref<2x10x10x32xbf16, #tpu.memory_space<vmem>>, vector<2x8x8x32xbf16>
    tpu.vector_store %arg9[%c0_94, %c1_95, %c1_96, %c0_97], %72 {strides = array<i32>} : memref<2x10x10x32xbf16, #tpu.memory_space<vmem>>, vector<2x8x8x32xbf16>,
    %c0_98 = arith.constant 0 : index
    %c0_99 = arith.constant 0 : index
    %c0_100 = arith.constant 0 : index
    %c0_101 = arith.constant 0 : index
    %74 = vector.load %arg9[%c0_98, %c0_99, %c0_100, %c0_101] : memref<2x10x10x32xbf16, #tpu.memory_space<vmem>>, vector<2x8x8x32xbf16>
    %75 = vector.shape_cast %74 : vector<2x8x8x32xbf16> to vector<128x32xbf16>
    %c0_102 = arith.constant 0 : index
    %c0_103 = arith.constant 0 : index
    %c0_104 = arith.constant 0 : index
    %76 = vector.load %arg3[%c0_102, %c0_103, %c0_104] : memref<9x32x32xbf16, #tpu.memory_space<vmem>>, vector<1x32x32xbf16>
    %77 = vector.shape_cast %76 : vector<1x32x32xbf16> to vector<32x32xbf16>
    %cst_105 = arith.constant dense<0.000000e+00> : vector<128x32xf32>
    %78 = tpu.matmul %75, %77, %cst_105 {dimension_numbers = #tpu.dot_dimension_numbers<[1], [0], [0], [1], [0, 0, 1, 1], [], []>} : vector<128x32xbf16>, vector<32x32xbf16>, vector<128x32xf32> -> vector<128x32xf32>
    %c0_106 = arith.constant 0 : index
    %c0_107 = arith.constant 0 : index
    %c1_108 = arith.constant 1 : index
    %c0_109 = arith.constant 0 : index
    %79 = vector.load %arg9[%c0_106, %c0_107, %c1_108, %c0_109] : memref<2x10x10x32xbf16, #tpu.memory_space<vmem>>, vector<2x8x8x32xbf16>
    %80 = vector.shape_cast %79 : vector<2x8x8x32xbf16> to vector<128x32xbf16>
    %c1_110 = arith.constant 1 : index
    %c0_111 = arith.constant 0 : index
    %c0_112 = arith.constant 0 : index
    %81 = vector.load %arg3[%c1_110, %c0_111, %c0_112] : memref<9x32x32xbf16, #tpu.memory_space<vmem>>, vector<1x32x32xbf16>
    %82 = vector.shape_cast %81 : vector<1x32x32xbf16> to vector<32x32xbf16>
    %cst_113 = arith.constant dense<0.000000e+00> : vector<128x32xf32>
    %83 = tpu.matmul %80, %82, %cst_113 {dimension_numbers = #tpu.dot_dimension_numbers<[1], [0], [0], [1], [0, 0, 1, 1], [], []>} : vector<128x32xbf16>, vector<32x32xbf16>, vector<128x32xf32> -> vector<128x32xf32>
    %84 = arith.addf %78, %83 : vector<128x32xf32>
    %c0_114 = arith.constant 0 : index
    %c0_115 = arith.constant 0 : index
    %c2_116 = arith.constant 2 : index
    %c0_117 = arith.constant 0 : index
    %85 = vector.load %arg9[%c0_114, %c0_115, %c2_116, %c0_117] : memref<2x10x10x32xbf16, #tpu.memory_space<vmem>>, vector<2x8x8x32xbf16>
    %86 = vector.shape_cast %85 : vector<2x8x8x32xbf16> to vector<128x32xbf16>
    %c2_118 = arith.constant 2 : index
    %c0_119 = arith.constant 0 : index
    %c0_120 = arith.constant 0 : index
    %87 = vector.load %arg3[%c2_118, %c0_119, %c0_120] : memref<9x32x32xbf16, #tpu.memory_space<vmem>>, vector<1x32x32xbf16>
    %88 = vector.shape_cast %87 : vector<1x32x32xbf16> to vector<32x32xbf16>
    %cst_121 = arith.constant dense<0.000000e+00> : vector<128x32xf32>
    %89 = tpu.matmul %86, %88, %cst_121 {dimension_numbers = #tpu.dot_dimension_numbers<[1], [0], [0], [1], [0, 0, 1, 1], [], []>} : vector<128x32xbf16>, vector<32x32xbf16>, vector<128x32xf32> -> vector<128x32xf32>
    %90 = arith.addf %84, %89 : vector<128x32xf32>
    %c0_122 = arith.constant 0 : index
    %c1_123 = arith.constant 1 : index
    %c0_124 = arith.constant 0 : index
    %c0_125 = arith.constant 0 : index
    %91 = vector.load %arg9[%c0_122, %c1_123, %c0_124, %c0_125] : memref<2x10x10x32xbf16, #tpu.memory_space<vmem>>, vector<2x8x8x32xbf16>
    %92 = vector.shape_cast %91 : vector<2x8x8x32xbf16> to vector<128x32xbf16>
    %c3_126 = arith.constant 3 : index
    %c0_127 = arith.constant 0 : index
    %c0_128 = arith.constant 0 : index
    %93 = vector.load %arg3[%c3_126, %c0_127, %c0_128] : memref<9x32x32xbf16, #tpu.memory_space<vmem>>, vector<1x32x32xbf16>
    %94 = vector.shape_cast %93 : vector<1x32x32xbf16> to vector<32x32xbf16>
    %cst_129 = arith.constant dense<0.000000e+00> : vector<128x32xf32>
    %95 = tpu.matmul %92, %94, %cst_129 {dimension_numbers = #tpu.dot_dimension_numbers<[1], [0], [0], [1], [0, 0, 1, 1], [], []>} : vector<128x32xbf16>, vector<32x32xbf16>, vector<128x32xf32> -> vector<128x32xf32>
    %96 = arith.addf %90, %95 : vector<128x32xf32>
    %c0_130 = arith.constant 0 : index
    %c1_131 = arith.constant 1 : index
    %c1_132 = arith.constant 1 : index
    %c0_133 = arith.constant 0 : index
    %97 = vector.load %arg9[%c0_130, %c1_131, %c1_132, %c0_133] : memref<2x10x10x32xbf16, #tpu.memory_space<vmem>>, vector<2x8x8x32xbf16>
    %98 = vector.shape_cast %97 : vector<2x8x8x32xbf16> to vector<128x32xbf16>
    %c4_134 = arith.constant 4 : index
    %c0_135 = arith.constant 0 : index
    %c0_136 = arith.constant 0 : index
    %99 = vector.load %arg3[%c4_134, %c0_135, %c0_136] : memref<9x32x32xbf16, #tpu.memory_space<vmem>>, vector<1x32x32xbf16>
    %100 = vector.shape_cast %99 : vector<1x32x32xbf16> to vector<32x32xbf16>
    %cst_137 = arith.constant dense<0.000000e+00> : vector<128x32xf32>
    %101 = tpu.matmul %98, %100, %cst_137 {dimension_numbers = #tpu.dot_dimension_numbers<[1], [0], [0], [1], [0, 0, 1, 1], [], []>} : vector<128x32xbf16>, vector<32x32xbf16>, vector<128x32xf32> -> vector<128x32xf32>
    %102 = arith.addf %96, %101 : vector<128x32xf32>
    %c0_138 = arith.constant 0 : index
    %c1_139 = arith.constant 1 : index
    %c2_140 = arith.constant 2 : index
    %c0_141 = arith.constant 0 : index
    %103 = vector.load %arg9[%c0_138, %c1_139, %c2_140, %c0_141] : memref<2x10x10x32xbf16, #tpu.memory_space<vmem>>, vector<2x8x8x32xbf16>
    %104 = vector.shape_cast %103 : vector<2x8x8x32xbf16> to vector<128x32xbf16>
    %c5_142 = arith.constant 5 : index
    %c0_143 = arith.constant 0 : index
    %c0_144 = arith.constant 0 : index
    %105 = vector.load %arg3[%c5_142, %c0_143, %c0_144] : memref<9x32x32xbf16, #tpu.memory_space<vmem>>, vector<1x32x32xbf16>
    %106 = vector.shape_cast %105 : vector<1x32x32xbf16> to vector<32x32xbf16>
    %cst_145 = arith.constant dense<0.000000e+00> : vector<128x32xf32>
    %107 = tpu.matmul %104, %106, %cst_145 {dimension_numbers = #tpu.dot_dimension_numbers<[1], [0], [0], [1], [0, 0, 1, 1], [], []>} : vector<128x32xbf16>, vector<32x32xbf16>, vector<128x32xf32> -> vector<128x32xf32>
    %108 = arith.addf %102, %107 : vector<128x32xf32>
    %c0_146 = arith.constant 0 : index
    %c2_147 = arith.constant 2 : index
    %c0_148 = arith.constant 0 : index
    %c0_149 = arith.constant 0 : index
    %109 = vector.load %arg9[%c0_146, %c2_147, %c0_148, %c0_149] : memref<2x10x10x32xbf16, #tpu.memory_space<vmem>>, vector<2x8x8x32xbf16>
    %110 = vector.shape_cast %109 : vector<2x8x8x32xbf16> to vector<128x32xbf16>
    %c6_150 = arith.constant 6 : index
    %c0_151 = arith.constant 0 : index
    %c0_152 = arith.constant 0 : index
    %111 = vector.load %arg3[%c6_150, %c0_151, %c0_152] : memref<9x32x32xbf16, #tpu.memory_space<vmem>>, vector<1x32x32xbf16>
    %112 = vector.shape_cast %111 : vector<1x32x32xbf16> to vector<32x32xbf16>
    %cst_153 = arith.constant dense<0.000000e+00> : vector<128x32xf32>
    %113 = tpu.matmul %110, %112, %cst_153 {dimension_numbers = #tpu.dot_dimension_numbers<[1], [0], [0], [1], [0, 0, 1, 1], [], []>} : vector<128x32xbf16>, vector<32x32xbf16>, vector<128x32xf32> -> vector<128x32xf32>
    %114 = arith.addf %108, %113 : vector<128x32xf32>
    %c0_154 = arith.constant 0 : index
    %c2_155 = arith.constant 2 : index
    %c1_156 = arith.constant 1 : index
    %c0_157 = arith.constant 0 : index
    %115 = vector.load %arg9[%c0_154, %c2_155, %c1_156, %c0_157] : memref<2x10x10x32xbf16, #tpu.memory_space<vmem>>, vector<2x8x8x32xbf16>
    %116 = vector.shape_cast %115 : vector<2x8x8x32xbf16> to vector<128x32xbf16>
    %c7_158 = arith.constant 7 : index
    %c0_159 = arith.constant 0 : index
    %c0_160 = arith.constant 0 : index
    %117 = vector.load %arg3[%c7_158, %c0_159, %c0_160] : memref<9x32x32xbf16, #tpu.memory_space<vmem>>, vector<1x32x32xbf16>
    %118 = vector.shape_cast %117 : vector<1x32x32xbf16> to vector<32x32xbf16>
    %cst_161 = arith.constant dense<0.000000e+00> : vector<128x32xf32>
    %119 = tpu.matmul %116, %118, %cst_161 {dimension_numbers = #tpu.dot_dimension_numbers<[1], [0], [0], [1], [0, 0, 1, 1], [], []>} : vector<128x32xbf16>, vector<32x32xbf16>, vector<128x32xf32> -> vector<128x32xf32>
    %120 = arith.addf %114, %119 : vector<128x32xf32>
    %c0_162 = arith.constant 0 : index
    %c2_163 = arith.constant 2 : index
    %c2_164 = arith.constant 2 : index
    %c0_165 = arith.constant 0 : index
    %121 = vector.load %arg9[%c0_162, %c2_163, %c2_164, %c0_165] : memref<2x10x10x32xbf16, #tpu.memory_space<vmem>>, vector<2x8x8x32xbf16>
    %122 = vector.shape_cast %121 : vector<2x8x8x32xbf16> to vector<128x32xbf16>
    %c8_166 = arith.constant 8 : index
    %c0_167 = arith.constant 0 : index
    %c0_168 = arith.constant 0 : index
    %123 = vector.load %arg3[%c8_166, %c0_167, %c0_168] : memref<9x32x32xbf16, #tpu.memory_space<vmem>>, vector<1x32x32xbf16>
    %124 = vector.shape_cast %123 : vector<1x32x32xbf16> to vector<32x32xbf16>
    %cst_169 = arith.constant dense<0.000000e+00> : vector<128x32xf32>
    %125 = tpu.matmul %122, %124, %cst_169 {dimension_numbers = #tpu.dot_dimension_numbers<[1], [0], [0], [1], [0, 0, 1, 1], [], []>} : vector<128x32xbf16>, vector<32x32xbf16>, vector<128x32xf32> -> vector<128x32xf32>
    %126 = arith.addf %120, %125 : vector<128x32xf32>
    %c0_170 = arith.constant 0 : index
    %c0_171 = arith.constant 0 : index
    %127 = vector.load %arg6[%c0_170, %c0_171] : memref<1x32xf32, #tpu.memory_space<vmem>>, vector<1x32xf32>
    %128 = vector.broadcast %127 : vector<1x32xf32> to vector<128x32xf32>
    %129 = arith.mulf %126, %128 : vector<128x32xf32>
    %c0_172 = arith.constant 0 : index
    %c0_173 = arith.constant 0 : index
    %130 = vector.load %arg7[%c0_172, %c0_173] : memref<1x32xf32, #tpu.memory_space<vmem>>, vector<1x32xf32>
    %131 = vector.broadcast %130 : vector<1x32xf32> to vector<128x32xf32>
    %132 = arith.addf %129, %131 : vector<128x32xf32>
    %c0_174 = arith.constant 0 : index
    %c0_175 = arith.constant 0 : index
    %c0_176 = arith.constant 0 : index
    %c0_177 = arith.constant 0 : index
    %133 = vector.load %arg1[%c0_174, %c0_175, %c0_176, %c0_177] : memref<2x8x8x32xbf16, #tpu.memory_space<vmem>>, vector<2x8x8x32xbf16>
    %134 = arith.extf %133 : vector<2x8x8x32xbf16> to vector<2x8x8x32xf32>
    %135 = vector.shape_cast %134 : vector<2x8x8x32xf32> to vector<128x32xf32>
    %136 = arith.addf %132, %135 : vector<128x32xf32>
    %cst_178 = arith.constant 0.000000e+00 : f32
    %137 = vector.broadcast %cst_178 : f32 to vector<128x32xf32>
    %138 = arith.maximumf %136, %137 : vector<128x32xf32>
    %139 = vector.shape_cast %138 : vector<128x32xf32> to vector<2x8x8x32xf32>
    %c0_179 = arith.constant 0 : index
    %c0_180 = arith.constant 0 : index
    %c0_181 = arith.constant 0 : index
    %c0_182 = arith.constant 0 : index
    %140 = vector.load %arg8[%c0_179, %c0_180, %c0_181, %c0_182] : memref<2x8x8x32xf32, #tpu.memory_space<vmem>>, vector<2x8x8x32xf32>
    tpu.vector_store %arg8[%c0_179, %c0_180, %c0_181, %c0_182], %139 {strides = array<i32>} : memref<2x8x8x32xf32, #tpu.memory_space<vmem>>, vector<2x8x8x32xf32>,
    return
  }
  func.func @transform_0(%arg0: i32) -> (i32, i32, i32, i32) {
    %c0_i32 = arith.constant 0 : i32
    %c0_i32_0 = arith.constant 0 : i32
    %c0_i32_1 = arith.constant 0 : i32
    %c0_i32_2 = arith.constant 0 : i32
    return %arg0, %c0_i32, %c0_i32_0, %c0_i32_1 : i32, i32, i32, i32
  }
  func.func @transform_1(%arg0: i32) -> (i32, i32, i32) {
    %c0_i32 = arith.constant 0 : i32
    %c0_i32_0 = arith.constant 0 : i32
    %c0_i32_1 = arith.constant 0 : i32
    %c0_i32_2 = arith.constant 0 : i32
    return %c0_i32, %c0_i32_0, %c0_i32_1 : i32, i32, i32
  }
  func.func @transform_2(%arg0: i32) -> (i32, i32, i32) {
    %c0_i32 = arith.constant 0 : i32
    %c0_i32_0 = arith.constant 0 : i32
    %c0_i32_1 = arith.constant 0 : i32
    %c0_i32_2 = arith.constant 0 : i32
    return %c0_i32, %c0_i32_0, %c0_i32_1 : i32, i32, i32
  }
  func.func @transform_3(%arg0: i32) -> (i32, i32) {
    %c0_i32 = arith.constant 0 : i32
    %c0_i32_0 = arith.constant 0 : i32
    %c0_i32_1 = arith.constant 0 : i32
    return %c0_i32, %c0_i32_0 : i32, i32
  }
  func.func @transform_4(%arg0: i32) -> (i32, i32) {
    %c0_i32 = arith.constant 0 : i32
    %c0_i32_0 = arith.constant 0 : i32
    %c0_i32_1 = arith.constant 0 : i32
    return %c0_i32, %c0_i32_0 : i32, i32
  }
  func.func @transform_5(%arg0: i32) -> (i32, i32) {
    %c0_i32 = arith.constant 0 : i32
    %c0_i32_0 = arith.constant 0 : i32
    %c0_i32_1 = arith.constant 0 : i32
    return %c0_i32, %c0_i32_0 : i32, i32
  }
  func.func @transform_6(%arg0: i32) -> (i32, i32) {
    %c0_i32 = arith.constant 0 : i32
    %c0_i32_0 = arith.constant 0 : i32
    %c0_i32_1 = arith.constant 0 : i32
    return %c0_i32, %c0_i32_0 : i32, i32
  }
  func.func @transform_7(%arg0: i32) -> (i32, i32, i32, i32) {
    %c0_i32 = arith.constant 0 : i32
    %c0_i32_0 = arith.constant 0 : i32
    %c0_i32_1 = arith.constant 0 : i32
    %c0_i32_2 = arith.constant 0 : i32
    return %arg0, %c0_i32, %c0_i32_0, %c0_i32_1 : i32, i32, i32, i32
  }
}

</mosaic_0001>

<llo_original>
// kernel: tpu_custom_call.1
$region0: #{tpu_custom_call.1}
  #allocation0 [shape = 'u32[]', space=smem, size = 0x4, offset = 0x4, fixed_abs, tag = 'smem constant byte address 0x4 - core index']
  #allocation1 [shape = 'u32[72,128]{1,0:T(1,128)}', space=vmem, size = 0x9000, scoped, tag = 'internal scratch']
  #allocation2 [shape = 'bf16[2,10,10,32]{3,2,1,0:T(8,128)(2,1)}', space=vmem, size = 0x14000, scoped, tag = 'scratch operand']
  %s0 = inlined_call_operand.hbm [shape: bf16[2,8,8,32], index: 0, kind: input, shape index: {}]
  %s1 = inlined_call_operand.hbm [shape: bf16[9,32,32], index: 1, kind: input, shape index: {}]
  %s2 = inlined_call_operand.hbm [shape: bf16[9,32,32], index: 2, kind: input, shape index: {}]
  %s3 = inlined_call_operand.vmem [shape: f32[1,32], index: 3, kind: input, shape index: {}]
  %s4 = inlined_call_operand.vmem [shape: f32[1,32], index: 4, kind: input, shape index: {}]
  %s5 = inlined_call_operand.vmem [shape: f32[1,32], index: 5, kind: input, shape index: {}]
  %s6 = inlined_call_operand.vmem [shape: f32[1,32], index: 6, kind: input, shape index: {}]
  %s7 = inlined_call_operand.hbm [shape: f32[2,8,8,32], index: 7, kind: output, shape index: {}]
  %s8 = sld [smem:[#allocation0]]
  $region50: #{tpu_custom_call.1} parent=0
    _
  %s10 = ssub.s32 1, %s8
  %s11 = scalar_select 0, %s10, %s8
  $region1: #{tpu_custom_call.1} parent=0
    #allocation3 [shape = 'u8[32768]{0}', space=vmem, size = 0x8000, scoped, tag = 'input window, operand 0, single buffered']
    #allocation4 [shape = 's32[1]{0}', space=sflag, size = 0x4, scoped, tag = 'scoped memory for tpu_custom_call.1']
    #allocation5 [shape = 's32[1]{0}', space=sflag, size = 0x4, scoped, tag = 'scoped memory for tpu_custom_call.1']
    #allocation6 [shape = 'u8[73728]{0}', space=vmem, size = 0x12000, scoped, tag = 'input window, operand 1, single buffered']
    #allocation7 [shape = 's32[1]{0}', space=sflag, size = 0x4, scoped, tag = 'scoped memory for tpu_custom_call.1']
    #allocation8 [shape = 'u8[73728]{0}', space=vmem, size = 0x12000, scoped, tag = 'input window, operand 2, single buffered']
    #allocation9 [shape = 'u8[65536]{0}', space=vmem, size = 0x10000, scoped, tag = 'output window, operand 0, single buffered']
    %12 = vsyncpa [#allocation4], 0
    %13 = vsyncpa [#allocation7], 0
    %14 = vsyncpa [#allocation5], 0
    // Predicated region
    $region2: #{tpu_custom_call.1} parent=1 // pred_check
      _
    $region3: #{tpu_custom_call.1} parent=1 // pred_check_branch
      %16 = sbr.rel (0) target = $region5
    $region4: #{tpu_custom_call.1} parent=1 // pred_region
      %18 = vsyncadd [#allocation4], 0
      %s19 = sshll.u32 %s0, 4
      %s20 = int_to_ptr.hbm [resolvable:$true] %s19
      %s21 = sshll.u32 [#allocation3], 4
      %s22 = int_to_ptr.vmem [resolvable:$true] %s21
      %27 = dma.hbm_to_vmem [thread:$0]  %s20, 1024, %s22, [#allocation4], 64, 64, 4
    $region5: #{tpu_custom_call.1} parent=1 // pred_fallthru
      _
    // Predicated region
    $region6: #{tpu_custom_call.1} parent=1 // pred_check
      _
    $region7: #{tpu_custom_call.1} parent=1 // pred_check_branch
      %29 = sbr.rel (0) target = $region9
    $region8: #{tpu_custom_call.1} parent=1 // pred_region
      %31 = vsyncadd [#allocation7], 0
      %s32 = sshll.u32 %s1, 4
      %s33 = int_to_ptr.hbm [resolvable:$true] %s32
      %s34 = sshll.u32 [#allocation6], 4
      %s35 = int_to_ptr.vmem [resolvable:$true] %s34
      %40 = dma.hbm_to_vmem [thread:$0]  %s33, 2304, %s35, [#allocation7], 64, 64, 4
    $region9: #{tpu_custom_call.1} parent=1 // pred_fallthru
      _
    // Predicated region
    $region10: #{tpu_custom_call.1} parent=1 // pred_check
      _
    $region11: #{tpu_custom_call.1} parent=1 // pred_check_branch
      %42 = sbr.rel (0) target = $region13
    $region12: #{tpu_custom_call.1} parent=1 // pred_region
      %44 = vsyncadd [#allocation7], 0
      %s45 = sshll.u32 %s2, 4
      %s46 = int_to_ptr.hbm [resolvable:$true] %s45
      %s47 = sshll.u32 [#allocation8], 4
      %s48 = int_to_ptr.vmem [resolvable:$true] %s47
      %53 = dma.hbm_to_vmem [thread:$0]  %s46, 2304, %s48, [#allocation7], 64, 64, 4
    $region13: #{tpu_custom_call.1} parent=1 // pred_fallthru
      _
    // Predicated region
    $region14: #{tpu_custom_call.1} parent=1 // pred_check
      _
    $region15: #{tpu_custom_call.1} parent=1 // pred_check_branch
      %55 = sbr.rel (0) target = $region17
    $region16: #{tpu_custom_call.1} parent=1 // pred_region
      _
    $region17: #{tpu_custom_call.1} parent=1 // pred_fallthru
      _
    // Predicated region
    $region18: #{tpu_custom_call.1} parent=1 // pred_check
      _
    $region19: #{tpu_custom_call.1} parent=1 // pred_check_branch
      %57 = sbr.rel (0) target = $region21
    $region20: #{tpu_custom_call.1} parent=1 // pred_region
      _
    $region21: #{tpu_custom_call.1} parent=1 // pred_fallthru
      _
    // Predicated region
    $region22: #{tpu_custom_call.1} parent=1 // pred_check
      _
    $region23: #{tpu_custom_call.1} parent=1 // pred_check_branch
      %59 = sbr.rel (0) target = $region25
    $region24: #{tpu_custom_call.1} parent=1 // pred_region
      _
    $region25: #{tpu_custom_call.1} parent=1 // pred_fallthru
      _
    // Predicated region
    $region26: #{tpu_custom_call.1} parent=1 // pred_check
      _
    $region27: #{tpu_custom_call.1} parent=1 // pred_check_branch
      %61 = sbr.rel (0) target = $region29
    $region28: #{tpu_custom_call.1} parent=1 // pred_region
      _
    $region29: #{tpu_custom_call.1} parent=1 // pred_fallthru
      _
    // Predicated region
    $region30: #{tpu_custom_call.1} parent=1 // pred_check
      _
    $region31: #{tpu_custom_call.1} parent=1 // pred_check_branch
      %63 = sbr.rel (0) target = $region33
    $region32: #{tpu_custom_call.1} parent=1 // pred_region
      %65 = dma.done [#allocation4], 1024
    $region33: #{tpu_custom_call.1} parent=1 // pred_fallthru
      _
    // Predicated region
    $region34: #{tpu_custom_call.1} parent=1 // pred_check
      _
    $region35: #{tpu_custom_call.1} parent=1 // pred_check_branch
      %67 = sbr.rel (0) target = $region37
    $region36: #{tpu_custom_call.1} parent=1 // pred_region
      %69 = dma.done [#allocation7], 2304
    $region37: #{tpu_custom_call.1} parent=1 // pred_fallthru
      _
    // Predicated region
    $region38: #{tpu_custom_call.1} parent=1 // pred_check
      _
    $region39: #{tpu_custom_call.1} parent=1 // pred_check_branch
      %71 = sbr.rel (0) target = $region41
    $region40: #{tpu_custom_call.1} parent=1 // pred_region
      %73 = dma.done [#allocation7], 2304
    $region41: #{tpu_custom_call.1} parent=1 // pred_fallthru
      _
    %vm75 = vcmask 257024
    %76 = vst.msk [vmem:[#allocation2] sm:$0xf] %vm75, 0
    %vm77 = vcmask 253952
    %78 = vst.msk [vmem:[#allocation2 + $0x4] sm:$0x1] %vm77, 0
    %79 = vst.msk [vmem:[#allocation2 + $0x50] sm:$0xf] %vm75, 0
    %80 = vst.msk [vmem:[#allocation2 + $0x54] sm:$0x1] %vm77, 0
    %s81 = scalar_lea.vmem [#allocation2], 72
    %82 = vst.msk [vmem:[%s81] sm:$0xf] %vm75, 0
    %83 = vst.msk [vmem:[%s81 + $0x4] sm:$0x1] %vm77, 0
    %84 = vst.msk [vmem:[%s81 + $0x50] sm:$0xf] %vm75, 0
    %85 = vst.msk [vmem:[%s81 + $0x54] sm:$0x1] %vm77, 0
    %s86 = scalar_lea.vmem [#allocation2], 8
    %vm87 = vcmask 253952
    %vm88 = vsmask.f32 256
    %vm89 = vmand %vm87, %vm88
    %v90 = vld [vmem:[%s86] sm:$0x1]
    %v91 = vsel %vm89, 0, %v90
    %92 = vst [vmem:[%s86] sm:$0x1] %v91
    %v93 = vld [vmem:[%s86 + $0x8] sm:$0x1]
    %v94 = vsel %vm89, 0, %v93
    %95 = vst [vmem:[%s86 + $0x8] sm:$0x1] %v94
    %v96 = vld [vmem:[%s86 + $0x10] sm:$0x1]
    %v97 = vsel %vm89, 0, %v96
    %98 = vst [vmem:[%s86 + $0x10] sm:$0x1] %v97
    %v99 = vld [vmem:[%s86 + $0x18] sm:$0x1]
    %v100 = vsel %vm89, 0, %v99
    %101 = vst [vmem:[%s86 + $0x18] sm:$0x1] %v100
    %v102 = vld [vmem:[%s86 + $0x20] sm:$0x1]
    %v103 = vsel %vm89, 0, %v102
    %104 = vst [vmem:[%s86 + $0x20] sm:$0x1] %v103
    %v105 = vld [vmem:[%s86 + $0x28] sm:$0x1]
    %v106 = vsel %vm89, 0, %v105
    %107 = vst [vmem:[%s86 + $0x28] sm:$0x1] %v106
    %v108 = vld [vmem:[%s86 + $0x30] sm:$0x1]
    %v109 = vsel %vm89, 0, %v108
    %110 = vst [vmem:[%s86 + $0x30] sm:$0x1] %v109
    %v111 = vld [vmem:[%s86 + $0x38] sm:$0x1]
    %v112 = vsel %vm89, 0, %v111
    %113 = vst [vmem:[%s86 + $0x38] sm:$0x1] %v112
    %v114 = vld [vmem:[%s86 + $0x50] sm:$0x1]
    %v115 = vsel %vm89, 0, %v114
    %116 = vst [vmem:[%s86 + $0x50] sm:$0x1] %v115
    %v117 = vld [vmem:[%s86 + $0x58] sm:$0x1]
    %v118 = vsel %vm89, 0, %v117
    %119 = vst [vmem:[%s86 + $0x58] sm:$0x1] %v118
    %v120 = vld [vmem:[%s86 + $0x60] sm:$0x1]
    %v121 = vsel %vm89, 0, %v120
    %122 = vst [vmem:[%s86 + $0x60] sm:$0x1] %v121
    %v123 = vld [vmem:[%s86 + $0x68] sm:$0x1]
    %v124 = vsel %vm89, 0, %v123
    %125 = vst [vmem:[%s86 + $0x68] sm:$0x1] %v124
    %v126 = vld [vmem:[%s86 + $0x70] sm:$0x1]
    %v127 = vsel %vm89, 0, %v126
    %128 = vst [vmem:[%s86 + $0x70] sm:$0x1] %v127
    %v129 = vld [vmem:[%s86 + $0x78] sm:$0x1]
    %v130 = vsel %vm89, 0, %v129
    %131 = vst [vmem:[%s86 + $0x78] sm:$0x1] %v130
    %v132 = vld [vmem:[%s86 + $0x80] sm:$0x1]
    %v133 = vsel %vm89, 0, %v132
    %134 = vst [vmem:[%s86 + $0x80] sm:$0x1] %v133
    %v135 = vld [vmem:[%s86 + $0x88] sm:$0x1]
    %v136 = vsel %vm89, 0, %v135
    %137 = vst [vmem:[%s86 + $0x88] sm:$0x1] %v136
    %vm138 = vsmask.f32 7938
    %vm139 = vmand %vm87, %vm138
    %v140 = vld [vmem:[%s86 + $0x4] sm:$0x1]
    %v141 = vsel %vm139, 0, %v140
    %142 = vst [vmem:[%s86 + $0x4] sm:$0x1] %v141
    %v143 = vld [vmem:[%s86 + $0xc] sm:$0x1]
    %v144 = vsel %vm139, 0, %v143
    %145 = vst [vmem:[%s86 + $0xc] sm:$0x1] %v144
    %v146 = vld [vmem:[%s86 + $0x14] sm:$0x1]
    %v147 = vsel %vm139, 0, %v146
    %148 = vst [vmem:[%s86 + $0x14] sm:$0x1] %v147
    %v149 = vld [vmem:[%s86 + $0x1c] sm:$0x1]
    %v150 = vsel %vm139, 0, %v149
    %151 = vst [vmem:[%s86 + $0x1c] sm:$0x1] %v150
    %v152 = vld [vmem:[%s86 + $0x24] sm:$0x1]
    %v153 = vsel %vm139, 0, %v152
    %154 = vst [vmem:[%s86 + $0x24] sm:$0x1] %v153
    %v155 = vld [vmem:[%s86 + $0x2c] sm:$0x1]
    %v156 = vsel %vm139, 0, %v155
    %157 = vst [vmem:[%s86 + $0x2c] sm:$0x1] %v156
    %v158 = vld [vmem:[%s86 + $0x34] sm:$0x1]
    %v159 = vsel %vm139, 0, %v158
    %160 = vst [vmem:[%s86 + $0x34] sm:$0x1] %v159
    %v161 = vld [vmem:[%s86 + $0x3c] sm:$0x1]
    %v162 = vsel %vm139, 0, %v161
    %163 = vst [vmem:[%s86 + $0x3c] sm:$0x1] %v162
    %v164 = vld [vmem:[%s86 + $0x54] sm:$0x1]
    %v165 = vsel %vm139, 0, %v164
    %166 = vst [vmem:[%s86 + $0x54] sm:$0x1] %v165
    %v167 = vld [vmem:[%s86 + $0x5c] sm:$0x1]
    %v168 = vsel %vm139, 0, %v167
    %169 = vst [vmem:[%s86 + $0x5c] sm:$0x1] %v168
    %v170 = vld [vmem:[%s86 + $0x64] sm:$0x1]
    %v171 = vsel %vm139, 0, %v170
    %172 = vst [vmem:[%s86 + $0x64] sm:$0x1] %v171
    %v173 = vld [vmem:[%s86 + $0x6c] sm:$0x1]
    %v174 = vsel %vm139, 0, %v173
    %175 = vst [vmem:[%s86 + $0x6c] sm:$0x1] %v174
    %v176 = vld [vmem:[%s86 + $0x74] sm:$0x1]
    %v177 = vsel %vm139, 0, %v176
    %178 = vst [vmem:[%s86 + $0x74] sm:$0x1] %v177
    %v179 = vld [vmem:[%s86 + $0x7c] sm:$0x1]
    %v180 = vsel %vm139, 0, %v179
    %181 = vst [vmem:[%s86 + $0x7c] sm:$0x1] %v180
    %v182 = vld [vmem:[%s86 + $0x84] sm:$0x1]
    %v183 = vsel %vm139, 0, %v182
    %184 = vst [vmem:[%s86 + $0x84] sm:$0x1] %v183
    %v185 = vld [vmem:[%s86 + $0x8c] sm:$0x1]
    %v186 = vsel %vm139, 0, %v185
    %187 = vst [vmem:[%s86 + $0x8c] sm:$0x1] %v186
    %v188 = vld [vmem:[#allocation3] sm:$0xf]
    %v189 = vld [vmem:[#allocation3 + $0x4] sm:$0xf]
    %v190 = vld [vmem:[#allocation3 + $0x8] sm:$0xf]
    %v191 = vld [vmem:[#allocation3 + $0xc] sm:$0xf]
    %v192 = vld [vmem:[#allocation3 + $0x10] sm:$0xf]
    %v193 = vld [vmem:[#allocation3 + $0x14] sm:$0xf]
    %v194 = vld [vmem:[#allocation3 + $0x18] sm:$0xf]
    %v195 = vld [vmem:[#allocation3 + $0x1c] sm:$0xf]
    %v196 = vld [vmem:[#allocation3 + $0x20] sm:$0xf]
    %v197 = vld [vmem:[#allocation3 + $0x24] sm:$0xf]
    %v198 = vld [vmem:[#allocation3 + $0x28] sm:$0xf]
    %v199 = vld [vmem:[#allocation3 + $0x2c] sm:$0xf]
    %v200 = vld [vmem:[#allocation3 + $0x30] sm:$0xf]
    %v201 = vld [vmem:[#allocation3 + $0x34] sm:$0xf]
    %v202 = vld [vmem:[#allocation3 + $0x38] sm:$0xf]
    %v203 = vld [vmem:[#allocation3 + $0x3c] sm:$0xf]
    %v205 = vshrl.u32 %v188, 16
    %v207 = vrot.slane %v205, 7
    %v208 = vshll.u32 %v188, 16
    %v210 = vor.u32 %v207, %v208
    %v211 = vrot.slane %v207, 4
    %v213 = vshrl.u32 %v189, 16
    %v215 = vrot.slane %v213, 7
    %v216 = vshll.u32 %v189, 16
    %v218 = vor.u32 %v215, %v216
    %v219 = vrot.slane %v215, 4
    %v221 = vshrl.u32 %v190, 16
    %v223 = vrot.slane %v221, 7
    %v224 = vshll.u32 %v190, 16
    %v226 = vor.u32 %v223, %v224
    %v227 = vrot.slane %v223, 4
    %v229 = vshrl.u32 %v191, 16
    %v231 = vrot.slane %v229, 7
    %v232 = vshll.u32 %v191, 16
    %v234 = vor.u32 %v231, %v232
    %v235 = vrot.slane %v231, 4
    %v237 = vshrl.u32 %v192, 16
    %v239 = vrot.slane %v237, 7
    %v240 = vshll.u32 %v192, 16
    %v242 = vor.u32 %v239, %v240
    %v243 = vrot.slane %v239, 4
    %v245 = vshrl.u32 %v193, 16
    %v247 = vrot.slane %v245, 7
    %v248 = vshll.u32 %v193, 16
    %v250 = vor.u32 %v247, %v248
    %v251 = vrot.slane %v247, 4
    %v253 = vshrl.u32 %v194, 16
    %v255 = vrot.slane %v253, 7
    %v256 = vshll.u32 %v194, 16
    %v258 = vor.u32 %v255, %v256
    %v259 = vrot.slane %v255, 4
    %v261 = vshrl.u32 %v195, 16
    %v263 = vrot.slane %v261, 7
    %v264 = vshll.u32 %v195, 16
    %v266 = vor.u32 %v263, %v264
    %v267 = vrot.slane %v263, 4
    %v269 = vshrl.u32 %v196, 16
    %v271 = vrot.slane %v269, 7
    %v272 = vshll.u32 %v196, 16
    %v274 = vor.u32 %v271, %v272
    %v275 = vrot.slane %v271, 4
    %v277 = vshrl.u32 %v197, 16
    %v279 = vrot.slane %v277, 7
    %v280 = vshll.u32 %v197, 16
    %v282 = vor.u32 %v279, %v280
    %v283 = vrot.slane %v279, 4
    %v285 = vshrl.u32 %v198, 16
    %v287 = vrot.slane %v285, 7
    %v288 = vshll.u32 %v198, 16
    %v290 = vor.u32 %v287, %v288
    %v291 = vrot.slane %v287, 4
    %v293 = vshrl.u32 %v199, 16
    %v295 = vrot.slane %v293, 7
    %v296 = vshll.u32 %v199, 16
    %v298 = vor.u32 %v295, %v296
    %v299 = vrot.slane %v295, 4
    %v301 = vshrl.u32 %v200, 16
    %v303 = vrot.slane %v301, 7
    %v304 = vshll.u32 %v200, 16
    %v306 = vor.u32 %v303, %v304
    %v307 = vrot.slane %v303, 4
    %v309 = vshrl.u32 %v201, 16
    %v311 = vrot.slane %v309, 7
    %v312 = vshll.u32 %v201, 16
    %v314 = vor.u32 %v311, %v312
    %v315 = vrot.slane %v311, 4
    %v317 = vshrl.u32 %v202, 16
    %v319 = vrot.slane %v317, 7
    %v320 = vshll.u32 %v202, 16
    %v322 = vor.u32 %v319, %v320
    %v323 = vrot.slane %v319, 4
    %v325 = vshrl.u32 %v203, 16
    %v327 = vrot.slane %v325, 7
    %v328 = vshll.u32 %v203, 16
    %v330 = vor.u32 %v327, %v328
    %v331 = vrot.slane %v327, 4
    %vm364 = vcmask 257024
    %vm365 = vmand %vm364, %vm138
    %v366 = vld [vmem:[%s86] sm:$0xf]
    %v367 = vsel %vm365, %v210, %v366
    %368 = vst [vmem:[%s86] sm:$0xf] %v367
    %v369 = vld [vmem:[%s86 + $0x4] sm:$0x1]
    %v370 = vsel %vm89, %v211, %v369
    %371 = vst [vmem:[%s86 + $0x4] sm:$0x1] %v370
    %v372 = vld [vmem:[%s86 + $0x8] sm:$0xf]
    %v373 = vsel %vm365, %v218, %v372
    %374 = vst [vmem:[%s86 + $0x8] sm:$0xf] %v373
    %v375 = vld [vmem:[%s86 + $0xc] sm:$0x1]
    %v376 = vsel %vm89, %v219, %v375
    %377 = vst [vmem:[%s86 + $0xc] sm:$0x1] %v376
    %v378 = vld [vmem:[%s86 + $0x10] sm:$0xf]
    %v379 = vsel %vm365, %v226, %v378
    %380 = vst [vmem:[%s86 + $0x10] sm:$0xf] %v379
    %v381 = vld [vmem:[%s86 + $0x14] sm:$0x1]
    %v382 = vsel %vm89, %v227, %v381
    %383 = vst [vmem:[%s86 + $0x14] sm:$0x1] %v382
    %v384 = vld [vmem:[%s86 + $0x18] sm:$0xf]
    %v385 = vsel %vm365, %v234, %v384
    %386 = vst [vmem:[%s86 + $0x18] sm:$0xf] %v385
    %v387 = vld [vmem:[%s86 + $0x1c] sm:$0x1]
    %v388 = vsel %vm89, %v235, %v387
    %389 = vst [vmem:[%s86 + $0x1c] sm:$0x1] %v388
    %v390 = vld [vmem:[%s86 + $0x20] sm:$0xf]
    %v391 = vsel %vm365, %v242, %v390
    %392 = vst [vmem:[%s86 + $0x20] sm:$0xf] %v391
    %v393 = vld [vmem:[%s86 + $0x24] sm:$0x1]
    %v394 = vsel %vm89, %v243, %v393
    %395 = vst [vmem:[%s86 + $0x24] sm:$0x1] %v394
    %v396 = vld [vmem:[%s86 + $0x28] sm:$0xf]
    %v397 = vsel %vm365, %v250, %v396
    %398 = vst [vmem:[%s86 + $0x28] sm:$0xf] %v397
    %v399 = vld [vmem:[%s86 + $0x2c] sm:$0x1]
    %v400 = vsel %vm89, %v251, %v399
    %401 = vst [vmem:[%s86 + $0x2c] sm:$0x1] %v400
    %v402 = vld [vmem:[%s86 + $0x30] sm:$0xf]
    %v403 = vsel %vm365, %v258, %v402
    %404 = vst [vmem:[%s86 + $0x30] sm:$0xf] %v403
    %v405 = vld [vmem:[%s86 + $0x34] sm:$0x1]
    %v406 = vsel %vm89, %v259, %v405
    %407 = vst [vmem:[%s86 + $0x34] sm:$0x1] %v406
    %v408 = vld [vmem:[%s86 + $0x38] sm:$0xf]
    %v409 = vsel %vm365, %v266, %v408
    %410 = vst [vmem:[%s86 + $0x38] sm:$0xf] %v409
    %v411 = vld [vmem:[%s86 + $0x3c] sm:$0x1]
    %v412 = vsel %vm89, %v267, %v411
    %413 = vst [vmem:[%s86 + $0x3c] sm:$0x1] %v412
    %v414 = vld [vmem:[%s86 + $0x50] sm:$0xf]
    %v415 = vsel %vm365, %v274, %v414
    %416 = vst [vmem:[%s86 + $0x50] sm:$0xf] %v415
    %v417 = vld [vmem:[%s86 + $0x54] sm:$0x1]
    %v418 = vsel %vm89, %v275, %v417
    %419 = vst [vmem:[%s86 + $0x54] sm:$0x1] %v418
    %v420 = vld [vmem:[%s86 + $0x58] sm:$0xf]
    %v421 = vsel %vm365, %v282, %v420
    %422 = vst [vmem:[%s86 + $0x58] sm:$0xf] %v421
    %v423 = vld [vmem:[%s86 + $0x5c] sm:$0x1]
    %v424 = vsel %vm89, %v283, %v423
    %425 = vst [vmem:[%s86 + $0x5c] sm:$0x1] %v424
    %v426 = vld [vmem:[%s86 + $0x60] sm:$0xf]
    %v427 = vsel %vm365, %v290, %v426
    %428 = vst [vmem:[%s86 + $0x60] sm:$0xf] %v427
    %v429 = vld [vmem:[%s86 + $0x64] sm:$0x1]
    %v430 = vsel %vm89, %v291, %v429
    %431 = vst [vmem:[%s86 + $0x64] sm:$0x1] %v430
    %v432 = vld [vmem:[%s86 + $0x68] sm:$0xf]
    %v433 = vsel %vm365, %v298, %v432
    %434 = vst [vmem:[%s86 + $0x68] sm:$0xf] %v433
    %v435 = vld [vmem:[%s86 + $0x6c] sm:$0x1]
    %v436 = vsel %vm89, %v299, %v435
    %437 = vst [vmem:[%s86 + $0x6c] sm:$0x1] %v436
    %v438 = vld [vmem:[%s86 + $0x70] sm:$0xf]
    %v439 = vsel %vm365, %v306, %v438
    %440 = vst [vmem:[%s86 + $0x70] sm:$0xf] %v439
    %v441 = vld [vmem:[%s86 + $0x74] sm:$0x1]
    %v442 = vsel %vm89, %v307, %v441
    %443 = vst [vmem:[%s86 + $0x74] sm:$0x1] %v442
    %v444 = vld [vmem:[%s86 + $0x78] sm:$0xf]
    %v445 = vsel %vm365, %v314, %v444
    %446 = vst [vmem:[%s86 + $0x78] sm:$0xf] %v445
    %v447 = vld [vmem:[%s86 + $0x7c] sm:$0x1]
    %v448 = vsel %vm89, %v315, %v447
    %449 = vst [vmem:[%s86 + $0x7c] sm:$0x1] %v448
    %v450 = vld [vmem:[%s86 + $0x80] sm:$0xf]
    %v451 = vsel %vm365, %v322, %v450
    %452 = vst [vmem:[%s86 + $0x80] sm:$0xf] %v451
    %v453 = vld [vmem:[%s86 + $0x84] sm:$0x1]
    %v454 = vsel %vm89, %v323, %v453
    %455 = vst [vmem:[%s86 + $0x84] sm:$0x1] %v454
    %v456 = vld [vmem:[%s86 + $0x88] sm:$0xf]
    %v457 = vsel %vm365, %v330, %v456
    %458 = vst [vmem:[%s86 + $0x88] sm:$0xf] %v457
    %v459 = vld [vmem:[%s86 + $0x8c] sm:$0x1]
    %v460 = vsel %vm89, %v331, %v459
    %461 = vst [vmem:[%s86 + $0x8c] sm:$0x1] %v460
    %v462 = vld [vmem:[#allocation2] sm:$0xf]
    %v463 = vld [vmem:[#allocation2 + $0x8] sm:$0xf]
    %v464 = vld [vmem:[#allocation2 + $0x10] sm:$0xf]
    %v465 = vld [vmem:[#allocation2 + $0x18] sm:$0xf]
    %v466 = vld [vmem:[#allocation2 + $0x20] sm:$0xf]
    %v467 = vld [vmem:[#allocation2 + $0x28] sm:$0xf]
    %v468 = vld [vmem:[#allocation2 + $0x30] sm:$0xf]
    %v469 = vld [vmem:[#allocation2 + $0x38] sm:$0xf]
    %v470 = vld [vmem:[#allocation2 + $0x50] sm:$0xf]
    %v471 = vld [vmem:[#allocation2 + $0x58] sm:$0xf]
    %v472 = vld [vmem:[#allocation2 + $0x60] sm:$0xf]
    %v473 = vld [vmem:[#allocation2 + $0x68] sm:$0xf]
    %v474 = vld [vmem:[#allocation2 + $0x70] sm:$0xf]
    %v475 = vld [vmem:[#allocation2 + $0x78] sm:$0xf]
    %v476 = vld [vmem:[#allocation2 + $0x80] sm:$0xf]
    %v477 = vld [vmem:[#allocation2 + $0x88] sm:$0xf]
    %v478 = vld [vmem:[#allocation6] sm:$0xf]
    %v479 = vld [vmem:[#allocation6 + $0x4] sm:$0xf]
    %v480 = vld [vmem:[#allocation6 + $0x8] sm:$0xf]
    %v481 = vld [vmem:[#allocation6 + $0xc] sm:$0xf]
    %v482 = vld [vmem:[#allocation2 + $0x4] sm:$0x1]
    %v483 = vld [vmem:[#allocation2 + $0xc] sm:$0x1]
    %v484 = vld [vmem:[#allocation2 + $0x14] sm:$0x1]
    %v485 = vld [vmem:[#allocation2 + $0x1c] sm:$0x1]
    %v486 = vld [vmem:[#allocation2 + $0x24] sm:$0x1]
    %v487 = vld [vmem:[#allocation2 + $0x2c] sm:$0x1]
    %v488 = vld [vmem:[#allocation2 + $0x34] sm:$0x1]
    %v489 = vld [vmem:[#allocation2 + $0x3c] sm:$0x1]
    %v490 = vld [vmem:[#allocation2 + $0x54] sm:$0x1]
    %v491 = vld [vmem:[#allocation2 + $0x5c] sm:$0x1]
    %v492 = vld [vmem:[#allocation2 + $0x64] sm:$0x1]
    %v493 = vld [vmem:[#allocation2 + $0x6c] sm:$0x1]
    %v494 = vld [vmem:[#allocation2 + $0x74] sm:$0x1]
    %v495 = vld [vmem:[#allocation2 + $0x7c] sm:$0x1]
    %v496 = vld [vmem:[#allocation2 + $0x84] sm:$0x1]
    %v497 = vld [vmem:[#allocation2 + $0x8c] sm:$0x1]
    %vm498 = vsmask.f32 3328
    %vm499 = vsmask.f32 7440
    %vm500 = vmor %vm498, %vm499
    %v502 = vshrl.u32 %v462, 16
    %v504 = vrot.slane %v502, 4
    %v505 = vshll.u32 %v462, 16
    %v507 = vrot.slane %v505, 5
    %v508 = vor.u32 %v504, %v507
    %v509 = vrot.slane %v508, 4
    %v511 = vshll.u32 %v482, 16
    %v513 = vrot.slane %v511, 5
    %v514 = vsel %vm500, %v509, %v513
    %v516 = vshrl.u32 %v463, 16
    %v518 = vrot.slane %v516, 4
    %v519 = vshll.u32 %v463, 16
    %v521 = vrot.slane %v519, 5
    %v522 = vor.u32 %v518, %v521
    %v523 = vrot.slane %v522, 4
    %v525 = vshll.u32 %v483, 16
    %v527 = vrot.slane %v525, 5
    %v528 = vsel %vm500, %v523, %v527
    %v530 = vshrl.u32 %v464, 16
    %v532 = vrot.slane %v530, 4
    %v533 = vshll.u32 %v464, 16
    %v535 = vrot.slane %v533, 5
    %v536 = vor.u32 %v532, %v535
    %v537 = vrot.slane %v536, 4
    %v539 = vshll.u32 %v484, 16
    %v541 = vrot.slane %v539, 5
    %v542 = vsel %vm500, %v537, %v541
    %v544 = vshrl.u32 %v465, 16
    %v546 = vrot.slane %v544, 4
    %v547 = vshll.u32 %v465, 16
    %v549 = vrot.slane %v547, 5
    %v550 = vor.u32 %v546, %v549
    %v551 = vrot.slane %v550, 4
    %v553 = vshll.u32 %v485, 16
    %v555 = vrot.slane %v553, 5
    %v556 = vsel %vm500, %v551, %v555
    %v558 = vshrl.u32 %v466, 16
    %v560 = vrot.slane %v558, 4
    %v561 = vshll.u32 %v466, 16
    %v563 = vrot.slane %v561, 5
    %v564 = vor.u32 %v560, %v563
    %v565 = vrot.slane %v564, 4
    %v567 = vshll.u32 %v486, 16
    %v569 = vrot.slane %v567, 5
    %v570 = vsel %vm500, %v565, %v569
    %v572 = vshrl.u32 %v467, 16
    %v574 = vrot.slane %v572, 4
    %v575 = vshll.u32 %v467, 16
    %v577 = vrot.slane %v575, 5
    %v578 = vor.u32 %v574, %v577
    %v579 = vrot.slane %v578, 4
    %v581 = vshll.u32 %v487, 16
    %v583 = vrot.slane %v581, 5
    %v584 = vsel %vm500, %v579, %v583
    %v586 = vshrl.u32 %v468, 16
    %v588 = vrot.slane %v586, 4
    %v589 = vshll.u32 %v468, 16
    %v591 = vrot.slane %v589, 5
    %v592 = vor.u32 %v588, %v591
    %v593 = vrot.slane %v592, 4
    %v595 = vshll.u32 %v488, 16
    %v597 = vrot.slane %v595, 5
    %v598 = vsel %vm500, %v593, %v597
    %v600 = vshrl.u32 %v469, 16
    %v602 = vrot.slane %v600, 4
    %v603 = vshll.u32 %v469, 16
    %v605 = vrot.slane %v603, 5
    %v606 = vor.u32 %v602, %v605
    %v607 = vrot.slane %v606, 4
    %v609 = vshll.u32 %v489, 16
    %v611 = vrot.slane %v609, 5
    %v612 = vsel %vm500, %v607, %v611
    %v614 = vshrl.u32 %v470, 16
    %v616 = vrot.slane %v614, 4
    %v617 = vshll.u32 %v470, 16
    %v619 = vrot.slane %v617, 5
    %v620 = vor.u32 %v616, %v619
    %v621 = vrot.slane %v620, 4
    %v623 = vshll.u32 %v490, 16
    %v625 = vrot.slane %v623, 5
    %v626 = vsel %vm500, %v621, %v625
    %v628 = vshrl.u32 %v471, 16
    %v630 = vrot.slane %v628, 4
    %v631 = vshll.u32 %v471, 16
    %v633 = vrot.slane %v631, 5
    %v634 = vor.u32 %v630, %v633
    %v635 = vrot.slane %v634, 4
    %v637 = vshll.u32 %v491, 16
    %v639 = vrot.slane %v637, 5
    %v640 = vsel %vm500, %v635, %v639
    %v642 = vshrl.u32 %v472, 16
    %v644 = vrot.slane %v642, 4
    %v645 = vshll.u32 %v472, 16
    %v647 = vrot.slane %v645, 5
    %v648 = vor.u32 %v644, %v647
    %v649 = vrot.slane %v648, 4
    %v651 = vshll.u32 %v492, 16
    %v653 = vrot.slane %v651, 5
    %v654 = vsel %vm500, %v649, %v653
    %v656 = vshrl.u32 %v473, 16
    %v658 = vrot.slane %v656, 4
    %v659 = vshll.u32 %v473, 16
    %v661 = vrot.slane %v659, 5
    %v662 = vor.u32 %v658, %v661
    %v663 = vrot.slane %v662, 4
    %v665 = vshll.u32 %v493, 16
    %v667 = vrot.slane %v665, 5
    %v668 = vsel %vm500, %v663, %v667
    %v670 = vshrl.u32 %v474, 16
    %v672 = vrot.slane %v670, 4
    %v673 = vshll.u32 %v474, 16
    %v675 = vrot.slane %v673, 5
    %v676 = vor.u32 %v672, %v675
    %v677 = vrot.slane %v676, 4
    %v679 = vshll.u32 %v494, 16
    %v681 = vrot.slane %v679, 5
    %v682 = vsel %vm500, %v677, %v681
    %v684 = vshrl.u32 %v475, 16
    %v686 = vrot.slane %v684, 4
    %v687 = vshll.u32 %v475, 16
    %v689 = vrot.slane %v687, 5
    %v690 = vor.u32 %v686, %v689
    %v691 = vrot.slane %v690, 4
    %v693 = vshll.u32 %v495, 16
    %v695 = vrot.slane %v693, 5
    %v696 = vsel %vm500, %v691, %v695
    %v698 = vshrl.u32 %v476, 16
    %v700 = vrot.slane %v698, 4
    %v701 = vshll.u32 %v476, 16
    %v703 = vrot.slane %v701, 5
    %v704 = vor.u32 %v700, %v703
    %v705 = vrot.slane %v704, 4
    %v707 = vshll.u32 %v496, 16
    %v709 = vrot.slane %v707, 5
    %v710 = vsel %vm500, %v705, %v709
    %v712 = vshrl.u32 %v477, 16
    %v714 = vrot.slane %v712, 4
    %v715 = vshll.u32 %v477, 16
    %v717 = vrot.slane %v715, 5
    %v718 = vor.u32 %v714, %v717
    %v719 = vrot.slane %v718, 4
    %v721 = vshll.u32 %v497, 16
    %v723 = vrot.slane %v721, 5
    %v724 = vsel %vm500, %v719, %v723
    %s725 = scalar_lea.vmem [#allocation6], 16
    %v726 = vld [vmem:[%s725] sm:$0xf]
    %v727 = vld [vmem:[%s725 + $0x4] sm:$0xf]
    %v728 = vld [vmem:[%s725 + $0x8] sm:$0xf]
    %v729 = vld [vmem:[%s725 + $0xc] sm:$0xf]
    %v730 = vunpack.c.l.b16 %v514
    %v731 = vunpack.c.l.b16 %v528
    %v732 = vunpack.c.l.b16 %v542
    %v733 = vunpack.c.l.b16 %v556
    %v734 = vunpack.c.l.b16 %v570
    %v735 = vunpack.c.l.b16 %v584
    %v736 = vunpack.c.l.b16 %v598
    %v737 = vunpack.c.l.b16 %v612
    %v738 = vunpack.c.l.b16 %v626
    %v739 = vunpack.c.l.b16 %v640
    %v740 = vunpack.c.l.b16 %v654
    %v741 = vunpack.c.l.b16 %v668
    %v742 = vunpack.c.l.b16 %v682
    %v743 = vunpack.c.l.b16 %v696
    %v744 = vunpack.c.l.b16 %v710
    %v745 = vunpack.c.l.b16 %v724
    %v746 = vpack.c.b16 %v731, %v730
    %v747 = vpack.c.b16 %v733, %v732
    %v748 = vpack.c.b16 %v735, %v734
    %v749 = vpack.c.b16 %v737, %v736
    %v750 = vpack.c.b16 %v739, %v738
    %v751 = vpack.c.b16 %v741, %v740
    %v752 = vpack.c.b16 %v743, %v742
    %v753 = vpack.c.b16 %v745, %v744
    %v758 = vunpack.c.l.b16 %v726
    %v759 = vunpack.c.l.b16 %v727
    %v760 = vunpack.c.l.b16 %v728
    %v761 = vunpack.c.l.b16 %v729
    %v762 = vpack.c.b16 %v759, %v758
    %v763 = vpack.c.b16 %v761, %v760
    %vm766 = vcmask 261120
    %v768 = vsel %vm766, %v746, 0
    %v771 = vsel %vm766, %v747, 0
    %v774 = vsel %vm766, %v748, 0
    %v777 = vsel %vm766, %v749, 0
    %v780 = vsel %vm766, %v750, 0
    %v783 = vsel %vm766, %v751, 0
    %v786 = vsel %vm766, %v752, 0
    %v789 = vsel %vm766, %v753, 0
    %791 = vmatpush.bf16.msra.mxu0 0
    %792 = vmatpush.bf16.msra.mxu0 0
    %793 = vmatpush.bf16.msra.mxu0 0
    %794 = vmatpush.bf16.msra.mxu0 0
    %795 = vmatpush.bf16.msra.mxu0 0
    %796 = vmatpush.bf16.msra.mxu0 0
    %797 = vmatpush.bf16.msra.mxu0 %v763
    %798 = vmatpush.bf16.msra.mxu0 %v762
    %799 = vmatmul.bf16.gmra.mxu0 %v768
    %v800 = vpop.f32.mrf.mxu0
    %v801 = vadd.f32 0.0, %v800
    %v802 = vpop.f32.mrf.mxu0
    %v803 = vadd.f32 0.0, %v802
    %804 = vmatmul.bf16.gmra.mxu0 %v771
    %v805 = vpop.f32.mrf.mxu0
    %v806 = vadd.f32 0.0, %v805
    %v807 = vpop.f32.mrf.mxu0
    %v808 = vadd.f32 0.0, %v807
    %809 = vmatmul.bf16.gmra.mxu0 %v774
    %v810 = vpop.f32.mrf.mxu0
    %v811 = vadd.f32 0.0, %v810
    %v812 = vpop.f32.mrf.mxu0
    %v813 = vadd.f32 0.0, %v812
    %814 = vmatmul.bf16.gmra.mxu0 %v777
    %v815 = vpop.f32.mrf.mxu0
    %v816 = vadd.f32 0.0, %v815
    %v817 = vpop.f32.mrf.mxu0
    %v818 = vadd.f32 0.0, %v817
    %819 = vmatmul.bf16.gmra.mxu0 %v780
    %v820 = vpop.f32.mrf.mxu0
    %v821 = vadd.f32 0.0, %v820
    %v822 = vpop.f32.mrf.mxu0
    %v823 = vadd.f32 0.0, %v822
    %824 = vmatmul.bf16.gmra.mxu0 %v783
    %v825 = vpop.f32.mrf.mxu0
    %v826 = vadd.f32 0.0, %v825
    %v827 = vpop.f32.mrf.mxu0
    %v828 = vadd.f32 0.0, %v827
    %829 = vmatmul.bf16.gmra.mxu0 %v786
    %v830 = vpop.f32.mrf.mxu0
    %v831 = vadd.f32 0.0, %v830
    %v832 = vpop.f32.mrf.mxu0
    %v833 = vadd.f32 0.0, %v832
    %834 = vmatmul.bf16.gmra.mxu0 %v789
    %v835 = vpop.f32.mrf.mxu0
    %v836 = vadd.f32 0.0, %v835
    %v837 = vpop.f32.mrf.mxu0
    %v838 = vadd.f32 0.0, %v837
    %839 = vdwg.mxu0
    %v856 = vunpack.c.l.b16 %v462
    %v857 = vunpack.c.l.b16 %v463
    %v858 = vunpack.c.l.b16 %v464
    %v859 = vunpack.c.l.b16 %v465
    %v860 = vunpack.c.l.b16 %v466
    %v861 = vunpack.c.l.b16 %v467
    %v862 = vunpack.c.l.b16 %v468
    %v863 = vunpack.c.l.b16 %v469
    %v864 = vunpack.c.l.b16 %v470
    %v865 = vunpack.c.l.b16 %v471
    %v866 = vunpack.c.l.b16 %v472
    %v867 = vunpack.c.l.b16 %v473
    %v868 = vunpack.c.l.b16 %v474
    %v869 = vunpack.c.l.b16 %v475
    %v870 = vunpack.c.l.b16 %v476
    %v871 = vunpack.c.l.b16 %v477
    %v872 = vpack.c.b16 %v857, %v856
    %v873 = vpack.c.b16 %v859, %v858
    %v874 = vpack.c.b16 %v861, %v860
    %v875 = vpack.c.b16 %v863, %v862
    %v876 = vpack.c.b16 %v865, %v864
    %v877 = vpack.c.b16 %v867, %v866
    %v878 = vpack.c.b16 %v869, %v868
    %v879 = vpack.c.b16 %v871, %v870
    %v884 = vunpack.c.l.b16 %v478
    %v885 = vunpack.c.l.b16 %v479
    %v886 = vunpack.c.l.b16 %v480
    %v887 = vunpack.c.l.b16 %v481
    %v888 = vpack.c.b16 %v885, %v884
    %v889 = vpack.c.b16 %v887, %v886
    %v893 = vsel %vm766, %v872, 0
    %v896 = vsel %vm766, %v873, 0
    %v899 = vsel %vm766, %v874, 0
    %v902 = vsel %vm766, %v875, 0
    %v905 = vsel %vm766, %v876, 0
    %v908 = vsel %vm766, %v877, 0
    %v911 = vsel %vm766, %v878, 0
    %v914 = vsel %vm766, %v879, 0
    %916 = vmatpush.bf16.msra.mxu0 0
    %917 = vmatpush.bf16.msra.mxu0 0
    %918 = vmatpush.bf16.msra.mxu0 0
    %919 = vmatpush.bf16.msra.mxu0 0
    %920 = vmatpush.bf16.msra.mxu0 0
    %921 = vmatpush.bf16.msra.mxu0 0
    %922 = vmatpush.bf16.msra.mxu0 %v889
    %923 = vmatpush.bf16.msra.mxu0 %v888
    %924 = vmatmul.bf16.gmra.mxu0 %v893
    %v925 = vpop.f32.mrf.mxu0
    %v926 = vadd.f32 %v801, %v925
    %v927 = vpop.f32.mrf.mxu0
    %v928 = vadd.f32 %v803, %v927
    %929 = vmatmul.bf16.gmra.mxu0 %v896
    %v930 = vpop.f32.mrf.mxu0
    %v931 = vadd.f32 %v806, %v930
    %v932 = vpop.f32.mrf.mxu0
    %v933 = vadd.f32 %v808, %v932
    %934 = vmatmul.bf16.gmra.mxu0 %v899
    %v935 = vpop.f32.mrf.mxu0
    %v936 = vadd.f32 %v811, %v935
    %v937 = vpop.f32.mrf.mxu0
    %v938 = vadd.f32 %v813, %v937
    %939 = vmatmul.bf16.gmra.mxu0 %v902
    %v940 = vpop.f32.mrf.mxu0
    %v941 = vadd.f32 %v816, %v940
    %v942 = vpop.f32.mrf.mxu0
    %v943 = vadd.f32 %v818, %v942
    %944 = vmatmul.bf16.gmra.mxu0 %v905
    %v945 = vpop.f32.mrf.mxu0
    %v946 = vadd.f32 %v821, %v945
    %v947 = vpop.f32.mrf.mxu0
    %v948 = vadd.f32 %v823, %v947
    %949 = vmatmul.bf16.gmra.mxu0 %v908
    %v950 = vpop.f32.mrf.mxu0
    %v951 = vadd.f32 %v826, %v950
    %v952 = vpop.f32.mrf.mxu0
    %v953 = vadd.f32 %v828, %v952
    %954 = vmatmul.bf16.gmra.mxu0 %v911
    %v955 = vpop.f32.mrf.mxu0
    %v956 = vadd.f32 %v831, %v955
    %v957 = vpop.f32.mrf.mxu0
    %v958 = vadd.f32 %v833, %v957
    %959 = vmatmul.bf16.gmra.mxu0 %v914
    %v960 = vpop.f32.mrf.mxu0
    %v961 = vadd.f32 %v836, %v960
    %v962 = vpop.f32.mrf.mxu0
    %v963 = vadd.f32 %v838, %v962
    %964 = vdwg.mxu0
    %v965 = vld [vmem:[#allocation2] sm:$0xe]
    %v966 = vld [vmem:[#allocation2 + $0x8] sm:$0xe]
    %v967 = vld [vmem:[#allocation2 + $0x10] sm:$0xe]
    %v968 = vld [vmem:[#allocation2 + $0x18] sm:$0xe]
    %v969 = vld [vmem:[#allocation2 + $0x20] sm:$0xe]
    %v970 = vld [vmem:[#allocation2 + $0x28] sm:$0xe]
    %v971 = vld [vmem:[#allocation2 + $0x30] sm:$0xe]
    %v972 = vld [vmem:[#allocation2 + $0x38] sm:$0xe]
    %v973 = vld [vmem:[#allocation2 + $0x50] sm:$0xe]
    %v974 = vld [vmem:[#allocation2 + $0x58] sm:$0xe]
    %v975 = vld [vmem:[#allocation2 + $0x60] sm:$0xe]
    %v976 = vld [vmem:[#allocation2 + $0x68] sm:$0xe]
    %v977 = vld [vmem:[#allocation2 + $0x70] sm:$0xe]
    %v978 = vld [vmem:[#allocation2 + $0x78] sm:$0xe]
    %v979 = vld [vmem:[#allocation2 + $0x80] sm:$0xe]
    %v980 = vld [vmem:[#allocation2 + $0x88] sm:$0xe]
    %vm1013 = vcmask 1042432
    %vm1014 = vcmask 1046532
    %vm1015 = vmor %vm1013, %vm1014
    %v1016 = vrot.slane %v965, 5
    %v1017 = vrot.slane %v1016, 4
    %v1018 = vrot.slane %v482, 5
    %v1019 = vsel %vm1015, %v1017, %v1018
    %v1020 = vrot.slane %v966, 5
    %v1021 = vrot.slane %v1020, 4
    %v1022 = vrot.slane %v483, 5
    %v1023 = vsel %vm1015, %v1021, %v1022
    %v1024 = vrot.slane %v967, 5
    %v1025 = vrot.slane %v1024, 4
    %v1026 = vrot.slane %v484, 5
    %v1027 = vsel %vm1015, %v1025, %v1026
    %v1028 = vrot.slane %v968, 5
    %v1029 = vrot.slane %v1028, 4
    %v1030 = vrot.slane %v485, 5
    %v1031 = vsel %vm1015, %v1029, %v1030
    %v1032 = vrot.slane %v969, 5
    %v1033 = vrot.slane %v1032, 4
    %v1034 = vrot.slane %v486, 5
    %v1035 = vsel %vm1015, %v1033, %v1034
    %v1036 = vrot.slane %v970, 5
    %v1037 = vrot.slane %v1036, 4
    %v1038 = vrot.slane %v487, 5
    %v1039 = vsel %vm1015, %v1037, %v1038
    %v1040 = vrot.slane %v971, 5
    %v1041 = vrot.slane %v1040, 4
    %v1042 = vrot.slane %v488, 5
    %v1043 = vsel %vm1015, %v1041, %v1042
    %v1044 = vrot.slane %v972, 5
    %v1045 = vrot.slane %v1044, 4
    %v1046 = vrot.slane %v489, 5
    %v1047 = vsel %vm1015, %v1045, %v1046
    %v1048 = vrot.slane %v973, 5
    %v1049 = vrot.slane %v1048, 4
    %v1050 = vrot.slane %v490, 5
    %v1051 = vsel %vm1015, %v1049, %v1050
    %v1052 = vrot.slane %v974, 5
    %v1053 = vrot.slane %v1052, 4
    %v1054 = vrot.slane %v491, 5
    %v1055 = vsel %vm1015, %v1053, %v1054
    %v1056 = vrot.slane %v975, 5
    %v1057 = vrot.slane %v1056, 4
    %v1058 = vrot.slane %v492, 5
    %v1059 = vsel %vm1015, %v1057, %v1058
    %v1060 = vrot.slane %v976, 5
    %v1061 = vrot.slane %v1060, 4
    %v1062 = vrot.slane %v493, 5
    %v1063 = vsel %vm1015, %v1061, %v1062
    %v1064 = vrot.slane %v977, 5
    %v1065 = vrot.slane %v1064, 4
    %v1066 = vrot.slane %v494, 5
    %v1067 = vsel %vm1015, %v1065, %v1066
    %v1068 = vrot.slane %v978, 5
    %v1069 = vrot.slane %v1068, 4
    %v1070 = vrot.slane %v495, 5
    %v1071 = vsel %vm1015, %v1069, %v1070
    %v1072 = vrot.slane %v979, 5
    %v1073 = vrot.slane %v1072, 4
    %v1074 = vrot.slane %v496, 5
    %v1075 = vsel %vm1015, %v1073, %v1074
    %v1076 = vrot.slane %v980, 5
    %v1077 = vrot.slane %v1076, 4
    %v1078 = vrot.slane %v497, 5
    %v1079 = vsel %vm1015, %v1077, %v1078
    %s1080 = scalar_lea.vmem [#allocation6], 32
    %v1081 = vld [vmem:[%s1080] sm:$0xf]
    %v1082 = vld [vmem:[%s1080 + $0x4] sm:$0xf]
    %v1083 = vld [vmem:[%s1080 + $0x8] sm:$0xf]
    %v1084 = vld [vmem:[%s1080 + $0xc] sm:$0xf]
    %v1085 = vunpack.c.l.b16 %v1019
    %v1086 = vunpack.c.l.b16 %v1023
    %v1087 = vunpack.c.l.b16 %v1027
    %v1088 = vunpack.c.l.b16 %v1031
    %v1089 = vunpack.c.l.b16 %v1035
    %v1090 = vunpack.c.l.b16 %v1039
    %v1091 = vunpack.c.l.b16 %v1043
    %v1092 = vunpack.c.l.b16 %v1047
    %v1093 = vunpack.c.l.b16 %v1051
    %v1094 = vunpack.c.l.b16 %v1055
    %v1095 = vunpack.c.l.b16 %v1059
    %v1096 = vunpack.c.l.b16 %v1063
    %v1097 = vunpack.c.l.b16 %v1067
    %v1098 = vunpack.c.l.b16 %v1071
    %v1099 = vunpack.c.l.b16 %v1075
    %v1100 = vunpack.c.l.b16 %v1079
    %v1101 = vpack.c.b16 %v1086, %v1085
    %v1102 = vpack.c.b16 %v1088, %v1087
    %v1103 = vpack.c.b16 %v1090, %v1089
    %v1104 = vpack.c.b16 %v1092, %v1091
    %v1105 = vpack.c.b16 %v1094, %v1093
    %v1106 = vpack.c.b16 %v1096, %v1095
    %v1107 = vpack.c.b16 %v1098, %v1097
    %v1108 = vpack.c.b16 %v1100, %v1099
    %v1113 = vunpack.c.l.b16 %v1081
    %v1114 = vunpack.c.l.b16 %v1082
    %v1115 = vunpack.c.l.b16 %v1083
    %v1116 = vunpack.c.l.b16 %v1084
    %v1117 = vpack.c.b16 %v1114, %v1113
    %v1118 = vpack.c.b16 %v1116, %v1115
    %v1122 = vsel %vm766, %v1101, 0
    %v1125 = vsel %vm766, %v1102, 0
    %v1128 = vsel %vm766, %v1103, 0
    %v1131 = vsel %vm766, %v1104, 0
    %v1134 = vsel %vm766, %v1105, 0
    %v1137 = vsel %vm766, %v1106, 0
    %v1140 = vsel %vm766, %v1107, 0
    %v1143 = vsel %vm766, %v1108, 0
    %1145 = vmatpush.bf16.msra.mxu0 0
    %1146 = vmatpush.bf16.msra.mxu0 0
    %1147 = vmatpush.bf16.msra.mxu0 0
    %1148 = vmatpush.bf16.msra.mxu0 0
    %1149 = vmatpush.bf16.msra.mxu0 0
    %1150 = vmatpush.bf16.msra.mxu0 0
    %1151 = vmatpush.bf16.msra.mxu0 %v1118
    %1152 = vmatpush.bf16.msra.mxu0 %v1117
    %1153 = vmatmul.bf16.gmra.mxu0 %v1122
    %v1154 = vpop.f32.mrf.mxu0
    %v1155 = vadd.f32 0.0, %v1154
    %v1156 = vpop.f32.mrf.mxu0
    %v1157 = vadd.f32 0.0, %v1156
    %1158 = vmatmul.bf16.gmra.mxu0 %v1125
    %v1159 = vpop.f32.mrf.mxu0
    %v1160 = vadd.f32 0.0, %v1159
    %v1161 = vpop.f32.mrf.mxu0
    %v1162 = vadd.f32 0.0, %v1161
    %1163 = vmatmul.bf16.gmra.mxu0 %v1128
    %v1164 = vpop.f32.mrf.mxu0
    %v1165 = vadd.f32 0.0, %v1164
    %v1166 = vpop.f32.mrf.mxu0
    %v1167 = vadd.f32 0.0, %v1166
    %1168 = vmatmul.bf16.gmra.mxu0 %v1131
    %v1169 = vpop.f32.mrf.mxu0
    %v1170 = vadd.f32 0.0, %v1169
    %v1171 = vpop.f32.mrf.mxu0
    %v1172 = vadd.f32 0.0, %v1171
    %1173 = vmatmul.bf16.gmra.mxu0 %v1134
    %v1174 = vpop.f32.mrf.mxu0
    %v1175 = vadd.f32 0.0, %v1174
    %v1176 = vpop.f32.mrf.mxu0
    %v1177 = vadd.f32 0.0, %v1176
    %1178 = vmatmul.bf16.gmra.mxu0 %v1137
    %v1179 = vpop.f32.mrf.mxu0
    %v1180 = vadd.f32 0.0, %v1179
    %v1181 = vpop.f32.mrf.mxu0
    %v1182 = vadd.f32 0.0, %v1181
    %1183 = vmatmul.bf16.gmra.mxu0 %v1140
    %v1184 = vpop.f32.mrf.mxu0
    %v1185 = vadd.f32 0.0, %v1184
    %v1186 = vpop.f32.mrf.mxu0
    %v1187 = vadd.f32 0.0, %v1186
    %1188 = vmatmul.bf16.gmra.mxu0 %v1143
    %v1189 = vpop.f32.mrf.mxu0
    %v1190 = vadd.f32 0.0, %v1189
    %v1191 = vpop.f32.mrf.mxu0
    %v1192 = vadd.f32 0.0, %v1191
    %1193 = vdwg.mxu0
    %v1194 = vadd.f32 %v926, %v1155
    %v1195 = vadd.f32 %v928, %v1157
    %v1196 = vadd.f32 %v931, %v1160
    %v1197 = vadd.f32 %v933, %v1162
    %v1198 = vadd.f32 %v936, %v1165
    %v1199 = vadd.f32 %v938, %v1167
    %v1200 = vadd.f32 %v941, %v1170
    %v1201 = vadd.f32 %v943, %v1172
    %v1202 = vadd.f32 %v946, %v1175
    %v1203 = vadd.f32 %v948, %v1177
    %v1204 = vadd.f32 %v951, %v1180
    %v1205 = vadd.f32 %v953, %v1182
    %v1206 = vadd.f32 %v956, %v1185
    %v1207 = vadd.f32 %v958, %v1187
    %v1208 = vadd.f32 %v961, %v1190
    %v1209 = vadd.f32 %v963, %v1192
    %v1210 = vld [vmem:[%s86] sm:$0xf]
    %v1211 = vld [vmem:[%s86 + $0x8] sm:$0xf]
    %v1212 = vld [vmem:[%s86 + $0x10] sm:$0xf]
    %v1213 = vld [vmem:[%s86 + $0x18] sm:$0xf]
    %v1214 = vld [vmem:[%s86 + $0x20] sm:$0xf]
    %v1215 = vld [vmem:[%s86 + $0x28] sm:$0xf]
    %v1216 = vld [vmem:[%s86 + $0x30] sm:$0xf]
    %v1217 = vld [vmem:[%s86 + $0x38] sm:$0xf]
    %v1218 = vld [vmem:[%s86 + $0x50] sm:$0xf]
    %v1219 = vld [vmem:[%s86 + $0x58] sm:$0xf]
    %v1220 = vld [vmem:[%s86 + $0x60] sm:$0xf]
    %v1221 = vld [vmem:[%s86 + $0x68] sm:$0xf]
    %v1222 = vld [vmem:[%s86 + $0x70] sm:$0xf]
    %v1223 = vld [vmem:[%s86 + $0x78] sm:$0xf]
    %v1224 = vld [vmem:[%s86 + $0x80] sm:$0xf]
    %v1225 = vld [vmem:[%s86 + $0x88] sm:$0xf]
    %s1226 = scalar_lea.vmem [#allocation6], 48
    %v1227 = vld [vmem:[%s1226] sm:$0xf]
    %v1228 = vld [vmem:[%s1226 + $0x4] sm:$0xf]
    %v1229 = vld [vmem:[%s1226 + $0x8] sm:$0xf]
    %v1230 = vld [vmem:[%s1226 + $0xc] sm:$0xf]
    %v1247 = vunpack.c.l.b16 %v1210
    %v1248 = vunpack.c.l.b16 %v1211
    %v1249 = vunpack.c.l.b16 %v1212
    %v1250 = vunpack.c.l.b16 %v1213
    %v1251 = vunpack.c.l.b16 %v1214
    %v1252 = vunpack.c.l.b16 %v1215
    %v1253 = vunpack.c.l.b16 %v1216
    %v1254 = vunpack.c.l.b16 %v1217
    %v1255 = vunpack.c.l.b16 %v1218
    %v1256 = vunpack.c.l.b16 %v1219
    %v1257 = vunpack.c.l.b16 %v1220
    %v1258 = vunpack.c.l.b16 %v1221
    %v1259 = vunpack.c.l.b16 %v1222
    %v1260 = vunpack.c.l.b16 %v1223
    %v1261 = vunpack.c.l.b16 %v1224
    %v1262 = vunpack.c.l.b16 %v1225
    %v1263 = vpack.c.b16 %v1248, %v1247
    %v1264 = vpack.c.b16 %v1250, %v1249
    %v1265 = vpack.c.b16 %v1252, %v1251
    %v1266 = vpack.c.b16 %v1254, %v1253
    %v1267 = vpack.c.b16 %v1256, %v1255
    %v1268 = vpack.c.b16 %v1258, %v1257
    %v1269 = vpack.c.b16 %v1260, %v1259
    %v1270 = vpack.c.b16 %v1262, %v1261
    %v1275 = vunpack.c.l.b16 %v1227
    %v1276 = vunpack.c.l.b16 %v1228
    %v1277 = vunpack.c.l.b16 %v1229
    %v1278 = vunpack.c.l.b16 %v1230
    %v1279 = vpack.c.b16 %v1276, %v1275
    %v1280 = vpack.c.b16 %v1278, %v1277
    %v1284 = vsel %vm766, %v1263, 0
    %v1287 = vsel %vm766, %v1264, 0
    %v1290 = vsel %vm766, %v1265, 0
    %v1293 = vsel %vm766, %v1266, 0
    %v1296 = vsel %vm766, %v1267, 0
    %v1299 = vsel %vm766, %v1268, 0
    %v1302 = vsel %vm766, %v1269, 0
    %v1305 = vsel %vm766, %v1270, 0
    %1307 = vmatpush.bf16.msra.mxu0 0
    %1308 = vmatpush.bf16.msra.mxu0 0
    %1309 = vmatpush.bf16.msra.mxu0 0
    %1310 = vmatpush.bf16.msra.mxu0 0
    %1311 = vmatpush.bf16.msra.mxu0 0
    %1312 = vmatpush.bf16.msra.mxu0 0
    %1313 = vmatpush.bf16.msra.mxu0 %v1280
    %1314 = vmatpush.bf16.msra.mxu0 %v1279
    %1315 = vmatmul.bf16.gmra.mxu0 %v1284
    %v1316 = vpop.f32.mrf.mxu0
    %v1317 = vadd.f32 0.0, %v1316
    %v1318 = vpop.f32.mrf.mxu0
    %v1319 = vadd.f32 0.0, %v1318
    %1320 = vmatmul.bf16.gmra.mxu0 %v1287
    %v1321 = vpop.f32.mrf.mxu0
    %v1322 = vadd.f32 0.0, %v1321
    %v1323 = vpop.f32.mrf.mxu0
    %v1324 = vadd.f32 0.0, %v1323
    %1325 = vmatmul.bf16.gmra.mxu0 %v1290
    %v1326 = vpop.f32.mrf.mxu0
    %v1327 = vadd.f32 0.0, %v1326
    %v1328 = vpop.f32.mrf.mxu0
    %v1329 = vadd.f32 0.0, %v1328
    %1330 = vmatmul.bf16.gmra.mxu0 %v1293
    %v1331 = vpop.f32.mrf.mxu0
    %v1332 = vadd.f32 0.0, %v1331
    %v1333 = vpop.f32.mrf.mxu0
    %v1334 = vadd.f32 0.0, %v1333
    %1335 = vmatmul.bf16.gmra.mxu0 %v1296
    %v1336 = vpop.f32.mrf.mxu0
    %v1337 = vadd.f32 0.0, %v1336
    %v1338 = vpop.f32.mrf.mxu0
    %v1339 = vadd.f32 0.0, %v1338
    %1340 = vmatmul.bf16.gmra.mxu0 %v1299
    %v1341 = vpop.f32.mrf.mxu0
    %v1342 = vadd.f32 0.0, %v1341
    %v1343 = vpop.f32.mrf.mxu0
    %v1344 = vadd.f32 0.0, %v1343
    %1345 = vmatmul.bf16.gmra.mxu0 %v1302
    %v1346 = vpop.f32.mrf.mxu0
    %v1347 = vadd.f32 0.0, %v1346
    %v1348 = vpop.f32.mrf.mxu0
    %v1349 = vadd.f32 0.0, %v1348
    %1350 = vmatmul.bf16.gmra.mxu0 %v1305
    %v1351 = vpop.f32.mrf.mxu0
    %v1352 = vadd.f32 0.0, %v1351
    %v1353 = vpop.f32.mrf.mxu0
    %v1354 = vadd.f32 0.0, %v1353
    %1355 = vdwg.mxu0
    %v1356 = vadd.f32 %v1194, %v1317
    %v1357 = vadd.f32 %v1195, %v1319
    %v1358 = vadd.f32 %v1196, %v1322
    %v1359 = vadd.f32 %v1197, %v1324
    %v1360 = vadd.f32 %v1198, %v1327
    %v1361 = vadd.f32 %v1199, %v1329
    %v1362 = vadd.f32 %v1200, %v1332
    %v1363 = vadd.f32 %v1201, %v1334
    %v1364 = vadd.f32 %v1202, %v1337
    %v1365 = vadd.f32 %v1203, %v1339
    %v1366 = vadd.f32 %v1204, %v1342
    %v1367 = vadd.f32 %v1205, %v1344
    %v1368 = vadd.f32 %v1206, %v1347
    %v1369 = vadd.f32 %v1207, %v1349
    %v1370 = vadd.f32 %v1208, %v1352
    %v1371 = vadd.f32 %v1209, %v1354
    %v1372 = vld [vmem:[%s86] sm:$0xf]
    %v1373 = vld [vmem:[%s86 + $0x4] sm:$0x1]
    %v1374 = vld [vmem:[%s86 + $0x8] sm:$0xf]
    %v1375 = vld [vmem:[%s86 + $0xc] sm:$0x1]
    %v1376 = vld [vmem:[%s86 + $0x10] sm:$0xf]
    %v1377 = vld [vmem:[%s86 + $0x14] sm:$0x1]
    %v1378 = vld [vmem:[%s86 + $0x18] sm:$0xf]
    %v1379 = vld [vmem:[%s86 + $0x1c] sm:$0x1]
    %v1380 = vld [vmem:[%s86 + $0x20] sm:$0xf]
    %v1381 = vld [vmem:[%s86 + $0x24] sm:$0x1]
    %v1382 = vld [vmem:[%s86 + $0x28] sm:$0xf]
    %v1383 = vld [vmem:[%s86 + $0x2c] sm:$0x1]
    %v1384 = vld [vmem:[%s86 + $0x30] sm:$0xf]
    %v1385 = vld [vmem:[%s86 + $0x34] sm:$0x1]
    %v1386 = vld [vmem:[%s86 + $0x38] sm:$0xf]
    %v1387 = vld [vmem:[%s86 + $0x3c] sm:$0x1]
    %v1388 = vld [vmem:[%s86 + $0x50] sm:$0xf]
    %v1389 = vld [vmem:[%s86 + $0x54] sm:$0x1]
    %v1390 = vld [vmem:[%s86 + $0x58] sm:$0xf]
    %v1391 = vld [vmem:[%s86 + $0x5c] sm:$0x1]
    %v1392 = vld [vmem:[%s86 + $0x60] sm:$0xf]
    %v1393 = vld [vmem:[%s86 + $0x64] sm:$0x1]
    %v1394 = vld [vmem:[%s86 + $0x68] sm:$0xf]
    %v1395 = vld [vmem:[%s86 + $0x6c] sm:$0x1]
    %v1396 = vld [vmem:[%s86 + $0x70] sm:$0xf]
    %v1397 = vld [vmem:[%s86 + $0x74] sm:$0x1]
    %v1398 = vld [vmem:[%s86 + $0x78] sm:$0xf]
    %v1399 = vld [vmem:[%s86 + $0x7c] sm:$0x1]
    %v1400 = vld [vmem:[%s86 + $0x80] sm:$0xf]
    %v1401 = vld [vmem:[%s86 + $0x84] sm:$0x1]
    %v1402 = vld [vmem:[%s86 + $0x88] sm:$0xf]
    %v1403 = vld [vmem:[%s86 + $0x8c] sm:$0x1]
    %v1405 = vshrl.u32 %v1372, 16
    %v1407 = vrot.slane %v1405, 4
    %v1408 = vshll.u32 %v1372, 16
    %v1410 = vrot.slane %v1408, 5
    %v1411 = vor.u32 %v1407, %v1410
    %v1412 = vrot.slane %v1411, 4
    %v1414 = vshll.u32 %v1373, 16
    %v1416 = vrot.slane %v1414, 5
    %v1417 = vsel %vm500, %v1412, %v1416
    %v1419 = vshrl.u32 %v1374, 16
    %v1421 = vrot.slane %v1419, 4
    %v1422 = vshll.u32 %v1374, 16
    %v1424 = vrot.slane %v1422, 5
    %v1425 = vor.u32 %v1421, %v1424
    %v1426 = vrot.slane %v1425, 4
    %v1428 = vshll.u32 %v1375, 16
    %v1430 = vrot.slane %v1428, 5
    %v1431 = vsel %vm500, %v1426, %v1430
    %v1433 = vshrl.u32 %v1376, 16
    %v1435 = vrot.slane %v1433, 4
    %v1436 = vshll.u32 %v1376, 16
    %v1438 = vrot.slane %v1436, 5
    %v1439 = vor.u32 %v1435, %v1438
    %v1440 = vrot.slane %v1439, 4
    %v1442 = vshll.u32 %v1377, 16
    %v1444 = vrot.slane %v1442, 5
    %v1445 = vsel %vm500, %v1440, %v1444
    %v1447 = vshrl.u32 %v1378, 16
    %v1449 = vrot.slane %v1447, 4
    %v1450 = vshll.u32 %v1378, 16
    %v1452 = vrot.slane %v1450, 5
    %v1453 = vor.u32 %v1449, %v1452
    %v1454 = vrot.slane %v1453, 4
    %v1456 = vshll.u32 %v1379, 16
    %v1458 = vrot.slane %v1456, 5
    %v1459 = vsel %vm500, %v1454, %v1458
    %v1461 = vshrl.u32 %v1380, 16
    %v1463 = vrot.slane %v1461, 4
    %v1464 = vshll.u32 %v1380, 16
    %v1466 = vrot.slane %v1464, 5
    %v1467 = vor.u32 %v1463, %v1466
    %v1468 = vrot.slane %v1467, 4
    %v1470 = vshll.u32 %v1381, 16
    %v1472 = vrot.slane %v1470, 5
    %v1473 = vsel %vm500, %v1468, %v1472
    %v1475 = vshrl.u32 %v1382, 16
    %v1477 = vrot.slane %v1475, 4
    %v1478 = vshll.u32 %v1382, 16
    %v1480 = vrot.slane %v1478, 5
    %v1481 = vor.u32 %v1477, %v1480
    %v1482 = vrot.slane %v1481, 4
    %v1484 = vshll.u32 %v1383, 16
    %v1486 = vrot.slane %v1484, 5
    %v1487 = vsel %vm500, %v1482, %v1486
    %v1489 = vshrl.u32 %v1384, 16
    %v1491 = vrot.slane %v1489, 4
    %v1492 = vshll.u32 %v1384, 16
    %v1494 = vrot.slane %v1492, 5
    %v1495 = vor.u32 %v1491, %v1494
    %v1496 = vrot.slane %v1495, 4
    %v1498 = vshll.u32 %v1385, 16
    %v1500 = vrot.slane %v1498, 5
    %v1501 = vsel %vm500, %v1496, %v1500
    %v1503 = vshrl.u32 %v1386, 16
    %v1505 = vrot.slane %v1503, 4
    %v1506 = vshll.u32 %v1386, 16
    %v1508 = vrot.slane %v1506, 5
    %v1509 = vor.u32 %v1505, %v1508
    %v1510 = vrot.slane %v1509, 4
    %v1512 = vshll.u32 %v1387, 16
    %v1514 = vrot.slane %v1512, 5
    %v1515 = vsel %vm500, %v1510, %v1514
    %v1517 = vshrl.u32 %v1388, 16
    %v1519 = vrot.slane %v1517, 4
    %v1520 = vshll.u32 %v1388, 16
    %v1522 = vrot.slane %v1520, 5
    %v1523 = vor.u32 %v1519, %v1522
    %v1524 = vrot.slane %v1523, 4
    %v1526 = vshll.u32 %v1389, 16
    %v1528 = vrot.slane %v1526, 5
    %v1529 = vsel %vm500, %v1524, %v1528
    %v1531 = vshrl.u32 %v1390, 16
    %v1533 = vrot.slane %v1531, 4
    %v1534 = vshll.u32 %v1390, 16
    %v1536 = vrot.slane %v1534, 5
    %v1537 = vor.u32 %v1533, %v1536
    %v1538 = vrot.slane %v1537, 4
    %v1540 = vshll.u32 %v1391, 16
    %v1542 = vrot.slane %v1540, 5
    %v1543 = vsel %vm500, %v1538, %v1542
    %v1545 = vshrl.u32 %v1392, 16
    %v1547 = vrot.slane %v1545, 4
    %v1548 = vshll.u32 %v1392, 16
    %v1550 = vrot.slane %v1548, 5
    %v1551 = vor.u32 %v1547, %v1550
    %v1552 = vrot.slane %v1551, 4
    %v1554 = vshll.u32 %v1393, 16
    %v1556 = vrot.slane %v1554, 5
    %v1557 = vsel %vm500, %v1552, %v1556
    %v1559 = vshrl.u32 %v1394, 16
    %v1561 = vrot.slane %v1559, 4
    %v1562 = vshll.u32 %v1394, 16
    %v1564 = vrot.slane %v1562, 5
    %v1565 = vor.u32 %v1561, %v1564
    %v1566 = vrot.slane %v1565, 4
    %v1568 = vshll.u32 %v1395, 16
    %v1570 = vrot.slane %v1568, 5
    %v1571 = vsel %vm500, %v1566, %v1570
    %v1573 = vshrl.u32 %v1396, 16
    %v1575 = vrot.slane %v1573, 4
    %v1576 = vshll.u32 %v1396, 16
    %v1578 = vrot.slane %v1576, 5
    %v1579 = vor.u32 %v1575, %v1578
    %v1580 = vrot.slane %v1579, 4
    %v1582 = vshll.u32 %v1397, 16
    %v1584 = vrot.slane %v1582, 5
    %v1585 = vsel %vm500, %v1580, %v1584
    %v1587 = vshrl.u32 %v1398, 16
    %v1589 = vrot.slane %v1587, 4
    %v1590 = vshll.u32 %v1398, 16
    %v1592 = vrot.slane %v1590, 5
    %v1593 = vor.u32 %v1589, %v1592
    %v1594 = vrot.slane %v1593, 4
    %v1596 = vshll.u32 %v1399, 16
    %v1598 = vrot.slane %v1596, 5
    %v1599 = vsel %vm500, %v1594, %v1598
    %v1601 = vshrl.u32 %v1400, 16
    %v1603 = vrot.slane %v1601, 4
    %v1604 = vshll.u32 %v1400, 16
    %v1606 = vrot.slane %v1604, 5
    %v1607 = vor.u32 %v1603, %v1606
    %v1608 = vrot.slane %v1607, 4
    %v1610 = vshll.u32 %v1401, 16
    %v1612 = vrot.slane %v1610, 5
    %v1613 = vsel %vm500, %v1608, %v1612
    %v1615 = vshrl.u32 %v1402, 16
    %v1617 = vrot.slane %v1615, 4
    %v1618 = vshll.u32 %v1402, 16
    %v1620 = vrot.slane %v1618, 5
    %v1621 = vor.u32 %v1617, %v1620
    %v1622 = vrot.slane %v1621, 4
    %v1624 = vshll.u32 %v1403, 16
    %v1626 = vrot.slane %v1624, 5
    %v1627 = vsel %vm500, %v1622, %v1626
    %s1628 = scalar_lea.vmem [#allocation6], 64
    %v1629 = vld [vmem:[%s1628] sm:$0xf]
    %v1630 = vld [vmem:[%s1628 + $0x4] sm:$0xf]
    %v1631 = vld [vmem:[%s1628 + $0x8] sm:$0xf]
    %v1632 = vld [vmem:[%s1628 + $0xc] sm:$0xf]
    %v1633 = vunpack.c.l.b16 %v1417
    %v1634 = vunpack.c.l.b16 %v1431
    %v1635 = vunpack.c.l.b16 %v1445
    %v1636 = vunpack.c.l.b16 %v1459
    %v1637 = vunpack.c.l.b16 %v1473
    %v1638 = vunpack.c.l.b16 %v1487
    %v1639 = vunpack.c.l.b16 %v1501
    %v1640 = vunpack.c.l.b16 %v1515
    %v1641 = vunpack.c.l.b16 %v1529
    %v1642 = vunpack.c.l.b16 %v1543
    %v1643 = vunpack.c.l.b16 %v1557
    %v1644 = vunpack.c.l.b16 %v1571
    %v1645 = vunpack.c.l.b16 %v1585
    %v1646 = vunpack.c.l.b16 %v1599
    %v1647 = vunpack.c.l.b16 %v1613
    %v1648 = vunpack.c.l.b16 %v1627
    %v1649 = vpack.c.b16 %v1634, %v1633
    %v1650 = vpack.c.b16 %v1636, %v1635
    %v1651 = vpack.c.b16 %v1638, %v1637
    %v1652 = vpack.c.b16 %v1640, %v1639
    %v1653 = vpack.c.b16 %v1642, %v1641
    %v1654 = vpack.c.b16 %v1644, %v1643
    %v1655 = vpack.c.b16 %v1646, %v1645
    %v1656 = vpack.c.b16 %v1648, %v1647
    %v1661 = vunpack.c.l.b16 %v1629
    %v1662 = vunpack.c.l.b16 %v1630
    %v1663 = vunpack.c.l.b16 %v1631
    %v1664 = vunpack.c.l.b16 %v1632
    %v1665 = vpack.c.b16 %v1662, %v1661
    %v1666 = vpack.c.b16 %v1664, %v1663
    %v1670 = vsel %vm766, %v1649, 0
    %v1673 = vsel %vm766, %v1650, 0
    %v1676 = vsel %vm766, %v1651, 0
    %v1679 = vsel %vm766, %v1652, 0
    %v1682 = vsel %vm766, %v1653, 0
    %v1685 = vsel %vm766, %v1654, 0
    %v1688 = vsel %vm766, %v1655, 0
    %v1691 = vsel %vm766, %v1656, 0
    %1693 = vmatpush.bf16.msra.mxu0 0
    %1694 = vmatpush.bf16.msra.mxu0 0
    %1695 = vmatpush.bf16.msra.mxu0 0
    %1696 = vmatpush.bf16.msra.mxu0 0
    %1697 = vmatpush.bf16.msra.mxu0 0
    %1698 = vmatpush.bf16.msra.mxu0 0
    %1699 = vmatpush.bf16.msra.mxu0 %v1666
    %1700 = vmatpush.bf16.msra.mxu0 %v1665
    %1701 = vmatmul.bf16.gmra.mxu0 %v1670
    %v1702 = vpop.f32.mrf.mxu0
    %v1703 = vadd.f32 0.0, %v1702
    %v1704 = vpop.f32.mrf.mxu0
    %v1705 = vadd.f32 0.0, %v1704
    %1706 = vmatmul.bf16.gmra.mxu0 %v1673
    %v1707 = vpop.f32.mrf.mxu0
    %v1708 = vadd.f32 0.0, %v1707
    %v1709 = vpop.f32.mrf.mxu0
    %v1710 = vadd.f32 0.0, %v1709
    %1711 = vmatmul.bf16.gmra.mxu0 %v1676
    %v1712 = vpop.f32.mrf.mxu0
    %v1713 = vadd.f32 0.0, %v1712
    %v1714 = vpop.f32.mrf.mxu0
    %v1715 = vadd.f32 0.0, %v1714
    %1716 = vmatmul.bf16.gmra.mxu0 %v1679
    %v1717 = vpop.f32.mrf.mxu0
    %v1718 = vadd.f32 0.0, %v1717
    %v1719 = vpop.f32.mrf.mxu0
    %v1720 = vadd.f32 0.0, %v1719
    %1721 = vmatmul.bf16.gmra.mxu0 %v1682
    %v1722 = vpop.f32.mrf.mxu0
    %v1723 = vadd.f32 0.0, %v1722
    %v1724 = vpop.f32.mrf.mxu0
    %v1725 = vadd.f32 0.0, %v1724
    %1726 = vmatmul.bf16.gmra.mxu0 %v1685
    %v1727 = vpop.f32.mrf.mxu0
    %v1728 = vadd.f32 0.0, %v1727
    %v1729 = vpop.f32.mrf.mxu0
    %v1730 = vadd.f32 0.0, %v1729
    %1731 = vmatmul.bf16.gmra.mxu0 %v1688
    %v1732 = vpop.f32.mrf.mxu0
    %v1733 = vadd.f32 0.0, %v1732
    %v1734 = vpop.f32.mrf.mxu0
    %v1735 = vadd.f32 0.0, %v1734
    %1736 = vmatmul.bf16.gmra.mxu0 %v1691
    %v1737 = vpop.f32.mrf.mxu0
    %v1738 = vadd.f32 0.0, %v1737
    %v1739 = vpop.f32.mrf.mxu0
    %v1740 = vadd.f32 0.0, %v1739
    %1741 = vdwg.mxu0
    %v1742 = vadd.f32 %v1356, %v1703
    %v1743 = vadd.f32 %v1357, %v1705
    %v1744 = vadd.f32 %v1358, %v1708
    %v1745 = vadd.f32 %v1359, %v1710
    %v1746 = vadd.f32 %v1360, %v1713
    %v1747 = vadd.f32 %v1361, %v1715
    %v1748 = vadd.f32 %v1362, %v1718
    %v1749 = vadd.f32 %v1363, %v1720
    %v1750 = vadd.f32 %v1364, %v1723
    %v1751 = vadd.f32 %v1365, %v1725
    %v1752 = vadd.f32 %v1366, %v1728
    %v1753 = vadd.f32 %v1367, %v1730
    %v1754 = vadd.f32 %v1368, %v1733
    %v1755 = vadd.f32 %v1369, %v1735
    %v1756 = vadd.f32 %v1370, %v1738
    %v1757 = vadd.f32 %v1371, %v1740
    %v1758 = vld [vmem:[%s86] sm:$0xe]
    %v1759 = vld [vmem:[%s86 + $0x8] sm:$0xe]
    %v1760 = vld [vmem:[%s86 + $0x10] sm:$0xe]
    %v1761 = vld [vmem:[%s86 + $0x18] sm:$0xe]
    %v1762 = vld [vmem:[%s86 + $0x20] sm:$0xe]
    %v1763 = vld [vmem:[%s86 + $0x28] sm:$0xe]
    %v1764 = vld [vmem:[%s86 + $0x30] sm:$0xe]
    %v1765 = vld [vmem:[%s86 + $0x38] sm:$0xe]
    %v1766 = vld [vmem:[%s86 + $0x50] sm:$0xe]
    %v1767 = vld [vmem:[%s86 + $0x58] sm:$0xe]
    %v1768 = vld [vmem:[%s86 + $0x60] sm:$0xe]
    %v1769 = vld [vmem:[%s86 + $0x68] sm:$0xe]
    %v1770 = vld [vmem:[%s86 + $0x70] sm:$0xe]
    %v1771 = vld [vmem:[%s86 + $0x78] sm:$0xe]
    %v1772 = vld [vmem:[%s86 + $0x80] sm:$0xe]
    %v1773 = vld [vmem:[%s86 + $0x88] sm:$0xe]
    %v1806 = vrot.slane %v1758, 5
    %v1807 = vrot.slane %v1806, 4
    %v1808 = vrot.slane %v1373, 5
    %v1809 = vsel %vm1015, %v1807, %v1808
    %v1810 = vrot.slane %v1759, 5
    %v1811 = vrot.slane %v1810, 4
    %v1812 = vrot.slane %v1375, 5
    %v1813 = vsel %vm1015, %v1811, %v1812
    %v1814 = vrot.slane %v1760, 5
    %v1815 = vrot.slane %v1814, 4
    %v1816 = vrot.slane %v1377, 5
    %v1817 = vsel %vm1015, %v1815, %v1816
    %v1818 = vrot.slane %v1761, 5
    %v1819 = vrot.slane %v1818, 4
    %v1820 = vrot.slane %v1379, 5
    %v1821 = vsel %vm1015, %v1819, %v1820
    %v1822 = vrot.slane %v1762, 5
    %v1823 = vrot.slane %v1822, 4
    %v1824 = vrot.slane %v1381, 5
    %v1825 = vsel %vm1015, %v1823, %v1824
    %v1826 = vrot.slane %v1763, 5
    %v1827 = vrot.slane %v1826, 4
    %v1828 = vrot.slane %v1383, 5
    %v1829 = vsel %vm1015, %v1827, %v1828
    %v1830 = vrot.slane %v1764, 5
    %v1831 = vrot.slane %v1830, 4
    %v1832 = vrot.slane %v1385, 5
    %v1833 = vsel %vm1015, %v1831, %v1832
    %v1834 = vrot.slane %v1765, 5
    %v1835 = vrot.slane %v1834, 4
    %v1836 = vrot.slane %v1387, 5
    %v1837 = vsel %vm1015, %v1835, %v1836
    %v1838 = vrot.slane %v1766, 5
    %v1839 = vrot.slane %v1838, 4
    %v1840 = vrot.slane %v1389, 5
    %v1841 = vsel %vm1015, %v1839, %v1840
    %v1842 = vrot.slane %v1767, 5
    %v1843 = vrot.slane %v1842, 4
    %v1844 = vrot.slane %v1391, 5
    %v1845 = vsel %vm1015, %v1843, %v1844
    %v1846 = vrot.slane %v1768, 5
    %v1847 = vrot.slane %v1846, 4
    %v1848 = vrot.slane %v1393, 5
    %v1849 = vsel %vm1015, %v1847, %v1848
    %v1850 = vrot.slane %v1769, 5
    %v1851 = vrot.slane %v1850, 4
    %v1852 = vrot.slane %v1395, 5
    %v1853 = vsel %vm1015, %v1851, %v1852
    %v1854 = vrot.slane %v1770, 5
    %v1855 = vrot.slane %v1854, 4
    %v1856 = vrot.slane %v1397, 5
    %v1857 = vsel %vm1015, %v1855, %v1856
    %v1858 = vrot.slane %v1771, 5
    %v1859 = vrot.slane %v1858, 4
    %v1860 = vrot.slane %v1399, 5
    %v1861 = vsel %vm1015, %v1859, %v1860
    %v1862 = vrot.slane %v1772, 5
    %v1863 = vrot.slane %v1862, 4
    %v1864 = vrot.slane %v1401, 5
    %v1865 = vsel %vm1015, %v1863, %v1864
    %v1866 = vrot.slane %v1773, 5
    %v1867 = vrot.slane %v1866, 4
    %v1868 = vrot.slane %v1403, 5
    %v1869 = vsel %vm1015, %v1867, %v1868
    %s1870 = scalar_lea.vmem [#allocation6], 80
    %v1871 = vld [vmem:[%s1870] sm:$0xf]
    %v1872 = vld [vmem:[%s1870 + $0x4] sm:$0xf]
    %v1873 = vld [vmem:[%s1870 + $0x8] sm:$0xf]
    %v1874 = vld [vmem:[%s1870 + $0xc] sm:$0xf]
    %v1875 = vunpack.c.l.b16 %v1809
    %v1876 = vunpack.c.l.b16 %v1813
    %v1877 = vunpack.c.l.b16 %v1817
    %v1878 = vunpack.c.l.b16 %v1821
    %v1879 = vunpack.c.l.b16 %v1825
    %v1880 = vunpack.c.l.b16 %v1829
    %v1881 = vunpack.c.l.b16 %v1833
    %v1882 = vunpack.c.l.b16 %v1837
    %v1883 = vunpack.c.l.b16 %v1841
    %v1884 = vunpack.c.l.b16 %v1845
    %v1885 = vunpack.c.l.b16 %v1849
    %v1886 = vunpack.c.l.b16 %v1853
    %v1887 = vunpack.c.l.b16 %v1857
    %v1888 = vunpack.c.l.b16 %v1861
    %v1889 = vunpack.c.l.b16 %v1865
    %v1890 = vunpack.c.l.b16 %v1869
    %v1891 = vpack.c.b16 %v1876, %v1875
    %v1892 = vpack.c.b16 %v1878, %v1877
    %v1893 = vpack.c.b16 %v1880, %v1879
    %v1894 = vpack.c.b16 %v1882, %v1881
    %v1895 = vpack.c.b16 %v1884, %v1883
    %v1896 = vpack.c.b16 %v1886, %v1885
    %v1897 = vpack.c.b16 %v1888, %v1887
    %v1898 = vpack.c.b16 %v1890, %v1889
    %v1903 = vunpack.c.l.b16 %v1871
    %v1904 = vunpack.c.l.b16 %v1872
    %v1905 = vunpack.c.l.b16 %v1873
    %v1906 = vunpack.c.l.b16 %v1874
    %v1907 = vpack.c.b16 %v1904, %v1903
    %v1908 = vpack.c.b16 %v1906, %v1905
    %v1912 = vsel %vm766, %v1891, 0
    %v1915 = vsel %vm766, %v1892, 0
    %v1918 = vsel %vm766, %v1893, 0
    %v1921 = vsel %vm766, %v1894, 0
    %v1924 = vsel %vm766, %v1895, 0
    %v1927 = vsel %vm766, %v1896, 0
    %v1930 = vsel %vm766, %v1897, 0
    %v1933 = vsel %vm766, %v1898, 0
    %1935 = vmatpush.bf16.msra.mxu0 0
    %1936 = vmatpush.bf16.msra.mxu0 0
    %1937 = vmatpush.bf16.msra.mxu0 0
    %1938 = vmatpush.bf16.msra.mxu0 0
    %1939 = vmatpush.bf16.msra.mxu0 0
    %1940 = vmatpush.bf16.msra.mxu0 0
    %1941 = vmatpush.bf16.msra.mxu0 %v1908
    %1942 = vmatpush.bf16.msra.mxu0 %v1907
    %1943 = vmatmul.bf16.gmra.mxu0 %v1912
    %v1944 = vpop.f32.mrf.mxu0
    %v1945 = vadd.f32 0.0, %v1944
    %v1946 = vpop.f32.mrf.mxu0
    %v1947 = vadd.f32 0.0, %v1946
    %1948 = vmatmul.bf16.gmra.mxu0 %v1915
    %v1949 = vpop.f32.mrf.mxu0
    %v1950 = vadd.f32 0.0, %v1949
    %v1951 = vpop.f32.mrf.mxu0
    %v1952 = vadd.f32 0.0, %v1951
    %1953 = vmatmul.bf16.gmra.mxu0 %v1918
    %v1954 = vpop.f32.mrf.mxu0
    %v1955 = vadd.f32 0.0, %v1954
    %v1956 = vpop.f32.mrf.mxu0
    %v1957 = vadd.f32 0.0, %v1956
    %1958 = vmatmul.bf16.gmra.mxu0 %v1921
    %v1959 = vpop.f32.mrf.mxu0
    %v1960 = vadd.f32 0.0, %v1959
    %v1961 = vpop.f32.mrf.mxu0
    %v1962 = vadd.f32 0.0, %v1961
    %1963 = vmatmul.bf16.gmra.mxu0 %v1924
    %v1964 = vpop.f32.mrf.mxu0
    %v1965 = vadd.f32 0.0, %v1964
    %v1966 = vpop.f32.mrf.mxu0
    %v1967 = vadd.f32 0.0, %v1966
    %1968 = vmatmul.bf16.gmra.mxu0 %v1927
    %v1969 = vpop.f32.mrf.mxu0
    %v1970 = vadd.f32 0.0, %v1969
    %v1971 = vpop.f32.mrf.mxu0
    %v1972 = vadd.f32 0.0, %v1971
    %1973 = vmatmul.bf16.gmra.mxu0 %v1930
    %v1974 = vpop.f32.mrf.mxu0
    %v1975 = vadd.f32 0.0, %v1974
    %v1976 = vpop.f32.mrf.mxu0
    %v1977 = vadd.f32 0.0, %v1976
    %1978 = vmatmul.bf16.gmra.mxu0 %v1933
    %v1979 = vpop.f32.mrf.mxu0
    %v1980 = vadd.f32 0.0, %v1979
    %v1981 = vpop.f32.mrf.mxu0
    %v1982 = vadd.f32 0.0, %v1981
    %1983 = vdwg.mxu0
    %v1984 = vadd.f32 %v1742, %v1945
    %v1985 = vadd.f32 %v1743, %v1947
    %v1986 = vadd.f32 %v1744, %v1950
    %v1987 = vadd.f32 %v1745, %v1952
    %v1988 = vadd.f32 %v1746, %v1955
    %v1989 = vadd.f32 %v1747, %v1957
    %v1990 = vadd.f32 %v1748, %v1960
    %v1991 = vadd.f32 %v1749, %v1962
    %v1992 = vadd.f32 %v1750, %v1965
    %v1993 = vadd.f32 %v1751, %v1967
    %v1994 = vadd.f32 %v1752, %v1970
    %v1995 = vadd.f32 %v1753, %v1972
    %v1996 = vadd.f32 %v1754, %v1975
    %v1997 = vadd.f32 %v1755, %v1977
    %v1998 = vadd.f32 %v1756, %v1980
    %v1999 = vadd.f32 %v1757, %v1982
    %s2000 = scalar_lea.vmem [#allocation2], 16
    %v2001 = vld [vmem:[%s2000] sm:$0xf]
    %v2002 = vld [vmem:[%s2000 + $0x8] sm:$0xf]
    %v2003 = vld [vmem:[%s2000 + $0x10] sm:$0xf]
    %v2004 = vld [vmem:[%s2000 + $0x18] sm:$0xf]
    %v2005 = vld [vmem:[%s2000 + $0x20] sm:$0xf]
    %v2006 = vld [vmem:[%s2000 + $0x28] sm:$0xf]
    %v2007 = vld [vmem:[%s2000 + $0x30] sm:$0xf]
    %v2008 = vld [vmem:[%s2000 + $0x38] sm:$0xf]
    %v2009 = vld [vmem:[%s2000 + $0x50] sm:$0xf]
    %v2010 = vld [vmem:[%s2000 + $0x58] sm:$0xf]
    %v2011 = vld [vmem:[%s2000 + $0x60] sm:$0xf]
    %v2012 = vld [vmem:[%s2000 + $0x68] sm:$0xf]
    %v2013 = vld [vmem:[%s2000 + $0x70] sm:$0xf]
    %v2014 = vld [vmem:[%s2000 + $0x78] sm:$0xf]
    %v2015 = vld [vmem:[%s2000 + $0x80] sm:$0xf]
    %v2016 = vld [vmem:[%s2000 + $0x88] sm:$0xf]
    %s2017 = scalar_lea.vmem [#allocation6], 96
    %v2018 = vld [vmem:[%s2017] sm:$0xf]
    %v2019 = vld [vmem:[%s2017 + $0x4] sm:$0xf]
    %v2020 = vld [vmem:[%s2017 + $0x8] sm:$0xf]
    %v2021 = vld [vmem:[%s2017 + $0xc] sm:$0xf]
    %v2038 = vunpack.c.l.b16 %v2001
    %v2039 = vunpack.c.l.b16 %v2002
    %v2040 = vunpack.c.l.b16 %v2003
    %v2041 = vunpack.c.l.b16 %v2004
    %v2042 = vunpack.c.l.b16 %v2005
    %v2043 = vunpack.c.l.b16 %v2006
    %v2044 = vunpack.c.l.b16 %v2007
    %v2045 = vunpack.c.l.b16 %v2008
    %v2046 = vunpack.c.l.b16 %v2009
    %v2047 = vunpack.c.l.b16 %v2010
    %v2048 = vunpack.c.l.b16 %v2011
    %v2049 = vunpack.c.l.b16 %v2012
    %v2050 = vunpack.c.l.b16 %v2013
    %v2051 = vunpack.c.l.b16 %v2014
    %v2052 = vunpack.c.l.b16 %v2015
    %v2053 = vunpack.c.l.b16 %v2016
    %v2054 = vpack.c.b16 %v2039, %v2038
    %v2055 = vpack.c.b16 %v2041, %v2040
    %v2056 = vpack.c.b16 %v2043, %v2042
    %v2057 = vpack.c.b16 %v2045, %v2044
    %v2058 = vpack.c.b16 %v2047, %v2046
    %v2059 = vpack.c.b16 %v2049, %v2048
    %v2060 = vpack.c.b16 %v2051, %v2050
    %v2061 = vpack.c.b16 %v2053, %v2052
    %v2066 = vunpack.c.l.b16 %v2018
    %v2067 = vunpack.c.l.b16 %v2019
    %v2068 = vunpack.c.l.b16 %v2020
    %v2069 = vunpack.c.l.b16 %v2021
    %v2070 = vpack.c.b16 %v2067, %v2066
    %v2071 = vpack.c.b16 %v2069, %v2068
    %v2075 = vsel %vm766, %v2054, 0
    %v2078 = vsel %vm766, %v2055, 0
    %v2081 = vsel %vm766, %v2056, 0
    %v2084 = vsel %vm766, %v2057, 0
    %v2087 = vsel %vm766, %v2058, 0
    %v2090 = vsel %vm766, %v2059, 0
    %v2093 = vsel %vm766, %v2060, 0
    %v2096 = vsel %vm766, %v2061, 0
    %2098 = vmatpush.bf16.msra.mxu0 0
    %2099 = vmatpush.bf16.msra.mxu0 0
    %2100 = vmatpush.bf16.msra.mxu0 0
    %2101 = vmatpush.bf16.msra.mxu0 0
    %2102 = vmatpush.bf16.msra.mxu0 0
    %2103 = vmatpush.bf16.msra.mxu0 0
    %2104 = vmatpush.bf16.msra.mxu0 %v2071
    %2105 = vmatpush.bf16.msra.mxu0 %v2070
    %2106 = vmatmul.bf16.gmra.mxu0 %v2075
    %v2107 = vpop.f32.mrf.mxu0
    %v2108 = vadd.f32 0.0, %v2107
    %v2109 = vpop.f32.mrf.mxu0
    %v2110 = vadd.f32 0.0, %v2109
    %2111 = vmatmul.bf16.gmra.mxu0 %v2078
    %v2112 = vpop.f32.mrf.mxu0
    %v2113 = vadd.f32 0.0, %v2112
    %v2114 = vpop.f32.mrf.mxu0
    %v2115 = vadd.f32 0.0, %v2114
    %2116 = vmatmul.bf16.gmra.mxu0 %v2081
    %v2117 = vpop.f32.mrf.mxu0
    %v2118 = vadd.f32 0.0, %v2117
    %v2119 = vpop.f32.mrf.mxu0
    %v2120 = vadd.f32 0.0, %v2119
    %2121 = vmatmul.bf16.gmra.mxu0 %v2084
    %v2122 = vpop.f32.mrf.mxu0
    %v2123 = vadd.f32 0.0, %v2122
    %v2124 = vpop.f32.mrf.mxu0
    %v2125 = vadd.f32 0.0, %v2124
    %2126 = vmatmul.bf16.gmra.mxu0 %v2087
    %v2127 = vpop.f32.mrf.mxu0
    %v2128 = vadd.f32 0.0, %v2127
    %v2129 = vpop.f32.mrf.mxu0
    %v2130 = vadd.f32 0.0, %v2129
    %2131 = vmatmul.bf16.gmra.mxu0 %v2090
    %v2132 = vpop.f32.mrf.mxu0
    %v2133 = vadd.f32 0.0, %v2132
    %v2134 = vpop.f32.mrf.mxu0
    %v2135 = vadd.f32 0.0, %v2134
    %2136 = vmatmul.bf16.gmra.mxu0 %v2093
    %v2137 = vpop.f32.mrf.mxu0
    %v2138 = vadd.f32 0.0, %v2137
    %v2139 = vpop.f32.mrf.mxu0
    %v2140 = vadd.f32 0.0, %v2139
    %2141 = vmatmul.bf16.gmra.mxu0 %v2096
    %v2142 = vpop.f32.mrf.mxu0
    %v2143 = vadd.f32 0.0, %v2142
    %v2144 = vpop.f32.mrf.mxu0
    %v2145 = vadd.f32 0.0, %v2144
    %2146 = vdwg.mxu0
    %v2147 = vadd.f32 %v1984, %v2108
    %v2148 = vadd.f32 %v1985, %v2110
    %v2149 = vadd.f32 %v1986, %v2113
    %v2150 = vadd.f32 %v1987, %v2115
    %v2151 = vadd.f32 %v1988, %v2118
    %v2152 = vadd.f32 %v1989, %v2120
    %v2153 = vadd.f32 %v1990, %v2123
    %v2154 = vadd.f32 %v1991, %v2125
    %v2155 = vadd.f32 %v1992, %v2128
    %v2156 = vadd.f32 %v1993, %v2130
    %v2157 = vadd.f32 %v1994, %v2133
    %v2158 = vadd.f32 %v1995, %v2135
    %v2159 = vadd.f32 %v1996, %v2138
    %v2160 = vadd.f32 %v1997, %v2140
    %v2161 = vadd.f32 %v1998, %v2143
    %v2162 = vadd.f32 %v1999, %v2145
    %v2163 = vld [vmem:[%s2000] sm:$0xf]
    %v2164 = vld [vmem:[%s2000 + $0x4] sm:$0x1]
    %v2165 = vld [vmem:[%s2000 + $0x8] sm:$0xf]
    %v2166 = vld [vmem:[%s2000 + $0xc] sm:$0x1]
    %v2167 = vld [vmem:[%s2000 + $0x10] sm:$0xf]
    %v2168 = vld [vmem:[%s2000 + $0x14] sm:$0x1]
    %v2169 = vld [vmem:[%s2000 + $0x18] sm:$0xf]
    %v2170 = vld [vmem:[%s2000 + $0x1c] sm:$0x1]
    %v2171 = vld [vmem:[%s2000 + $0x20] sm:$0xf]
    %v2172 = vld [vmem:[%s2000 + $0x24] sm:$0x1]
    %v2173 = vld [vmem:[%s2000 + $0x28] sm:$0xf]
    %v2174 = vld [vmem:[%s2000 + $0x2c] sm:$0x1]
    %v2175 = vld [vmem:[%s2000 + $0x30] sm:$0xf]
    %v2176 = vld [vmem:[%s2000 + $0x34] sm:$0x1]
    %v2177 = vld [vmem:[%s2000 + $0x38] sm:$0xf]
    %v2178 = vld [vmem:[%s2000 + $0x3c] sm:$0x1]
    %v2179 = vld [vmem:[%s2000 + $0x50] sm:$0xf]
    %v2180 = vld [vmem:[%s2000 + $0x54] sm:$0x1]
    %v2181 = vld [vmem:[%s2000 + $0x58] sm:$0xf]
    %v2182 = vld [vmem:[%s2000 + $0x5c] sm:$0x1]
    %v2183 = vld [vmem:[%s2000 + $0x60] sm:$0xf]
    %v2184 = vld [vmem:[%s2000 + $0x64] sm:$0x1]
    %v2185 = vld [vmem:[%s2000 + $0x68] sm:$0xf]
    %v2186 = vld [vmem:[%s2000 + $0x6c] sm:$0x1]
    %v2187 = vld [vmem:[%s2000 + $0x70] sm:$0xf]
    %v2188 = vld [vmem:[%s2000 + $0x74] sm:$0x1]
    %v2189 = vld [vmem:[%s2000 + $0x78] sm:$0xf]
    %v2190 = vld [vmem:[%s2000 + $0x7c] sm:$0x1]
    %v2191 = vld [vmem:[%s2000 + $0x80] sm:$0xf]
    %v2192 = vld [vmem:[%s2000 + $0x84] sm:$0x1]
    %v2193 = vld [vmem:[%s2000 + $0x88] sm:$0xf]
    %v2194 = vld [vmem:[%s2000 + $0x8c] sm:$0x1]
    %v2196 = vshrl.u32 %v2163, 16
    %v2198 = vrot.slane %v2196, 4
    %v2199 = vshll.u32 %v2163, 16
    %v2201 = vrot.slane %v2199, 5
    %v2202 = vor.u32 %v2198, %v2201
    %v2203 = vrot.slane %v2202, 4
    %v2205 = vshll.u32 %v2164, 16
    %v2207 = vrot.slane %v2205, 5
    %v2208 = vsel %vm500, %v2203, %v2207
    %v2210 = vshrl.u32 %v2165, 16
    %v2212 = vrot.slane %v2210, 4
    %v2213 = vshll.u32 %v2165, 16
    %v2215 = vrot.slane %v2213, 5
    %v2216 = vor.u32 %v2212, %v2215
    %v2217 = vrot.slane %v2216, 4
    %v2219 = vshll.u32 %v2166, 16
    %v2221 = vrot.slane %v2219, 5
    %v2222 = vsel %vm500, %v2217, %v2221
    %v2224 = vshrl.u32 %v2167, 16
    %v2226 = vrot.slane %v2224, 4
    %v2227 = vshll.u32 %v2167, 16
    %v2229 = vrot.slane %v2227, 5
    %v2230 = vor.u32 %v2226, %v2229
    %v2231 = vrot.slane %v2230, 4
    %v2233 = vshll.u32 %v2168, 16
    %v2235 = vrot.slane %v2233, 5
    %v2236 = vsel %vm500, %v2231, %v2235
    %v2238 = vshrl.u32 %v2169, 16
    %v2240 = vrot.slane %v2238, 4
    %v2241 = vshll.u32 %v2169, 16
    %v2243 = vrot.slane %v2241, 5
    %v2244 = vor.u32 %v2240, %v2243
    %v2245 = vrot.slane %v2244, 4
    %v2247 = vshll.u32 %v2170, 16
    %v2249 = vrot.slane %v2247, 5
    %v2250 = vsel %vm500, %v2245, %v2249
    %v2252 = vshrl.u32 %v2171, 16
    %v2254 = vrot.slane %v2252, 4
    %v2255 = vshll.u32 %v2171, 16
    %v2257 = vrot.slane %v2255, 5
    %v2258 = vor.u32 %v2254, %v2257
    %v2259 = vrot.slane %v2258, 4
    %v2261 = vshll.u32 %v2172, 16
    %v2263 = vrot.slane %v2261, 5
    %v2264 = vsel %vm500, %v2259, %v2263
    %v2266 = vshrl.u32 %v2173, 16
    %v2268 = vrot.slane %v2266, 4
    %v2269 = vshll.u32 %v2173, 16
    %v2271 = vrot.slane %v2269, 5
    %v2272 = vor.u32 %v2268, %v2271
    %v2273 = vrot.slane %v2272, 4
    %v2275 = vshll.u32 %v2174, 16
    %v2277 = vrot.slane %v2275, 5
    %v2278 = vsel %vm500, %v2273, %v2277
    %v2280 = vshrl.u32 %v2175, 16
    %v2282 = vrot.slane %v2280, 4
    %v2283 = vshll.u32 %v2175, 16
    %v2285 = vrot.slane %v2283, 5
    %v2286 = vor.u32 %v2282, %v2285
    %v2287 = vrot.slane %v2286, 4
    %v2289 = vshll.u32 %v2176, 16
    %v2291 = vrot.slane %v2289, 5
    %v2292 = vsel %vm500, %v2287, %v2291
    %v2294 = vshrl.u32 %v2177, 16
    %v2296 = vrot.slane %v2294, 4
    %v2297 = vshll.u32 %v2177, 16
    %v2299 = vrot.slane %v2297, 5
    %v2300 = vor.u32 %v2296, %v2299
    %v2301 = vrot.slane %v2300, 4
    %v2303 = vshll.u32 %v2178, 16
    %v2305 = vrot.slane %v2303, 5
    %v2306 = vsel %vm500, %v2301, %v2305
    %v2308 = vshrl.u32 %v2179, 16
    %v2310 = vrot.slane %v2308, 4
    %v2311 = vshll.u32 %v2179, 16
    %v2313 = vrot.slane %v2311, 5
    %v2314 = vor.u32 %v2310, %v2313
    %v2315 = vrot.slane %v2314, 4
    %v2317 = vshll.u32 %v2180, 16
    %v2319 = vrot.slane %v2317, 5
    %v2320 = vsel %vm500, %v2315, %v2319
    %v2322 = vshrl.u32 %v2181, 16
    %v2324 = vrot.slane %v2322, 4
    %v2325 = vshll.u32 %v2181, 16
    %v2327 = vrot.slane %v2325, 5
    %v2328 = vor.u32 %v2324, %v2327
    %v2329 = vrot.slane %v2328, 4
    %v2331 = vshll.u32 %v2182, 16
    %v2333 = vrot.slane %v2331, 5
    %v2334 = vsel %vm500, %v2329, %v2333
    %v2336 = vshrl.u32 %v2183, 16
    %v2338 = vrot.slane %v2336, 4
    %v2339 = vshll.u32 %v2183, 16
    %v2341 = vrot.slane %v2339, 5
    %v2342 = vor.u32 %v2338, %v2341
    %v2343 = vrot.slane %v2342, 4
    %v2345 = vshll.u32 %v2184, 16
    %v2347 = vrot.slane %v2345, 5
    %v2348 = vsel %vm500, %v2343, %v2347
    %v2350 = vshrl.u32 %v2185, 16
    %v2352 = vrot.slane %v2350, 4
    %v2353 = vshll.u32 %v2185, 16
    %v2355 = vrot.slane %v2353, 5
    %v2356 = vor.u32 %v2352, %v2355
    %v2357 = vrot.slane %v2356, 4
    %v2359 = vshll.u32 %v2186, 16
    %v2361 = vrot.slane %v2359, 5
    %v2362 = vsel %vm500, %v2357, %v2361
    %v2364 = vshrl.u32 %v2187, 16
    %v2366 = vrot.slane %v2364, 4
    %v2367 = vshll.u32 %v2187, 16
    %v2369 = vrot.slane %v2367, 5
    %v2370 = vor.u32 %v2366, %v2369
    %v2371 = vrot.slane %v2370, 4
    %v2373 = vshll.u32 %v2188, 16
    %v2375 = vrot.slane %v2373, 5
    %v2376 = vsel %vm500, %v2371, %v2375
    %v2378 = vshrl.u32 %v2189, 16
    %v2380 = vrot.slane %v2378, 4
    %v2381 = vshll.u32 %v2189, 16
    %v2383 = vrot.slane %v2381, 5
    %v2384 = vor.u32 %v2380, %v2383
    %v2385 = vrot.slane %v2384, 4
    %v2387 = vshll.u32 %v2190, 16
    %v2389 = vrot.slane %v2387, 5
    %v2390 = vsel %vm500, %v2385, %v2389
    %v2392 = vshrl.u32 %v2191, 16
    %v2394 = vrot.slane %v2392, 4
    %v2395 = vshll.u32 %v2191, 16
    %v2397 = vrot.slane %v2395, 5
    %v2398 = vor.u32 %v2394, %v2397
    %v2399 = vrot.slane %v2398, 4
    %v2401 = vshll.u32 %v2192, 16
    %v2403 = vrot.slane %v2401, 5
    %v2404 = vsel %vm500, %v2399, %v2403
    %v2406 = vshrl.u32 %v2193, 16
    %v2408 = vrot.slane %v2406, 4
    %v2409 = vshll.u32 %v2193, 16
    %v2411 = vrot.slane %v2409, 5
    %v2412 = vor.u32 %v2408, %v2411
    %v2413 = vrot.slane %v2412, 4
    %v2415 = vshll.u32 %v2194, 16
    %v2417 = vrot.slane %v2415, 5
    %v2418 = vsel %vm500, %v2413, %v2417
    %s2419 = scalar_lea.vmem [#allocation6], 112
    %v2420 = vld [vmem:[%s2419] sm:$0xf]
    %v2421 = vld [vmem:[%s2419 + $0x4] sm:$0xf]
    %v2422 = vld [vmem:[%s2419 + $0x8] sm:$0xf]
    %v2423 = vld [vmem:[%s2419 + $0xc] sm:$0xf]
    %v2424 = vunpack.c.l.b16 %v2208
    %v2425 = vunpack.c.l.b16 %v2222
    %v2426 = vunpack.c.l.b16 %v2236
    %v2427 = vunpack.c.l.b16 %v2250
    %v2428 = vunpack.c.l.b16 %v2264
    %v2429 = vunpack.c.l.b16 %v2278
    %v2430 = vunpack.c.l.b16 %v2292
    %v2431 = vunpack.c.l.b16 %v2306
    %v2432 = vunpack.c.l.b16 %v2320
    %v2433 = vunpack.c.l.b16 %v2334
    %v2434 = vunpack.c.l.b16 %v2348
    %v2435 = vunpack.c.l.b16 %v2362
    %v2436 = vunpack.c.l.b16 %v2376
    %v2437 = vunpack.c.l.b16 %v2390
    %v2438 = vunpack.c.l.b16 %v2404
    %v2439 = vunpack.c.l.b16 %v2418
    %v2440 = vpack.c.b16 %v2425, %v2424
    %v2441 = vpack.c.b16 %v2427, %v2426
    %v2442 = vpack.c.b16 %v2429, %v2428
    %v2443 = vpack.c.b16 %v2431, %v2430
    %v2444 = vpack.c.b16 %v2433, %v2432
    %v2445 = vpack.c.b16 %v2435, %v2434
    %v2446 = vpack.c.b16 %v2437, %v2436
    %v2447 = vpack.c.b16 %v2439, %v2438
    %v2452 = vunpack.c.l.b16 %v2420
    %v2453 = vunpack.c.l.b16 %v2421
    %v2454 = vunpack.c.l.b16 %v2422
    %v2455 = vunpack.c.l.b16 %v2423
    %v2456 = vpack.c.b16 %v2453, %v2452
    %v2457 = vpack.c.b16 %v2455, %v2454
    %v2461 = vsel %vm766, %v2440, 0
    %v2464 = vsel %vm766, %v2441, 0
    %v2467 = vsel %vm766, %v2442, 0
    %v2470 = vsel %vm766, %v2443, 0
    %v2473 = vsel %vm766, %v2444, 0
    %v2476 = vsel %vm766, %v2445, 0
    %v2479 = vsel %vm766, %v2446, 0
    %v2482 = vsel %vm766, %v2447, 0
    %2484 = vmatpush.bf16.msra.mxu0 0
    %2485 = vmatpush.bf16.msra.mxu0 0
    %2486 = vmatpush.bf16.msra.mxu0 0
    %2487 = vmatpush.bf16.msra.mxu0 0
    %2488 = vmatpush.bf16.msra.mxu0 0
    %2489 = vmatpush.bf16.msra.mxu0 0
    %2490 = vmatpush.bf16.msra.mxu0 %v2457
    %2491 = vmatpush.bf16.msra.mxu0 %v2456
    %2492 = vmatmul.bf16.gmra.mxu0 %v2461
    %v2493 = vpop.f32.mrf.mxu0
    %v2494 = vadd.f32 0.0, %v2493
    %v2495 = vpop.f32.mrf.mxu0
    %v2496 = vadd.f32 0.0, %v2495
    %2497 = vmatmul.bf16.gmra.mxu0 %v2464
    %v2498 = vpop.f32.mrf.mxu0
    %v2499 = vadd.f32 0.0, %v2498
    %v2500 = vpop.f32.mrf.mxu0
    %v2501 = vadd.f32 0.0, %v2500
    %2502 = vmatmul.bf16.gmra.mxu0 %v2467
    %v2503 = vpop.f32.mrf.mxu0
    %v2504 = vadd.f32 0.0, %v2503
    %v2505 = vpop.f32.mrf.mxu0
    %v2506 = vadd.f32 0.0, %v2505
    %2507 = vmatmul.bf16.gmra.mxu0 %v2470
    %v2508 = vpop.f32.mrf.mxu0
    %v2509 = vadd.f32 0.0, %v2508
    %v2510 = vpop.f32.mrf.mxu0
    %v2511 = vadd.f32 0.0, %v2510
    %2512 = vmatmul.bf16.gmra.mxu0 %v2473
    %v2513 = vpop.f32.mrf.mxu0
    %v2514 = vadd.f32 0.0, %v2513
    %v2515 = vpop.f32.mrf.mxu0
    %v2516 = vadd.f32 0.0, %v2515
    %2517 = vmatmul.bf16.gmra.mxu0 %v2476
    %v2518 = vpop.f32.mrf.mxu0
    %v2519 = vadd.f32 0.0, %v2518
    %v2520 = vpop.f32.mrf.mxu0
    %v2521 = vadd.f32 0.0, %v2520
    %2522 = vmatmul.bf16.gmra.mxu0 %v2479
    %v2523 = vpop.f32.mrf.mxu0
    %v2524 = vadd.f32 0.0, %v2523
    %v2525 = vpop.f32.mrf.mxu0
    %v2526 = vadd.f32 0.0, %v2525
    %2527 = vmatmul.bf16.gmra.mxu0 %v2482
    %v2528 = vpop.f32.mrf.mxu0
    %v2529 = vadd.f32 0.0, %v2528
    %v2530 = vpop.f32.mrf.mxu0
    %v2531 = vadd.f32 0.0, %v2530
    %2532 = vdwg.mxu0
    %v2533 = vadd.f32 %v2147, %v2494
    %v2534 = vadd.f32 %v2148, %v2496
    %v2535 = vadd.f32 %v2149, %v2499
    %v2536 = vadd.f32 %v2150, %v2501
    %v2537 = vadd.f32 %v2151, %v2504
    %v2538 = vadd.f32 %v2152, %v2506
    %v2539 = vadd.f32 %v2153, %v2509
    %v2540 = vadd.f32 %v2154, %v2511
    %v2541 = vadd.f32 %v2155, %v2514
    %v2542 = vadd.f32 %v2156, %v2516
    %v2543 = vadd.f32 %v2157, %v2519
    %v2544 = vadd.f32 %v2158, %v2521
    %v2545 = vadd.f32 %v2159, %v2524
    %v2546 = vadd.f32 %v2160, %v2526
    %v2547 = vadd.f32 %v2161, %v2529
    %v2548 = vadd.f32 %v2162, %v2531
    %v2549 = vld [vmem:[%s2000] sm:$0xe]
    %v2550 = vld [vmem:[%s2000 + $0x8] sm:$0xe]
    %v2551 = vld [vmem:[%s2000 + $0x10] sm:$0xe]
    %v2552 = vld [vmem:[%s2000 + $0x18] sm:$0xe]
    %v2553 = vld [vmem:[%s2000 + $0x20] sm:$0xe]
    %v2554 = vld [vmem:[%s2000 + $0x28] sm:$0xe]
    %v2555 = vld [vmem:[%s2000 + $0x30] sm:$0xe]
    %v2556 = vld [vmem:[%s2000 + $0x38] sm:$0xe]
    %v2557 = vld [vmem:[%s2000 + $0x50] sm:$0xe]
    %v2558 = vld [vmem:[%s2000 + $0x58] sm:$0xe]
    %v2559 = vld [vmem:[%s2000 + $0x60] sm:$0xe]
    %v2560 = vld [vmem:[%s2000 + $0x68] sm:$0xe]
    %v2561 = vld [vmem:[%s2000 + $0x70] sm:$0xe]
    %v2562 = vld [vmem:[%s2000 + $0x78] sm:$0xe]
    %v2563 = vld [vmem:[%s2000 + $0x80] sm:$0xe]
    %v2564 = vld [vmem:[%s2000 + $0x88] sm:$0xe]
    %v2597 = vrot.slane %v2549, 5
    %v2598 = vrot.slane %v2597, 4
    %v2599 = vrot.slane %v2164, 5
    %v2600 = vsel %vm1015, %v2598, %v2599
    %v2601 = vrot.slane %v2550, 5
    %v2602 = vrot.slane %v2601, 4
    %v2603 = vrot.slane %v2166, 5
    %v2604 = vsel %vm1015, %v2602, %v2603
    %v2605 = vrot.slane %v2551, 5
    %v2606 = vrot.slane %v2605, 4
    %v2607 = vrot.slane %v2168, 5
    %v2608 = vsel %vm1015, %v2606, %v2607
    %v2609 = vrot.slane %v2552, 5
    %v2610 = vrot.slane %v2609, 4
    %v2611 = vrot.slane %v2170, 5
    %v2612 = vsel %vm1015, %v2610, %v2611
    %v2613 = vrot.slane %v2553, 5
    %v2614 = vrot.slane %v2613, 4
    %v2615 = vrot.slane %v2172, 5
    %v2616 = vsel %vm1015, %v2614, %v2615
    %v2617 = vrot.slane %v2554, 5
    %v2618 = vrot.slane %v2617, 4
    %v2619 = vrot.slane %v2174, 5
    %v2620 = vsel %vm1015, %v2618, %v2619
    %v2621 = vrot.slane %v2555, 5
    %v2622 = vrot.slane %v2621, 4
    %v2623 = vrot.slane %v2176, 5
    %v2624 = vsel %vm1015, %v2622, %v2623
    %v2625 = vrot.slane %v2556, 5
    %v2626 = vrot.slane %v2625, 4
    %v2627 = vrot.slane %v2178, 5
    %v2628 = vsel %vm1015, %v2626, %v2627
    %v2629 = vrot.slane %v2557, 5
    %v2630 = vrot.slane %v2629, 4
    %v2631 = vrot.slane %v2180, 5
    %v2632 = vsel %vm1015, %v2630, %v2631
    %v2633 = vrot.slane %v2558, 5
    %v2634 = vrot.slane %v2633, 4
    %v2635 = vrot.slane %v2182, 5
    %v2636 = vsel %vm1015, %v2634, %v2635
    %v2637 = vrot.slane %v2559, 5
    %v2638 = vrot.slane %v2637, 4
    %v2639 = vrot.slane %v2184, 5
    %v2640 = vsel %vm1015, %v2638, %v2639
    %v2641 = vrot.slane %v2560, 5
    %v2642 = vrot.slane %v2641, 4
    %v2643 = vrot.slane %v2186, 5
    %v2644 = vsel %vm1015, %v2642, %v2643
    %v2645 = vrot.slane %v2561, 5
    %v2646 = vrot.slane %v2645, 4
    %v2647 = vrot.slane %v2188, 5
    %v2648 = vsel %vm1015, %v2646, %v2647
    %v2649 = vrot.slane %v2562, 5
    %v2650 = vrot.slane %v2649, 4
    %v2651 = vrot.slane %v2190, 5
    %v2652 = vsel %vm1015, %v2650, %v2651
    %v2653 = vrot.slane %v2563, 5
    %v2654 = vrot.slane %v2653, 4
    %v2655 = vrot.slane %v2192, 5
    %v2656 = vsel %vm1015, %v2654, %v2655
    %v2657 = vrot.slane %v2564, 5
    %v2658 = vrot.slane %v2657, 4
    %v2659 = vrot.slane %v2194, 5
    %v2660 = vsel %vm1015, %v2658, %v2659
    %s2661 = scalar_lea.vmem [#allocation6], 128
    %v2662 = vld [vmem:[%s2661] sm:$0xf]
    %v2663 = vld [vmem:[%s2661 + $0x4] sm:$0xf]
    %v2664 = vld [vmem:[%s2661 + $0x8] sm:$0xf]
    %v2665 = vld [vmem:[%s2661 + $0xc] sm:$0xf]
    %v2666 = vunpack.c.l.b16 %v2600
    %v2667 = vunpack.c.l.b16 %v2604
    %v2668 = vunpack.c.l.b16 %v2608
    %v2669 = vunpack.c.l.b16 %v2612
    %v2670 = vunpack.c.l.b16 %v2616
    %v2671 = vunpack.c.l.b16 %v2620
    %v2672 = vunpack.c.l.b16 %v2624
    %v2673 = vunpack.c.l.b16 %v2628
    %v2674 = vunpack.c.l.b16 %v2632
    %v2675 = vunpack.c.l.b16 %v2636
    %v2676 = vunpack.c.l.b16 %v2640
    %v2677 = vunpack.c.l.b16 %v2644
    %v2678 = vunpack.c.l.b16 %v2648
    %v2679 = vunpack.c.l.b16 %v2652
    %v2680 = vunpack.c.l.b16 %v2656
    %v2681 = vunpack.c.l.b16 %v2660
    %v2682 = vpack.c.b16 %v2667, %v2666
    %v2683 = vpack.c.b16 %v2669, %v2668
    %v2684 = vpack.c.b16 %v2671, %v2670
    %v2685 = vpack.c.b16 %v2673, %v2672
    %v2686 = vpack.c.b16 %v2675, %v2674
    %v2687 = vpack.c.b16 %v2677, %v2676
    %v2688 = vpack.c.b16 %v2679, %v2678
    %v2689 = vpack.c.b16 %v2681, %v2680
    %v2694 = vunpack.c.l.b16 %v2662
    %v2695 = vunpack.c.l.b16 %v2663
    %v2696 = vunpack.c.l.b16 %v2664
    %v2697 = vunpack.c.l.b16 %v2665
    %v2698 = vpack.c.b16 %v2695, %v2694
    %v2699 = vpack.c.b16 %v2697, %v2696
    %v2703 = vsel %vm766, %v2682, 0
    %v2706 = vsel %vm766, %v2683, 0
    %v2709 = vsel %vm766, %v2684, 0
    %v2712 = vsel %vm766, %v2685, 0
    %v2715 = vsel %vm766, %v2686, 0
    %v2718 = vsel %vm766, %v2687, 0
    %v2721 = vsel %vm766, %v2688, 0
    %v2724 = vsel %vm766, %v2689, 0
    %2726 = vmatpush.bf16.msra.mxu0 0
    %2727 = vmatpush.bf16.msra.mxu0 0
    %2728 = vmatpush.bf16.msra.mxu0 0
    %2729 = vmatpush.bf16.msra.mxu0 0
    %2730 = vmatpush.bf16.msra.mxu0 0
    %2731 = vmatpush.bf16.msra.mxu0 0
    %2732 = vmatpush.bf16.msra.mxu0 %v2699
    %2733 = vmatpush.bf16.msra.mxu0 %v2698
    %2734 = vmatmul.bf16.gmra.mxu0 %v2703
    %v2735 = vpop.f32.mrf.mxu0
    %v2736 = vadd.f32 0.0, %v2735
    %v2737 = vpop.f32.mrf.mxu0
    %v2738 = vadd.f32 0.0, %v2737
    %2739 = vmatmul.bf16.gmra.mxu0 %v2706
    %v2740 = vpop.f32.mrf.mxu0
    %v2741 = vadd.f32 0.0, %v2740
    %v2742 = vpop.f32.mrf.mxu0
    %v2743 = vadd.f32 0.0, %v2742
    %2744 = vmatmul.bf16.gmra.mxu0 %v2709
    %v2745 = vpop.f32.mrf.mxu0
    %v2746 = vadd.f32 0.0, %v2745
    %v2747 = vpop.f32.mrf.mxu0
    %v2748 = vadd.f32 0.0, %v2747
    %2749 = vmatmul.bf16.gmra.mxu0 %v2712
    %v2750 = vpop.f32.mrf.mxu0
    %v2751 = vadd.f32 0.0, %v2750
    %v2752 = vpop.f32.mrf.mxu0
    %v2753 = vadd.f32 0.0, %v2752
    %2754 = vmatmul.bf16.gmra.mxu0 %v2715
    %v2755 = vpop.f32.mrf.mxu0
    %v2756 = vadd.f32 0.0, %v2755
    %v2757 = vpop.f32.mrf.mxu0
    %v2758 = vadd.f32 0.0, %v2757
    %2759 = vmatmul.bf16.gmra.mxu0 %v2718
    %v2760 = vpop.f32.mrf.mxu0
    %v2761 = vadd.f32 0.0, %v2760
    %v2762 = vpop.f32.mrf.mxu0
    %v2763 = vadd.f32 0.0, %v2762
    %2764 = vmatmul.bf16.gmra.mxu0 %v2721
    %v2765 = vpop.f32.mrf.mxu0
    %v2766 = vadd.f32 0.0, %v2765
    %v2767 = vpop.f32.mrf.mxu0
    %v2768 = vadd.f32 0.0, %v2767
    %2769 = vmatmul.bf16.gmra.mxu0 %v2724
    %v2770 = vpop.f32.mrf.mxu0
    %v2771 = vadd.f32 0.0, %v2770
    %v2772 = vpop.f32.mrf.mxu0
    %v2773 = vadd.f32 0.0, %v2772
    %2774 = vdwg.mxu0
    %v2775 = vadd.f32 %v2533, %v2736
    %v2776 = vadd.f32 %v2534, %v2738
    %v2777 = vadd.f32 %v2535, %v2741
    %v2778 = vadd.f32 %v2536, %v2743
    %v2779 = vadd.f32 %v2537, %v2746
    %v2780 = vadd.f32 %v2538, %v2748
    %v2781 = vadd.f32 %v2539, %v2751
    %v2782 = vadd.f32 %v2540, %v2753
    %v2783 = vadd.f32 %v2541, %v2756
    %v2784 = vadd.f32 %v2542, %v2758
    %v2785 = vadd.f32 %v2543, %v2761
    %v2786 = vadd.f32 %v2544, %v2763
    %v2787 = vadd.f32 %v2545, %v2766
    %v2788 = vadd.f32 %v2546, %v2768
    %v2789 = vadd.f32 %v2547, %v2771
    %v2790 = vadd.f32 %v2548, %v2773
    %v2791 = vld [vmem:[%s3] sm:$0x1]
    %v2793 = vperm.slane %v2791, 0
    %v2795 = vmul.f32 %v2775, %v2793
    %v2796 = vmul.f32 %v2776, %v2793
    %v2797 = vmul.f32 %v2777, %v2793
    %v2798 = vmul.f32 %v2778, %v2793
    %v2799 = vmul.f32 %v2779, %v2793
    %v2800 = vmul.f32 %v2780, %v2793
    %v2801 = vmul.f32 %v2781, %v2793
    %v2802 = vmul.f32 %v2782, %v2793
    %v2803 = vmul.f32 %v2783, %v2793
    %v2804 = vmul.f32 %v2784, %v2793
    %v2805 = vmul.f32 %v2785, %v2793
    %v2806 = vmul.f32 %v2786, %v2793
    %v2807 = vmul.f32 %v2787, %v2793
    %v2808 = vmul.f32 %v2788, %v2793
    %v2809 = vmul.f32 %v2789, %v2793
    %v2810 = vmul.f32 %v2790, %v2793
    %v2811 = vld [vmem:[%s4] sm:$0x1]
    %v2813 = vperm.slane %v2811, 0
    %v2815 = vadd.f32 %v2795, %v2813
    %v2816 = vadd.f32 %v2796, %v2813
    %v2817 = vadd.f32 %v2797, %v2813
    %v2818 = vadd.f32 %v2798, %v2813
    %v2819 = vadd.f32 %v2799, %v2813
    %v2820 = vadd.f32 %v2800, %v2813
    %v2821 = vadd.f32 %v2801, %v2813
    %v2822 = vadd.f32 %v2802, %v2813
    %v2823 = vadd.f32 %v2803, %v2813
    %v2824 = vadd.f32 %v2804, %v2813
    %v2825 = vadd.f32 %v2805, %v2813
    %v2826 = vadd.f32 %v2806, %v2813
    %v2827 = vadd.f32 %v2807, %v2813
    %v2828 = vadd.f32 %v2808, %v2813
    %v2829 = vadd.f32 %v2809, %v2813
    %v2830 = vadd.f32 %v2810, %v2813
    %v2831 = vmax.f32 %v2815, 0.0
    %v2832 = vmax.f32 %v2816, 0.0
    %v2833 = vmax.f32 %v2817, 0.0
    %v2834 = vmax.f32 %v2818, 0.0
    %v2835 = vmax.f32 %v2819, 0.0
    %v2836 = vmax.f32 %v2820, 0.0
    %v2837 = vmax.f32 %v2821, 0.0
    %v2838 = vmax.f32 %v2822, 0.0
    %v2839 = vmax.f32 %v2823, 0.0
    %v2840 = vmax.f32 %v2824, 0.0
    %v2841 = vmax.f32 %v2825, 0.0
    %v2842 = vmax.f32 %v2826, 0.0
    %v2843 = vmax.f32 %v2827, 0.0
    %v2844 = vmax.f32 %v2828, 0.0
    %v2845 = vmax.f32 %v2829, 0.0
    %v2846 = vmax.f32 %v2830, 0.0
    %v2847 = vpack.c.bf16 %v2831, %v2831
    %v2848 = vpack.c.bf16 %v2832, %v2832
    %v2849 = vpack.c.bf16 %v2833, %v2833
    %v2850 = vpack.c.bf16 %v2834, %v2834
    %v2851 = vpack.c.bf16 %v2835, %v2835
    %v2852 = vpack.c.bf16 %v2836, %v2836
    %v2853 = vpack.c.bf16 %v2837, %v2837
    %v2854 = vpack.c.bf16 %v2838, %v2838
    %v2855 = vpack.c.bf16 %v2839, %v2839
    %v2856 = vpack.c.bf16 %v2840, %v2840
    %v2857 = vpack.c.bf16 %v2841, %v2841
    %v2858 = vpack.c.bf16 %v2842, %v2842
    %v2859 = vpack.c.bf16 %v2843, %v2843
    %v2860 = vpack.c.bf16 %v2844, %v2844
    %v2861 = vpack.c.bf16 %v2845, %v2845
    %v2862 = vpack.c.bf16 %v2846, %v2846
    %v2864 = vshrl.u32 %v2847, 16
    %v2866 = vrot.slane %v2864, 7
    %v2867 = vshll.u32 %v2847, 16
    %v2869 = vor.u32 %v2866, %v2867
    %v2870 = vrot.slane %v2866, 4
    %v2872 = vshrl.u32 %v2848, 16
    %v2874 = vrot.slane %v2872, 7
    %v2875 = vshll.u32 %v2848, 16
    %v2877 = vor.u32 %v2874, %v2875
    %v2878 = vrot.slane %v2874, 4
    %v2880 = vshrl.u32 %v2849, 16
    %v2882 = vrot.slane %v2880, 7
    %v2883 = vshll.u32 %v2849, 16
    %v2885 = vor.u32 %v2882, %v2883
    %v2886 = vrot.slane %v2882, 4
    %v2888 = vshrl.u32 %v2850, 16
    %v2890 = vrot.slane %v2888, 7
    %v2891 = vshll.u32 %v2850, 16
    %v2893 = vor.u32 %v2890, %v2891
    %v2894 = vrot.slane %v2890, 4
    %v2896 = vshrl.u32 %v2851, 16
    %v2898 = vrot.slane %v2896, 7
    %v2899 = vshll.u32 %v2851, 16
    %v2901 = vor.u32 %v2898, %v2899
    %v2902 = vrot.slane %v2898, 4
    %v2904 = vshrl.u32 %v2852, 16
    %v2906 = vrot.slane %v2904, 7
    %v2907 = vshll.u32 %v2852, 16
    %v2909 = vor.u32 %v2906, %v2907
    %v2910 = vrot.slane %v2906, 4
    %v2912 = vshrl.u32 %v2853, 16
    %v2914 = vrot.slane %v2912, 7
    %v2915 = vshll.u32 %v2853, 16
    %v2917 = vor.u32 %v2914, %v2915
    %v2918 = vrot.slane %v2914, 4
    %v2920 = vshrl.u32 %v2854, 16
    %v2922 = vrot.slane %v2920, 7
    %v2923 = vshll.u32 %v2854, 16
    %v2925 = vor.u32 %v2922, %v2923
    %v2926 = vrot.slane %v2922, 4
    %v2928 = vshrl.u32 %v2855, 16
    %v2930 = vrot.slane %v2928, 7
    %v2931 = vshll.u32 %v2855, 16
    %v2933 = vor.u32 %v2930, %v2931
    %v2934 = vrot.slane %v2930, 4
    %v2936 = vshrl.u32 %v2856, 16
    %v2938 = vrot.slane %v2936, 7
    %v2939 = vshll.u32 %v2856, 16
    %v2941 = vor.u32 %v2938, %v2939
    %v2942 = vrot.slane %v2938, 4
    %v2944 = vshrl.u32 %v2857, 16
    %v2946 = vrot.slane %v2944, 7
    %v2947 = vshll.u32 %v2857, 16
    %v2949 = vor.u32 %v2946, %v2947
    %v2950 = vrot.slane %v2946, 4
    %v2952 = vshrl.u32 %v2858, 16
    %v2954 = vrot.slane %v2952, 7
    %v2955 = vshll.u32 %v2858, 16
    %v2957 = vor.u32 %v2954, %v2955
    %v2958 = vrot.slane %v2954, 4
    %v2960 = vshrl.u32 %v2859, 16
    %v2962 = vrot.slane %v2960, 7
    %v2963 = vshll.u32 %v2859, 16
    %v2965 = vor.u32 %v2962, %v2963
    %v2966 = vrot.slane %v2962, 4
    %v2968 = vshrl.u32 %v2860, 16
    %v2970 = vrot.slane %v2968, 7
    %v2971 = vshll.u32 %v2860, 16
    %v2973 = vor.u32 %v2970, %v2971
    %v2974 = vrot.slane %v2970, 4
    %v2976 = vshrl.u32 %v2861, 16
    %v2978 = vrot.slane %v2976, 7
    %v2979 = vshll.u32 %v2861, 16
    %v2981 = vor.u32 %v2978, %v2979
    %v2982 = vrot.slane %v2978, 4
    %v2984 = vshrl.u32 %v2862, 16
    %v2986 = vrot.slane %v2984, 7
    %v2987 = vshll.u32 %v2862, 16
    %v2989 = vor.u32 %v2986, %v2987
    %v2990 = vrot.slane %v2986, 4
    %v3023 = vsel %vm365, %v2869, %v1372
    %3024 = vst [vmem:[%s86] sm:$0xf] %v3023
    %v3025 = vld [vmem:[%s86 + $0x4] sm:$0x1]
    %v3026 = vsel %vm89, %v2870, %v3025
    %3027 = vst [vmem:[%s86 + $0x4] sm:$0x1] %v3026
    %v3028 = vld [vmem:[%s86 + $0x8] sm:$0xf]
    %v3029 = vsel %vm365, %v2877, %v3028
    %3030 = vst [vmem:[%s86 + $0x8] sm:$0xf] %v3029
    %v3031 = vld [vmem:[%s86 + $0xc] sm:$0x1]
    %v3032 = vsel %vm89, %v2878, %v3031
    %3033 = vst [vmem:[%s86 + $0xc] sm:$0x1] %v3032
    %v3034 = vld [vmem:[%s86 + $0x10] sm:$0xf]
    %v3035 = vsel %vm365, %v2885, %v3034
    %3036 = vst [vmem:[%s86 + $0x10] sm:$0xf] %v3035
    %v3037 = vld [vmem:[%s86 + $0x14] sm:$0x1]
    %v3038 = vsel %vm89, %v2886, %v3037
    %3039 = vst [vmem:[%s86 + $0x14] sm:$0x1] %v3038
    %v3040 = vld [vmem:[%s86 + $0x18] sm:$0xf]
    %v3041 = vsel %vm365, %v2893, %v3040
    %3042 = vst [vmem:[%s86 + $0x18] sm:$0xf] %v3041
    %v3043 = vld [vmem:[%s86 + $0x1c] sm:$0x1]
    %v3044 = vsel %vm89, %v2894, %v3043
    %3045 = vst [vmem:[%s86 + $0x1c] sm:$0x1] %v3044
    %v3046 = vld [vmem:[%s86 + $0x20] sm:$0xf]
    %v3047 = vsel %vm365, %v2901, %v3046
    %3048 = vst [vmem:[%s86 + $0x20] sm:$0xf] %v3047
    %v3049 = vld [vmem:[%s86 + $0x24] sm:$0x1]
    %v3050 = vsel %vm89, %v2902, %v3049
    %3051 = vst [vmem:[%s86 + $0x24] sm:$0x1] %v3050
    %v3052 = vld [vmem:[%s86 + $0x28] sm:$0xf]
    %v3053 = vsel %vm365, %v2909, %v3052
    %3054 = vst [vmem:[%s86 + $0x28] sm:$0xf] %v3053
    %v3055 = vld [vmem:[%s86 + $0x2c] sm:$0x1]
    %v3056 = vsel %vm89, %v2910, %v3055
    %3057 = vst [vmem:[%s86 + $0x2c] sm:$0x1] %v3056
    %v3058 = vld [vmem:[%s86 + $0x30] sm:$0xf]
    %v3059 = vsel %vm365, %v2917, %v3058
    %3060 = vst [vmem:[%s86 + $0x30] sm:$0xf] %v3059
    %v3061 = vld [vmem:[%s86 + $0x34] sm:$0x1]
    %v3062 = vsel %vm89, %v2918, %v3061
    %3063 = vst [vmem:[%s86 + $0x34] sm:$0x1] %v3062
    %v3064 = vld [vmem:[%s86 + $0x38] sm:$0xf]
    %v3065 = vsel %vm365, %v2925, %v3064
    %3066 = vst [vmem:[%s86 + $0x38] sm:$0xf] %v3065
    %v3067 = vld [vmem:[%s86 + $0x3c] sm:$0x1]
    %v3068 = vsel %vm89, %v2926, %v3067
    %3069 = vst [vmem:[%s86 + $0x3c] sm:$0x1] %v3068
    %v3070 = vld [vmem:[%s86 + $0x50] sm:$0xf]
    %v3071 = vsel %vm365, %v2933, %v3070
    %3072 = vst [vmem:[%s86 + $0x50] sm:$0xf] %v3071
    %v3073 = vld [vmem:[%s86 + $0x54] sm:$0x1]
    %v3074 = vsel %vm89, %v2934, %v3073
    %3075 = vst [vmem:[%s86 + $0x54] sm:$0x1] %v3074
    %v3076 = vld [vmem:[%s86 + $0x58] sm:$0xf]
    %v3077 = vsel %vm365, %v2941, %v3076
    %3078 = vst [vmem:[%s86 + $0x58] sm:$0xf] %v3077
    %v3079 = vld [vmem:[%s86 + $0x5c] sm:$0x1]
    %v3080 = vsel %vm89, %v2942, %v3079
    %3081 = vst [vmem:[%s86 + $0x5c] sm:$0x1] %v3080
    %v3082 = vld [vmem:[%s86 + $0x60] sm:$0xf]
    %v3083 = vsel %vm365, %v2949, %v3082
    %3084 = vst [vmem:[%s86 + $0x60] sm:$0xf] %v3083
    %v3085 = vld [vmem:[%s86 + $0x64] sm:$0x1]
    %v3086 = vsel %vm89, %v2950, %v3085
    %3087 = vst [vmem:[%s86 + $0x64] sm:$0x1] %v3086
    %v3088 = vld [vmem:[%s86 + $0x68] sm:$0xf]
    %v3089 = vsel %vm365, %v2957, %v3088
    %3090 = vst [vmem:[%s86 + $0x68] sm:$0xf] %v3089
    %v3091 = vld [vmem:[%s86 + $0x6c] sm:$0x1]
    %v3092 = vsel %vm89, %v2958, %v3091
    %3093 = vst [vmem:[%s86 + $0x6c] sm:$0x1] %v3092
    %v3094 = vld [vmem:[%s86 + $0x70] sm:$0xf]
    %v3095 = vsel %vm365, %v2965, %v3094
    %3096 = vst [vmem:[%s86 + $0x70] sm:$0xf] %v3095
    %v3097 = vld [vmem:[%s86 + $0x74] sm:$0x1]
    %v3098 = vsel %vm89, %v2966, %v3097
    %3099 = vst [vmem:[%s86 + $0x74] sm:$0x1] %v3098
    %v3100 = vld [vmem:[%s86 + $0x78] sm:$0xf]
    %v3101 = vsel %vm365, %v2973, %v3100
    %3102 = vst [vmem:[%s86 + $0x78] sm:$0xf] %v3101
    %v3103 = vld [vmem:[%s86 + $0x7c] sm:$0x1]
    %v3104 = vsel %vm89, %v2974, %v3103
    %3105 = vst [vmem:[%s86 + $0x7c] sm:$0x1] %v3104
    %v3106 = vld [vmem:[%s86 + $0x80] sm:$0xf]
    %v3107 = vsel %vm365, %v2981, %v3106
    %3108 = vst [vmem:[%s86 + $0x80] sm:$0xf] %v3107
    %v3109 = vld [vmem:[%s86 + $0x84] sm:$0x1]
    %v3110 = vsel %vm89, %v2982, %v3109
    %3111 = vst [vmem:[%s86 + $0x84] sm:$0x1] %v3110
    %v3112 = vld [vmem:[%s86 + $0x88] sm:$0xf]
    %v3113 = vsel %vm365, %v2989, %v3112
    %3114 = vst [vmem:[%s86 + $0x88] sm:$0xf] %v3113
    %v3115 = vld [vmem:[%s86 + $0x8c] sm:$0x1]
    %v3116 = vsel %vm89, %v2990, %v3115
    %3117 = vst [vmem:[%s86 + $0x8c] sm:$0x1] %v3116
    %v3118 = vld [vmem:[#allocation2] sm:$0xf]
    %v3119 = vld [vmem:[#allocation2 + $0x8] sm:$0xf]
    %v3120 = vld [vmem:[#allocation2 + $0x10] sm:$0xf]
    %v3121 = vld [vmem:[#allocation2 + $0x18] sm:$0xf]
    %v3122 = vld [vmem:[#allocation2 + $0x20] sm:$0xf]
    %v3123 = vld [vmem:[#allocation2 + $0x28] sm:$0xf]
    %v3124 = vld [vmem:[#allocation2 + $0x30] sm:$0xf]
    %v3125 = vld [vmem:[#allocation2 + $0x38] sm:$0xf]
    %v3126 = vld [vmem:[#allocation2 + $0x50] sm:$0xf]
    %v3127 = vld [vmem:[#allocation2 + $0x58] sm:$0xf]
    %v3128 = vld [vmem:[#allocation2 + $0x60] sm:$0xf]
    %v3129 = vld [vmem:[#allocation2 + $0x68] sm:$0xf]
    %v3130 = vld [vmem:[#allocation2 + $0x70] sm:$0xf]
    %v3131 = vld [vmem:[#allocation2 + $0x78] sm:$0xf]
    %v3132 = vld [vmem:[#allocation2 + $0x80] sm:$0xf]
    %v3133 = vld [vmem:[#allocation2 + $0x88] sm:$0xf]
    %v3134 = vld [vmem:[#allocation8] sm:$0xf]
    %v3135 = vld [vmem:[#allocation8 + $0x4] sm:$0xf]
    %v3136 = vld [vmem:[#allocation8 + $0x8] sm:$0xf]
    %v3137 = vld [vmem:[#allocation8 + $0xc] sm:$0xf]
    %v3138 = vld [vmem:[#allocation2 + $0x4] sm:$0x1]
    %v3139 = vld [vmem:[#allocation2 + $0xc] sm:$0x1]
    %v3140 = vld [vmem:[#allocation2 + $0x14] sm:$0x1]
    %v3141 = vld [vmem:[#allocation2 + $0x1c] sm:$0x1]
    %v3142 = vld [vmem:[#allocation2 + $0x24] sm:$0x1]
    %v3143 = vld [vmem:[#allocation2 + $0x2c] sm:$0x1]
    %v3144 = vld [vmem:[#allocation2 + $0x34] sm:$0x1]
    %v3145 = vld [vmem:[#allocation2 + $0x3c] sm:$0x1]
    %v3146 = vld [vmem:[#allocation2 + $0x54] sm:$0x1]
    %v3147 = vld [vmem:[#allocation2 + $0x5c] sm:$0x1]
    %v3148 = vld [vmem:[#allocation2 + $0x64] sm:$0x1]
    %v3149 = vld [vmem:[#allocation2 + $0x6c] sm:$0x1]
    %v3150 = vld [vmem:[#allocation2 + $0x74] sm:$0x1]
    %v3151 = vld [vmem:[#allocation2 + $0x7c] sm:$0x1]
    %v3152 = vld [vmem:[#allocation2 + $0x84] sm:$0x1]
    %v3153 = vld [vmem:[#allocation2 + $0x8c] sm:$0x1]
    %v3155 = vshrl.u32 %v3118, 16
    %v3157 = vrot.slane %v3155, 4
    %v3158 = vshll.u32 %v3118, 16
    %v3160 = vrot.slane %v3158, 5
    %v3161 = vor.u32 %v3157, %v3160
    %v3162 = vrot.slane %v3161, 4
    %v3164 = vshll.u32 %v3138, 16
    %v3166 = vrot.slane %v3164, 5
    %v3167 = vsel %vm500, %v3162, %v3166
    %v3169 = vshrl.u32 %v3119, 16
    %v3171 = vrot.slane %v3169, 4
    %v3172 = vshll.u32 %v3119, 16
    %v3174 = vrot.slane %v3172, 5
    %v3175 = vor.u32 %v3171, %v3174
    %v3176 = vrot.slane %v3175, 4
    %v3178 = vshll.u32 %v3139, 16
    %v3180 = vrot.slane %v3178, 5
    %v3181 = vsel %vm500, %v3176, %v3180
    %v3183 = vshrl.u32 %v3120, 16
    %v3185 = vrot.slane %v3183, 4
    %v3186 = vshll.u32 %v3120, 16
    %v3188 = vrot.slane %v3186, 5
    %v3189 = vor.u32 %v3185, %v3188
    %v3190 = vrot.slane %v3189, 4
    %v3192 = vshll.u32 %v3140, 16
    %v3194 = vrot.slane %v3192, 5
    %v3195 = vsel %vm500, %v3190, %v3194
    %v3197 = vshrl.u32 %v3121, 16
    %v3199 = vrot.slane %v3197, 4
    %v3200 = vshll.u32 %v3121, 16
    %v3202 = vrot.slane %v3200, 5
    %v3203 = vor.u32 %v3199, %v3202
    %v3204 = vrot.slane %v3203, 4
    %v3206 = vshll.u32 %v3141, 16
    %v3208 = vrot.slane %v3206, 5
    %v3209 = vsel %vm500, %v3204, %v3208
    %v3211 = vshrl.u32 %v3122, 16
    %v3213 = vrot.slane %v3211, 4
    %v3214 = vshll.u32 %v3122, 16
    %v3216 = vrot.slane %v3214, 5
    %v3217 = vor.u32 %v3213, %v3216
    %v3218 = vrot.slane %v3217, 4
    %v3220 = vshll.u32 %v3142, 16
    %v3222 = vrot.slane %v3220, 5
    %v3223 = vsel %vm500, %v3218, %v3222
    %v3225 = vshrl.u32 %v3123, 16
    %v3227 = vrot.slane %v3225, 4
    %v3228 = vshll.u32 %v3123, 16
    %v3230 = vrot.slane %v3228, 5
    %v3231 = vor.u32 %v3227, %v3230
    %v3232 = vrot.slane %v3231, 4
    %v3234 = vshll.u32 %v3143, 16
    %v3236 = vrot.slane %v3234, 5
    %v3237 = vsel %vm500, %v3232, %v3236
    %v3239 = vshrl.u32 %v3124, 16
    %v3241 = vrot.slane %v3239, 4
    %v3242 = vshll.u32 %v3124, 16
    %v3244 = vrot.slane %v3242, 5
    %v3245 = vor.u32 %v3241, %v3244
    %v3246 = vrot.slane %v3245, 4
    %v3248 = vshll.u32 %v3144, 16
    %v3250 = vrot.slane %v3248, 5
    %v3251 = vsel %vm500, %v3246, %v3250
    %v3253 = vshrl.u32 %v3125, 16
    %v3255 = vrot.slane %v3253, 4
    %v3256 = vshll.u32 %v3125, 16
    %v3258 = vrot.slane %v3256, 5
    %v3259 = vor.u32 %v3255, %v3258
    %v3260 = vrot.slane %v3259, 4
    %v3262 = vshll.u32 %v3145, 16
    %v3264 = vrot.slane %v3262, 5
    %v3265 = vsel %vm500, %v3260, %v3264
    %v3267 = vshrl.u32 %v3126, 16
    %v3269 = vrot.slane %v3267, 4
    %v3270 = vshll.u32 %v3126, 16
    %v3272 = vrot.slane %v3270, 5
    %v3273 = vor.u32 %v3269, %v3272
    %v3274 = vrot.slane %v3273, 4
    %v3276 = vshll.u32 %v3146, 16
    %v3278 = vrot.slane %v3276, 5
    %v3279 = vsel %vm500, %v3274, %v3278
    %v3281 = vshrl.u32 %v3127, 16
    %v3283 = vrot.slane %v3281, 4
    %v3284 = vshll.u32 %v3127, 16
    %v3286 = vrot.slane %v3284, 5
    %v3287 = vor.u32 %v3283, %v3286
    %v3288 = vrot.slane %v3287, 4
    %v3290 = vshll.u32 %v3147, 16
    %v3292 = vrot.slane %v3290, 5
    %v3293 = vsel %vm500, %v3288, %v3292
    %v3295 = vshrl.u32 %v3128, 16
    %v3297 = vrot.slane %v3295, 4
    %v3298 = vshll.u32 %v3128, 16
    %v3300 = vrot.slane %v3298, 5
    %v3301 = vor.u32 %v3297, %v3300
    %v3302 = vrot.slane %v3301, 4
    %v3304 = vshll.u32 %v3148, 16
    %v3306 = vrot.slane %v3304, 5
    %v3307 = vsel %vm500, %v3302, %v3306
    %v3309 = vshrl.u32 %v3129, 16
    %v3311 = vrot.slane %v3309, 4
    %v3312 = vshll.u32 %v3129, 16
    %v3314 = vrot.slane %v3312, 5
    %v3315 = vor.u32 %v3311, %v3314
    %v3316 = vrot.slane %v3315, 4
    %v3318 = vshll.u32 %v3149, 16
    %v3320 = vrot.slane %v3318, 5
    %v3321 = vsel %vm500, %v3316, %v3320
    %v3323 = vshrl.u32 %v3130, 16
    %v3325 = vrot.slane %v3323, 4
    %v3326 = vshll.u32 %v3130, 16
    %v3328 = vrot.slane %v3326, 5
    %v3329 = vor.u32 %v3325, %v3328
    %v3330 = vrot.slane %v3329, 4
    %v3332 = vshll.u32 %v3150, 16
    %v3334 = vrot.slane %v3332, 5
    %v3335 = vsel %vm500, %v3330, %v3334
    %v3337 = vshrl.u32 %v3131, 16
    %v3339 = vrot.slane %v3337, 4
    %v3340 = vshll.u32 %v3131, 16
    %v3342 = vrot.slane %v3340, 5
    %v3343 = vor.u32 %v3339, %v3342
    %v3344 = vrot.slane %v3343, 4
    %v3346 = vshll.u32 %v3151, 16
    %v3348 = vrot.slane %v3346, 5
    %v3349 = vsel %vm500, %v3344, %v3348
    %v3351 = vshrl.u32 %v3132, 16
    %v3353 = vrot.slane %v3351, 4
    %v3354 = vshll.u32 %v3132, 16
    %v3356 = vrot.slane %v3354, 5
    %v3357 = vor.u32 %v3353, %v3356
    %v3358 = vrot.slane %v3357, 4
    %v3360 = vshll.u32 %v3152, 16
    %v3362 = vrot.slane %v3360, 5
    %v3363 = vsel %vm500, %v3358, %v3362
    %v3365 = vshrl.u32 %v3133, 16
    %v3367 = vrot.slane %v3365, 4
    %v3368 = vshll.u32 %v3133, 16
    %v3370 = vrot.slane %v3368, 5
    %v3371 = vor.u32 %v3367, %v3370
    %v3372 = vrot.slane %v3371, 4
    %v3374 = vshll.u32 %v3153, 16
    %v3376 = vrot.slane %v3374, 5
    %v3377 = vsel %vm500, %v3372, %v3376
    %s3378 = scalar_lea.vmem [#allocation8], 16
    %v3379 = vld [vmem:[%s3378] sm:$0xf]
    %v3380 = vld [vmem:[%s3378 + $0x4] sm:$0xf]
    %v3381 = vld [vmem:[%s3378 + $0x8] sm:$0xf]
    %v3382 = vld [vmem:[%s3378 + $0xc] sm:$0xf]
    %v3383 = vunpack.c.l.b16 %v3167
    %v3384 = vunpack.c.l.b16 %v3181
    %v3385 = vunpack.c.l.b16 %v3195
    %v3386 = vunpack.c.l.b16 %v3209
    %v3387 = vunpack.c.l.b16 %v3223
    %v3388 = vunpack.c.l.b16 %v3237
    %v3389 = vunpack.c.l.b16 %v3251
    %v3390 = vunpack.c.l.b16 %v3265
    %v3391 = vunpack.c.l.b16 %v3279
    %v3392 = vunpack.c.l.b16 %v3293
    %v3393 = vunpack.c.l.b16 %v3307
    %v3394 = vunpack.c.l.b16 %v3321
    %v3395 = vunpack.c.l.b16 %v3335
    %v3396 = vunpack.c.l.b16 %v3349
    %v3397 = vunpack.c.l.b16 %v3363
    %v3398 = vunpack.c.l.b16 %v3377
    %v3399 = vpack.c.b16 %v3384, %v3383
    %v3400 = vpack.c.b16 %v3386, %v3385
    %v3401 = vpack.c.b16 %v3388, %v3387
    %v3402 = vpack.c.b16 %v3390, %v3389
    %v3403 = vpack.c.b16 %v3392, %v3391
    %v3404 = vpack.c.b16 %v3394, %v3393
    %v3405 = vpack.c.b16 %v3396, %v3395
    %v3406 = vpack.c.b16 %v3398, %v3397
    %v3411 = vunpack.c.l.b16 %v3379
    %v3412 = vunpack.c.l.b16 %v3380
    %v3413 = vunpack.c.l.b16 %v3381
    %v3414 = vunpack.c.l.b16 %v3382
    %v3415 = vpack.c.b16 %v3412, %v3411
    %v3416 = vpack.c.b16 %v3414, %v3413
    %v3420 = vsel %vm766, %v3399, 0
    %v3423 = vsel %vm766, %v3400, 0
    %v3426 = vsel %vm766, %v3401, 0
    %v3429 = vsel %vm766, %v3402, 0
    %v3432 = vsel %vm766, %v3403, 0
    %v3435 = vsel %vm766, %v3404, 0
    %v3438 = vsel %vm766, %v3405, 0
    %v3441 = vsel %vm766, %v3406, 0
    %3443 = vmatpush.bf16.msra.mxu0 0
    %3444 = vmatpush.bf16.msra.mxu0 0
    %3445 = vmatpush.bf16.msra.mxu0 0
    %3446 = vmatpush.bf16.msra.mxu0 0
    %3447 = vmatpush.bf16.msra.mxu0 0
    %3448 = vmatpush.bf16.msra.mxu0 0
    %3449 = vmatpush.bf16.msra.mxu0 %v3416
    %3450 = vmatpush.bf16.msra.mxu0 %v3415
    %3451 = vmatmul.bf16.gmra.mxu0 %v3420
    %v3452 = vpop.f32.mrf.mxu0
    %v3453 = vadd.f32 0.0, %v3452
    %v3454 = vpop.f32.mrf.mxu0
    %v3455 = vadd.f32 0.0, %v3454
    %3456 = vmatmul.bf16.gmra.mxu0 %v3423
    %v3457 = vpop.f32.mrf.mxu0
    %v3458 = vadd.f32 0.0, %v3457
    %v3459 = vpop.f32.mrf.mxu0
    %v3460 = vadd.f32 0.0, %v3459
    %3461 = vmatmul.bf16.gmra.mxu0 %v3426
    %v3462 = vpop.f32.mrf.mxu0
    %v3463 = vadd.f32 0.0, %v3462
    %v3464 = vpop.f32.mrf.mxu0
    %v3465 = vadd.f32 0.0, %v3464
    %3466 = vmatmul.bf16.gmra.mxu0 %v3429
    %v3467 = vpop.f32.mrf.mxu0
    %v3468 = vadd.f32 0.0, %v3467
    %v3469 = vpop.f32.mrf.mxu0
    %v3470 = vadd.f32 0.0, %v3469
    %3471 = vmatmul.bf16.gmra.mxu0 %v3432
    %v3472 = vpop.f32.mrf.mxu0
    %v3473 = vadd.f32 0.0, %v3472
    %v3474 = vpop.f32.mrf.mxu0
    %v3475 = vadd.f32 0.0, %v3474
    %3476 = vmatmul.bf16.gmra.mxu0 %v3435
    %v3477 = vpop.f32.mrf.mxu0
    %v3478 = vadd.f32 0.0, %v3477
    %v3479 = vpop.f32.mrf.mxu0
    %v3480 = vadd.f32 0.0, %v3479
    %3481 = vmatmul.bf16.gmra.mxu0 %v3438
    %v3482 = vpop.f32.mrf.mxu0
    %v3483 = vadd.f32 0.0, %v3482
    %v3484 = vpop.f32.mrf.mxu0
    %v3485 = vadd.f32 0.0, %v3484
    %3486 = vmatmul.bf16.gmra.mxu0 %v3441
    %v3487 = vpop.f32.mrf.mxu0
    %v3488 = vadd.f32 0.0, %v3487
    %v3489 = vpop.f32.mrf.mxu0
    %v3490 = vadd.f32 0.0, %v3489
    %3491 = vdwg.mxu0
    %v3508 = vunpack.c.l.b16 %v3118
    %v3509 = vunpack.c.l.b16 %v3119
    %v3510 = vunpack.c.l.b16 %v3120
    %v3511 = vunpack.c.l.b16 %v3121
    %v3512 = vunpack.c.l.b16 %v3122
    %v3513 = vunpack.c.l.b16 %v3123
    %v3514 = vunpack.c.l.b16 %v3124
    %v3515 = vunpack.c.l.b16 %v3125
    %v3516 = vunpack.c.l.b16 %v3126
    %v3517 = vunpack.c.l.b16 %v3127
    %v3518 = vunpack.c.l.b16 %v3128
    %v3519 = vunpack.c.l.b16 %v3129
    %v3520 = vunpack.c.l.b16 %v3130
    %v3521 = vunpack.c.l.b16 %v3131
    %v3522 = vunpack.c.l.b16 %v3132
    %v3523 = vunpack.c.l.b16 %v3133
    %v3524 = vpack.c.b16 %v3509, %v3508
    %v3525 = vpack.c.b16 %v3511, %v3510
    %v3526 = vpack.c.b16 %v3513, %v3512
    %v3527 = vpack.c.b16 %v3515, %v3514
    %v3528 = vpack.c.b16 %v3517, %v3516
    %v3529 = vpack.c.b16 %v3519, %v3518
    %v3530 = vpack.c.b16 %v3521, %v3520
    %v3531 = vpack.c.b16 %v3523, %v3522
    %v3536 = vunpack.c.l.b16 %v3134
    %v3537 = vunpack.c.l.b16 %v3135
    %v3538 = vunpack.c.l.b16 %v3136
    %v3539 = vunpack.c.l.b16 %v3137
    %v3540 = vpack.c.b16 %v3537, %v3536
    %v3541 = vpack.c.b16 %v3539, %v3538
    %v3545 = vsel %vm766, %v3524, 0
    %v3548 = vsel %vm766, %v3525, 0
    %v3551 = vsel %vm766, %v3526, 0
    %v3554 = vsel %vm766, %v3527, 0
    %v3557 = vsel %vm766, %v3528, 0
    %v3560 = vsel %vm766, %v3529, 0
    %v3563 = vsel %vm766, %v3530, 0
    %v3566 = vsel %vm766, %v3531, 0
    %3568 = vmatpush.bf16.msra.mxu0 0
    %3569 = vmatpush.bf16.msra.mxu0 0
    %3570 = vmatpush.bf16.msra.mxu0 0
    %3571 = vmatpush.bf16.msra.mxu0 0
    %3572 = vmatpush.bf16.msra.mxu0 0
    %3573 = vmatpush.bf16.msra.mxu0 0
    %3574 = vmatpush.bf16.msra.mxu0 %v3541
    %3575 = vmatpush.bf16.msra.mxu0 %v3540
    %3576 = vmatmul.bf16.gmra.mxu0 %v3545
    %v3577 = vpop.f32.mrf.mxu0
    %v3578 = vadd.f32 %v3453, %v3577
    %v3579 = vpop.f32.mrf.mxu0
    %v3580 = vadd.f32 %v3455, %v3579
    %3581 = vmatmul.bf16.gmra.mxu0 %v3548
    %v3582 = vpop.f32.mrf.mxu0
    %v3583 = vadd.f32 %v3458, %v3582
    %v3584 = vpop.f32.mrf.mxu0
    %v3585 = vadd.f32 %v3460, %v3584
    %3586 = vmatmul.bf16.gmra.mxu0 %v3551
    %v3587 = vpop.f32.mrf.mxu0
    %v3588 = vadd.f32 %v3463, %v3587
    %v3589 = vpop.f32.mrf.mxu0
    %v3590 = vadd.f32 %v3465, %v3589
    %3591 = vmatmul.bf16.gmra.mxu0 %v3554
    %v3592 = vpop.f32.mrf.mxu0
    %v3593 = vadd.f32 %v3468, %v3592
    %v3594 = vpop.f32.mrf.mxu0
    %v3595 = vadd.f32 %v3470, %v3594
    %3596 = vmatmul.bf16.gmra.mxu0 %v3557
    %v3597 = vpop.f32.mrf.mxu0
    %v3598 = vadd.f32 %v3473, %v3597
    %v3599 = vpop.f32.mrf.mxu0
    %v3600 = vadd.f32 %v3475, %v3599
    %3601 = vmatmul.bf16.gmra.mxu0 %v3560
    %v3602 = vpop.f32.mrf.mxu0
    %v3603 = vadd.f32 %v3478, %v3602
    %v3604 = vpop.f32.mrf.mxu0
    %v3605 = vadd.f32 %v3480, %v3604
    %3606 = vmatmul.bf16.gmra.mxu0 %v3563
    %v3607 = vpop.f32.mrf.mxu0
    %v3608 = vadd.f32 %v3483, %v3607
    %v3609 = vpop.f32.mrf.mxu0
    %v3610 = vadd.f32 %v3485, %v3609
    %3611 = vmatmul.bf16.gmra.mxu0 %v3566
    %v3612 = vpop.f32.mrf.mxu0
    %v3613 = vadd.f32 %v3488, %v3612
    %v3614 = vpop.f32.mrf.mxu0
    %v3615 = vadd.f32 %v3490, %v3614
    %3616 = vdwg.mxu0
    %v3617 = vld [vmem:[#allocation2] sm:$0xe]
    %v3618 = vld [vmem:[#allocation2 + $0x8] sm:$0xe]
    %v3619 = vld [vmem:[#allocation2 + $0x10] sm:$0xe]
    %v3620 = vld [vmem:[#allocation2 + $0x18] sm:$0xe]
    %v3621 = vld [vmem:[#allocation2 + $0x20] sm:$0xe]
    %v3622 = vld [vmem:[#allocation2 + $0x28] sm:$0xe]
    %v3623 = vld [vmem:[#allocation2 + $0x30] sm:$0xe]
    %v3624 = vld [vmem:[#allocation2 + $0x38] sm:$0xe]
    %v3625 = vld [vmem:[#allocation2 + $0x50] sm:$0xe]
    %v3626 = vld [vmem:[#allocation2 + $0x58] sm:$0xe]
    %v3627 = vld [vmem:[#allocation2 + $0x60] sm:$0xe]
    %v3628 = vld [vmem:[#allocation2 + $0x68] sm:$0xe]
    %v3629 = vld [vmem:[#allocation2 + $0x70] sm:$0xe]
    %v3630 = vld [vmem:[#allocation2 + $0x78] sm:$0xe]
    %v3631 = vld [vmem:[#allocation2 + $0x80] sm:$0xe]
    %v3632 = vld [vmem:[#allocation2 + $0x88] sm:$0xe]
    %v3665 = vrot.slane %v3617, 5
    %v3666 = vrot.slane %v3665, 4
    %v3667 = vrot.slane %v3138, 5
    %v3668 = vsel %vm1015, %v3666, %v3667
    %v3669 = vrot.slane %v3618, 5
    %v3670 = vrot.slane %v3669, 4
    %v3671 = vrot.slane %v3139, 5
    %v3672 = vsel %vm1015, %v3670, %v3671
    %v3673 = vrot.slane %v3619, 5
    %v3674 = vrot.slane %v3673, 4
    %v3675 = vrot.slane %v3140, 5
    %v3676 = vsel %vm1015, %v3674, %v3675
    %v3677 = vrot.slane %v3620, 5
    %v3678 = vrot.slane %v3677, 4
    %v3679 = vrot.slane %v3141, 5
    %v3680 = vsel %vm1015, %v3678, %v3679
    %v3681 = vrot.slane %v3621, 5
    %v3682 = vrot.slane %v3681, 4
    %v3683 = vrot.slane %v3142, 5
    %v3684 = vsel %vm1015, %v3682, %v3683
    %v3685 = vrot.slane %v3622, 5
    %v3686 = vrot.slane %v3685, 4
    %v3687 = vrot.slane %v3143, 5
    %v3688 = vsel %vm1015, %v3686, %v3687
    %v3689 = vrot.slane %v3623, 5
    %v3690 = vrot.slane %v3689, 4
    %v3691 = vrot.slane %v3144, 5
    %v3692 = vsel %vm1015, %v3690, %v3691
    %v3693 = vrot.slane %v3624, 5
    %v3694 = vrot.slane %v3693, 4
    %v3695 = vrot.slane %v3145, 5
    %v3696 = vsel %vm1015, %v3694, %v3695
    %v3697 = vrot.slane %v3625, 5
    %v3698 = vrot.slane %v3697, 4
    %v3699 = vrot.slane %v3146, 5
    %v3700 = vsel %vm1015, %v3698, %v3699
    %v3701 = vrot.slane %v3626, 5
    %v3702 = vrot.slane %v3701, 4
    %v3703 = vrot.slane %v3147, 5
    %v3704 = vsel %vm1015, %v3702, %v3703
    %v3705 = vrot.slane %v3627, 5
    %v3706 = vrot.slane %v3705, 4
    %v3707 = vrot.slane %v3148, 5
    %v3708 = vsel %vm1015, %v3706, %v3707
    %v3709 = vrot.slane %v3628, 5
    %v3710 = vrot.slane %v3709, 4
    %v3711 = vrot.slane %v3149, 5
    %v3712 = vsel %vm1015, %v3710, %v3711
    %v3713 = vrot.slane %v3629, 5
    %v3714 = vrot.slane %v3713, 4
    %v3715 = vrot.slane %v3150, 5
    %v3716 = vsel %vm1015, %v3714, %v3715
    %v3717 = vrot.slane %v3630, 5
    %v3718 = vrot.slane %v3717, 4
    %v3719 = vrot.slane %v3151, 5
    %v3720 = vsel %vm1015, %v3718, %v3719
    %v3721 = vrot.slane %v3631, 5
    %v3722 = vrot.slane %v3721, 4
    %v3723 = vrot.slane %v3152, 5
    %v3724 = vsel %vm1015, %v3722, %v3723
    %v3725 = vrot.slane %v3632, 5
    %v3726 = vrot.slane %v3725, 4
    %v3727 = vrot.slane %v3153, 5
    %v3728 = vsel %vm1015, %v3726, %v3727
    %s3729 = scalar_lea.vmem [#allocation8], 32
    %v3730 = vld [vmem:[%s3729] sm:$0xf]
    %v3731 = vld [vmem:[%s3729 + $0x4] sm:$0xf]
    %v3732 = vld [vmem:[%s3729 + $0x8] sm:$0xf]
    %v3733 = vld [vmem:[%s3729 + $0xc] sm:$0xf]
    %v3734 = vunpack.c.l.b16 %v3668
    %v3735 = vunpack.c.l.b16 %v3672
    %v3736 = vunpack.c.l.b16 %v3676
    %v3737 = vunpack.c.l.b16 %v3680
    %v3738 = vunpack.c.l.b16 %v3684
    %v3739 = vunpack.c.l.b16 %v3688
    %v3740 = vunpack.c.l.b16 %v3692
    %v3741 = vunpack.c.l.b16 %v3696
    %v3742 = vunpack.c.l.b16 %v3700
    %v3743 = vunpack.c.l.b16 %v3704
    %v3744 = vunpack.c.l.b16 %v3708
    %v3745 = vunpack.c.l.b16 %v3712
    %v3746 = vunpack.c.l.b16 %v3716
    %v3747 = vunpack.c.l.b16 %v3720
    %v3748 = vunpack.c.l.b16 %v3724
    %v3749 = vunpack.c.l.b16 %v3728
    %v3750 = vpack.c.b16 %v3735, %v3734
    %v3751 = vpack.c.b16 %v3737, %v3736
    %v3752 = vpack.c.b16 %v3739, %v3738
    %v3753 = vpack.c.b16 %v3741, %v3740
    %v3754 = vpack.c.b16 %v3743, %v3742
    %v3755 = vpack.c.b16 %v3745, %v3744
    %v3756 = vpack.c.b16 %v3747, %v3746
    %v3757 = vpack.c.b16 %v3749, %v3748
    %v3762 = vunpack.c.l.b16 %v3730
    %v3763 = vunpack.c.l.b16 %v3731
    %v3764 = vunpack.c.l.b16 %v3732
    %v3765 = vunpack.c.l.b16 %v3733
    %v3766 = vpack.c.b16 %v3763, %v3762
    %v3767 = vpack.c.b16 %v3765, %v3764
    %v3771 = vsel %vm766, %v3750, 0
    %v3774 = vsel %vm766, %v3751, 0
    %v3777 = vsel %vm766, %v3752, 0
    %v3780 = vsel %vm766, %v3753, 0
    %v3783 = vsel %vm766, %v3754, 0
    %v3786 = vsel %vm766, %v3755, 0
    %v3789 = vsel %vm766, %v3756, 0
    %v3792 = vsel %vm766, %v3757, 0
    %3794 = vmatpush.bf16.msra.mxu0 0
    %3795 = vmatpush.bf16.msra.mxu0 0
    %3796 = vmatpush.bf16.msra.mxu0 0
    %3797 = vmatpush.bf16.msra.mxu0 0
    %3798 = vmatpush.bf16.msra.mxu0 0
    %3799 = vmatpush.bf16.msra.mxu0 0
    %3800 = vmatpush.bf16.msra.mxu0 %v3767
    %3801 = vmatpush.bf16.msra.mxu0 %v3766
    %3802 = vmatmul.bf16.gmra.mxu0 %v3771
    %v3803 = vpop.f32.mrf.mxu0
    %v3804 = vadd.f32 0.0, %v3803
    %v3805 = vpop.f32.mrf.mxu0
    %v3806 = vadd.f32 0.0, %v3805
    %3807 = vmatmul.bf16.gmra.mxu0 %v3774
    %v3808 = vpop.f32.mrf.mxu0
    %v3809 = vadd.f32 0.0, %v3808
    %v3810 = vpop.f32.mrf.mxu0
    %v3811 = vadd.f32 0.0, %v3810
    %3812 = vmatmul.bf16.gmra.mxu0 %v3777
    %v3813 = vpop.f32.mrf.mxu0
    %v3814 = vadd.f32 0.0, %v3813
    %v3815 = vpop.f32.mrf.mxu0
    %v3816 = vadd.f32 0.0, %v3815
    %3817 = vmatmul.bf16.gmra.mxu0 %v3780
    %v3818 = vpop.f32.mrf.mxu0
    %v3819 = vadd.f32 0.0, %v3818
    %v3820 = vpop.f32.mrf.mxu0
    %v3821 = vadd.f32 0.0, %v3820
    %3822 = vmatmul.bf16.gmra.mxu0 %v3783
    %v3823 = vpop.f32.mrf.mxu0
    %v3824 = vadd.f32 0.0, %v3823
    %v3825 = vpop.f32.mrf.mxu0
    %v3826 = vadd.f32 0.0, %v3825
    %3827 = vmatmul.bf16.gmra.mxu0 %v3786
    %v3828 = vpop.f32.mrf.mxu0
    %v3829 = vadd.f32 0.0, %v3828
    %v3830 = vpop.f32.mrf.mxu0
    %v3831 = vadd.f32 0.0, %v3830
    %3832 = vmatmul.bf16.gmra.mxu0 %v3789
    %v3833 = vpop.f32.mrf.mxu0
    %v3834 = vadd.f32 0.0, %v3833
    %v3835 = vpop.f32.mrf.mxu0
    %v3836 = vadd.f32 0.0, %v3835
    %3837 = vmatmul.bf16.gmra.mxu0 %v3792
    %v3838 = vpop.f32.mrf.mxu0
    %v3839 = vadd.f32 0.0, %v3838
    %v3840 = vpop.f32.mrf.mxu0
    %v3841 = vadd.f32 0.0, %v3840
    %3842 = vdwg.mxu0
    %v3843 = vadd.f32 %v3578, %v3804
    %v3844 = vadd.f32 %v3580, %v3806
    %v3845 = vadd.f32 %v3583, %v3809
    %v3846 = vadd.f32 %v3585, %v3811
    %v3847 = vadd.f32 %v3588, %v3814
    %v3848 = vadd.f32 %v3590, %v3816
    %v3849 = vadd.f32 %v3593, %v3819
    %v3850 = vadd.f32 %v3595, %v3821
    %v3851 = vadd.f32 %v3598, %v3824
    %v3852 = vadd.f32 %v3600, %v3826
    %v3853 = vadd.f32 %v3603, %v3829
    %v3854 = vadd.f32 %v3605, %v3831
    %v3855 = vadd.f32 %v3608, %v3834
    %v3856 = vadd.f32 %v3610, %v3836
    %v3857 = vadd.f32 %v3613, %v3839
    %v3858 = vadd.f32 %v3615, %v3841
    %v3859 = vld [vmem:[%s86] sm:$0xf]
    %v3860 = vld [vmem:[%s86 + $0x8] sm:$0xf]
    %v3861 = vld [vmem:[%s86 + $0x10] sm:$0xf]
    %v3862 = vld [vmem:[%s86 + $0x18] sm:$0xf]
    %v3863 = vld [vmem:[%s86 + $0x20] sm:$0xf]
    %v3864 = vld [vmem:[%s86 + $0x28] sm:$0xf]
    %v3865 = vld [vmem:[%s86 + $0x30] sm:$0xf]
    %v3866 = vld [vmem:[%s86 + $0x38] sm:$0xf]
    %v3867 = vld [vmem:[%s86 + $0x50] sm:$0xf]
    %v3868 = vld [vmem:[%s86 + $0x58] sm:$0xf]
    %v3869 = vld [vmem:[%s86 + $0x60] sm:$0xf]
    %v3870 = vld [vmem:[%s86 + $0x68] sm:$0xf]
    %v3871 = vld [vmem:[%s86 + $0x70] sm:$0xf]
    %v3872 = vld [vmem:[%s86 + $0x78] sm:$0xf]
    %v3873 = vld [vmem:[%s86 + $0x80] sm:$0xf]
    %v3874 = vld [vmem:[%s86 + $0x88] sm:$0xf]
    %s3875 = scalar_lea.vmem [#allocation8], 48
    %v3876 = vld [vmem:[%s3875] sm:$0xf]
    %v3877 = vld [vmem:[%s3875 + $0x4] sm:$0xf]
    %v3878 = vld [vmem:[%s3875 + $0x8] sm:$0xf]
    %v3879 = vld [vmem:[%s3875 + $0xc] sm:$0xf]
    %v3896 = vunpack.c.l.b16 %v3859
    %v3897 = vunpack.c.l.b16 %v3860
    %v3898 = vunpack.c.l.b16 %v3861
    %v3899 = vunpack.c.l.b16 %v3862
    %v3900 = vunpack.c.l.b16 %v3863
    %v3901 = vunpack.c.l.b16 %v3864
    %v3902 = vunpack.c.l.b16 %v3865
    %v3903 = vunpack.c.l.b16 %v3866
    %v3904 = vunpack.c.l.b16 %v3867
    %v3905 = vunpack.c.l.b16 %v3868
    %v3906 = vunpack.c.l.b16 %v3869
    %v3907 = vunpack.c.l.b16 %v3870
    %v3908 = vunpack.c.l.b16 %v3871
    %v3909 = vunpack.c.l.b16 %v3872
    %v3910 = vunpack.c.l.b16 %v3873
    %v3911 = vunpack.c.l.b16 %v3874
    %v3912 = vpack.c.b16 %v3897, %v3896
    %v3913 = vpack.c.b16 %v3899, %v3898
    %v3914 = vpack.c.b16 %v3901, %v3900
    %v3915 = vpack.c.b16 %v3903, %v3902
    %v3916 = vpack.c.b16 %v3905, %v3904
    %v3917 = vpack.c.b16 %v3907, %v3906
    %v3918 = vpack.c.b16 %v3909, %v3908
    %v3919 = vpack.c.b16 %v3911, %v3910
    %v3924 = vunpack.c.l.b16 %v3876
    %v3925 = vunpack.c.l.b16 %v3877
    %v3926 = vunpack.c.l.b16 %v3878
    %v3927 = vunpack.c.l.b16 %v3879
    %v3928 = vpack.c.b16 %v3925, %v3924
    %v3929 = vpack.c.b16 %v3927, %v3926
    %v3933 = vsel %vm766, %v3912, 0
    %v3936 = vsel %vm766, %v3913, 0
    %v3939 = vsel %vm766, %v3914, 0
    %v3942 = vsel %vm766, %v3915, 0
    %v3945 = vsel %vm766, %v3916, 0
    %v3948 = vsel %vm766, %v3917, 0
    %v3951 = vsel %vm766, %v3918, 0
    %v3954 = vsel %vm766, %v3919, 0
    %3956 = vmatpush.bf16.msra.mxu0 0
    %3957 = vmatpush.bf16.msra.mxu0 0
    %3958 = vmatpush.bf16.msra.mxu0 0
    %3959 = vmatpush.bf16.msra.mxu0 0
    %3960 = vmatpush.bf16.msra.mxu0 0
    %3961 = vmatpush.bf16.msra.mxu0 0
    %3962 = vmatpush.bf16.msra.mxu0 %v3929
    %3963 = vmatpush.bf16.msra.mxu0 %v3928
    %3964 = vmatmul.bf16.gmra.mxu0 %v3933
    %v3965 = vpop.f32.mrf.mxu0
    %v3966 = vadd.f32 0.0, %v3965
    %v3967 = vpop.f32.mrf.mxu0
    %v3968 = vadd.f32 0.0, %v3967
    %3969 = vmatmul.bf16.gmra.mxu0 %v3936
    %v3970 = vpop.f32.mrf.mxu0
    %v3971 = vadd.f32 0.0, %v3970
    %v3972 = vpop.f32.mrf.mxu0
    %v3973 = vadd.f32 0.0, %v3972
    %3974 = vmatmul.bf16.gmra.mxu0 %v3939
    %v3975 = vpop.f32.mrf.mxu0
    %v3976 = vadd.f32 0.0, %v3975
    %v3977 = vpop.f32.mrf.mxu0
    %v3978 = vadd.f32 0.0, %v3977
    %3979 = vmatmul.bf16.gmra.mxu0 %v3942
    %v3980 = vpop.f32.mrf.mxu0
    %v3981 = vadd.f32 0.0, %v3980
    %v3982 = vpop.f32.mrf.mxu0
    %v3983 = vadd.f32 0.0, %v3982
    %3984 = vmatmul.bf16.gmra.mxu0 %v3945
    %v3985 = vpop.f32.mrf.mxu0
    %v3986 = vadd.f32 0.0, %v3985
    %v3987 = vpop.f32.mrf.mxu0
    %v3988 = vadd.f32 0.0, %v3987
    %3989 = vmatmul.bf16.gmra.mxu0 %v3948
    %v3990 = vpop.f32.mrf.mxu0
    %v3991 = vadd.f32 0.0, %v3990
    %v3992 = vpop.f32.mrf.mxu0
    %v3993 = vadd.f32 0.0, %v3992
    %3994 = vmatmul.bf16.gmra.mxu0 %v3951
    %v3995 = vpop.f32.mrf.mxu0
    %v3996 = vadd.f32 0.0, %v3995
    %v3997 = vpop.f32.mrf.mxu0
    %v3998 = vadd.f32 0.0, %v3997
    %3999 = vmatmul.bf16.gmra.mxu0 %v3954
    %v4000 = vpop.f32.mrf.mxu0
    %v4001 = vadd.f32 0.0, %v4000
    %v4002 = vpop.f32.mrf.mxu0
    %v4003 = vadd.f32 0.0, %v4002
    %4004 = vdwg.mxu0
    %v4005 = vadd.f32 %v3843, %v3966
    %v4006 = vadd.f32 %v3844, %v3968
    %v4007 = vadd.f32 %v3845, %v3971
    %v4008 = vadd.f32 %v3846, %v3973
    %v4009 = vadd.f32 %v3847, %v3976
    %v4010 = vadd.f32 %v3848, %v3978
    %v4011 = vadd.f32 %v3849, %v3981
    %v4012 = vadd.f32 %v3850, %v3983
    %v4013 = vadd.f32 %v3851, %v3986
    %v4014 = vadd.f32 %v3852, %v3988
    %v4015 = vadd.f32 %v3853, %v3991
    %v4016 = vadd.f32 %v3854, %v3993
    %v4017 = vadd.f32 %v3855, %v3996
    %v4018 = vadd.f32 %v3856, %v3998
    %v4019 = vadd.f32 %v3857, %v4001
    %v4020 = vadd.f32 %v3858, %v4003
    %v4021 = vld [vmem:[%s86] sm:$0xf]
    %v4022 = vld [vmem:[%s86 + $0x4] sm:$0x1]
    %v4023 = vld [vmem:[%s86 + $0x8] sm:$0xf]
    %v4024 = vld [vmem:[%s86 + $0xc] sm:$0x1]
    %v4025 = vld [vmem:[%s86 + $0x10] sm:$0xf]
    %v4026 = vld [vmem:[%s86 + $0x14] sm:$0x1]
    %v4027 = vld [vmem:[%s86 + $0x18] sm:$0xf]
    %v4028 = vld [vmem:[%s86 + $0x1c] sm:$0x1]
    %v4029 = vld [vmem:[%s86 + $0x20] sm:$0xf]
    %v4030 = vld [vmem:[%s86 + $0x24] sm:$0x1]
    %v4031 = vld [vmem:[%s86 + $0x28] sm:$0xf]
    %v4032 = vld [vmem:[%s86 + $0x2c] sm:$0x1]
    %v4033 = vld [vmem:[%s86 + $0x30] sm:$0xf]
    %v4034 = vld [vmem:[%s86 + $0x34] sm:$0x1]
    %v4035 = vld [vmem:[%s86 + $0x38] sm:$0xf]
    %v4036 = vld [vmem:[%s86 + $0x3c] sm:$0x1]
    %v4037 = vld [vmem:[%s86 + $0x50] sm:$0xf]
    %v4038 = vld [vmem:[%s86 + $0x54] sm:$0x1]
    %v4039 = vld [vmem:[%s86 + $0x58] sm:$0xf]
    %v4040 = vld [vmem:[%s86 + $0x5c] sm:$0x1]
    %v4041 = vld [vmem:[%s86 + $0x60] sm:$0xf]
    %v4042 = vld [vmem:[%s86 + $0x64] sm:$0x1]
    %v4043 = vld [vmem:[%s86 + $0x68] sm:$0xf]
    %v4044 = vld [vmem:[%s86 + $0x6c] sm:$0x1]
    %v4045 = vld [vmem:[%s86 + $0x70] sm:$0xf]
    %v4046 = vld [vmem:[%s86 + $0x74] sm:$0x1]
    %v4047 = vld [vmem:[%s86 + $0x78] sm:$0xf]
    %v4048 = vld [vmem:[%s86 + $0x7c] sm:$0x1]
    %v4049 = vld [vmem:[%s86 + $0x80] sm:$0xf]
    %v4050 = vld [vmem:[%s86 + $0x84] sm:$0x1]
    %v4051 = vld [vmem:[%s86 + $0x88] sm:$0xf]
    %v4052 = vld [vmem:[%s86 + $0x8c] sm:$0x1]
    %v4054 = vshrl.u32 %v4021, 16
    %v4056 = vrot.slane %v4054, 4
    %v4057 = vshll.u32 %v4021, 16
    %v4059 = vrot.slane %v4057, 5
    %v4060 = vor.u32 %v4056, %v4059
    %v4061 = vrot.slane %v4060, 4
    %v4063 = vshll.u32 %v4022, 16
    %v4065 = vrot.slane %v4063, 5
    %v4066 = vsel %vm500, %v4061, %v4065
    %v4068 = vshrl.u32 %v4023, 16
    %v4070 = vrot.slane %v4068, 4
    %v4071 = vshll.u32 %v4023, 16
    %v4073 = vrot.slane %v4071, 5
    %v4074 = vor.u32 %v4070, %v4073
    %v4075 = vrot.slane %v4074, 4
    %v4077 = vshll.u32 %v4024, 16
    %v4079 = vrot.slane %v4077, 5
    %v4080 = vsel %vm500, %v4075, %v4079
    %v4082 = vshrl.u32 %v4025, 16
    %v4084 = vrot.slane %v4082, 4
    %v4085 = vshll.u32 %v4025, 16
    %v4087 = vrot.slane %v4085, 5
    %v4088 = vor.u32 %v4084, %v4087
    %v4089 = vrot.slane %v4088, 4
    %v4091 = vshll.u32 %v4026, 16
    %v4093 = vrot.slane %v4091, 5
    %v4094 = vsel %vm500, %v4089, %v4093
    %v4096 = vshrl.u32 %v4027, 16
    %v4098 = vrot.slane %v4096, 4
    %v4099 = vshll.u32 %v4027, 16
    %v4101 = vrot.slane %v4099, 5
    %v4102 = vor.u32 %v4098, %v4101
    %v4103 = vrot.slane %v4102, 4
    %v4105 = vshll.u32 %v4028, 16
    %v4107 = vrot.slane %v4105, 5
    %v4108 = vsel %vm500, %v4103, %v4107
    %v4110 = vshrl.u32 %v4029, 16
    %v4112 = vrot.slane %v4110, 4
    %v4113 = vshll.u32 %v4029, 16
    %v4115 = vrot.slane %v4113, 5
    %v4116 = vor.u32 %v4112, %v4115
    %v4117 = vrot.slane %v4116, 4
    %v4119 = vshll.u32 %v4030, 16
    %v4121 = vrot.slane %v4119, 5
    %v4122 = vsel %vm500, %v4117, %v4121
    %v4124 = vshrl.u32 %v4031, 16
    %v4126 = vrot.slane %v4124, 4
    %v4127 = vshll.u32 %v4031, 16
    %v4129 = vrot.slane %v4127, 5
    %v4130 = vor.u32 %v4126, %v4129
    %v4131 = vrot.slane %v4130, 4
    %v4133 = vshll.u32 %v4032, 16
    %v4135 = vrot.slane %v4133, 5
    %v4136 = vsel %vm500, %v4131, %v4135
    %v4138 = vshrl.u32 %v4033, 16
    %v4140 = vrot.slane %v4138, 4
    %v4141 = vshll.u32 %v4033, 16
    %v4143 = vrot.slane %v4141, 5
    %v4144 = vor.u32 %v4140, %v4143
    %v4145 = vrot.slane %v4144, 4
    %v4147 = vshll.u32 %v4034, 16
    %v4149 = vrot.slane %v4147, 5
    %v4150 = vsel %vm500, %v4145, %v4149
    %v4152 = vshrl.u32 %v4035, 16
    %v4154 = vrot.slane %v4152, 4
    %v4155 = vshll.u32 %v4035, 16
    %v4157 = vrot.slane %v4155, 5
    %v4158 = vor.u32 %v4154, %v4157
    %v4159 = vrot.slane %v4158, 4
    %v4161 = vshll.u32 %v4036, 16
    %v4163 = vrot.slane %v4161, 5
    %v4164 = vsel %vm500, %v4159, %v4163
    %v4166 = vshrl.u32 %v4037, 16
    %v4168 = vrot.slane %v4166, 4
    %v4169 = vshll.u32 %v4037, 16
    %v4171 = vrot.slane %v4169, 5
    %v4172 = vor.u32 %v4168, %v4171
    %v4173 = vrot.slane %v4172, 4
    %v4175 = vshll.u32 %v4038, 16
    %v4177 = vrot.slane %v4175, 5
    %v4178 = vsel %vm500, %v4173, %v4177
    %v4180 = vshrl.u32 %v4039, 16
    %v4182 = vrot.slane %v4180, 4
    %v4183 = vshll.u32 %v4039, 16
    %v4185 = vrot.slane %v4183, 5
    %v4186 = vor.u32 %v4182, %v4185
    %v4187 = vrot.slane %v4186, 4
    %v4189 = vshll.u32 %v4040, 16
    %v4191 = vrot.slane %v4189, 5
    %v4192 = vsel %vm500, %v4187, %v4191
    %v4194 = vshrl.u32 %v4041, 16
    %v4196 = vrot.slane %v4194, 4
    %v4197 = vshll.u32 %v4041, 16
    %v4199 = vrot.slane %v4197, 5
    %v4200 = vor.u32 %v4196, %v4199
    %v4201 = vrot.slane %v4200, 4
    %v4203 = vshll.u32 %v4042, 16
    %v4205 = vrot.slane %v4203, 5
    %v4206 = vsel %vm500, %v4201, %v4205
    %v4208 = vshrl.u32 %v4043, 16
    %v4210 = vrot.slane %v4208, 4
    %v4211 = vshll.u32 %v4043, 16
    %v4213 = vrot.slane %v4211, 5
    %v4214 = vor.u32 %v4210, %v4213
    %v4215 = vrot.slane %v4214, 4
    %v4217 = vshll.u32 %v4044, 16
    %v4219 = vrot.slane %v4217, 5
    %v4220 = vsel %vm500, %v4215, %v4219
    %v4222 = vshrl.u32 %v4045, 16
    %v4224 = vrot.slane %v4222, 4
    %v4225 = vshll.u32 %v4045, 16
    %v4227 = vrot.slane %v4225, 5
    %v4228 = vor.u32 %v4224, %v4227
    %v4229 = vrot.slane %v4228, 4
    %v4231 = vshll.u32 %v4046, 16
    %v4233 = vrot.slane %v4231, 5
    %v4234 = vsel %vm500, %v4229, %v4233
    %v4236 = vshrl.u32 %v4047, 16
    %v4238 = vrot.slane %v4236, 4
    %v4239 = vshll.u32 %v4047, 16
    %v4241 = vrot.slane %v4239, 5
    %v4242 = vor.u32 %v4238, %v4241
    %v4243 = vrot.slane %v4242, 4
    %v4245 = vshll.u32 %v4048, 16
    %v4247 = vrot.slane %v4245, 5
    %v4248 = vsel %vm500, %v4243, %v4247
    %v4250 = vshrl.u32 %v4049, 16
    %v4252 = vrot.slane %v4250, 4
    %v4253 = vshll.u32 %v4049, 16
    %v4255 = vrot.slane %v4253, 5
    %v4256 = vor.u32 %v4252, %v4255
    %v4257 = vrot.slane %v4256, 4
    %v4259 = vshll.u32 %v4050, 16
    %v4261 = vrot.slane %v4259, 5
    %v4262 = vsel %vm500, %v4257, %v4261
    %v4264 = vshrl.u32 %v4051, 16
    %v4266 = vrot.slane %v4264, 4
    %v4267 = vshll.u32 %v4051, 16
    %v4269 = vrot.slane %v4267, 5
    %v4270 = vor.u32 %v4266, %v4269
    %v4271 = vrot.slane %v4270, 4
    %v4273 = vshll.u32 %v4052, 16
    %v4275 = vrot.slane %v4273, 5
    %v4276 = vsel %vm500, %v4271, %v4275
    %s4277 = scalar_lea.vmem [#allocation8], 64
    %v4278 = vld [vmem:[%s4277] sm:$0xf]
    %v4279 = vld [vmem:[%s4277 + $0x4] sm:$0xf]
    %v4280 = vld [vmem:[%s4277 + $0x8] sm:$0xf]
    %v4281 = vld [vmem:[%s4277 + $0xc] sm:$0xf]
    %v4282 = vunpack.c.l.b16 %v4066
    %v4283 = vunpack.c.l.b16 %v4080
    %v4284 = vunpack.c.l.b16 %v4094
    %v4285 = vunpack.c.l.b16 %v4108
    %v4286 = vunpack.c.l.b16 %v4122
    %v4287 = vunpack.c.l.b16 %v4136
    %v4288 = vunpack.c.l.b16 %v4150
    %v4289 = vunpack.c.l.b16 %v4164
    %v4290 = vunpack.c.l.b16 %v4178
    %v4291 = vunpack.c.l.b16 %v4192
    %v4292 = vunpack.c.l.b16 %v4206
    %v4293 = vunpack.c.l.b16 %v4220
    %v4294 = vunpack.c.l.b16 %v4234
    %v4295 = vunpack.c.l.b16 %v4248
    %v4296 = vunpack.c.l.b16 %v4262
    %v4297 = vunpack.c.l.b16 %v4276
    %v4298 = vpack.c.b16 %v4283, %v4282
    %v4299 = vpack.c.b16 %v4285, %v4284
    %v4300 = vpack.c.b16 %v4287, %v4286
    %v4301 = vpack.c.b16 %v4289, %v4288
    %v4302 = vpack.c.b16 %v4291, %v4290
    %v4303 = vpack.c.b16 %v4293, %v4292
    %v4304 = vpack.c.b16 %v4295, %v4294
    %v4305 = vpack.c.b16 %v4297, %v4296
    %v4310 = vunpack.c.l.b16 %v4278
    %v4311 = vunpack.c.l.b16 %v4279
    %v4312 = vunpack.c.l.b16 %v4280
    %v4313 = vunpack.c.l.b16 %v4281
    %v4314 = vpack.c.b16 %v4311, %v4310
    %v4315 = vpack.c.b16 %v4313, %v4312
    %v4319 = vsel %vm766, %v4298, 0
    %v4322 = vsel %vm766, %v4299, 0
    %v4325 = vsel %vm766, %v4300, 0
    %v4328 = vsel %vm766, %v4301, 0
    %v4331 = vsel %vm766, %v4302, 0
    %v4334 = vsel %vm766, %v4303, 0
    %v4337 = vsel %vm766, %v4304, 0
    %v4340 = vsel %vm766, %v4305, 0
    %4342 = vmatpush.bf16.msra.mxu0 0
    %4343 = vmatpush.bf16.msra.mxu0 0
    %4344 = vmatpush.bf16.msra.mxu0 0
    %4345 = vmatpush.bf16.msra.mxu0 0
    %4346 = vmatpush.bf16.msra.mxu0 0
    %4347 = vmatpush.bf16.msra.mxu0 0
    %4348 = vmatpush.bf16.msra.mxu0 %v4315
    %4349 = vmatpush.bf16.msra.mxu0 %v4314
    %4350 = vmatmul.bf16.gmra.mxu0 %v4319
    %v4351 = vpop.f32.mrf.mxu0
    %v4352 = vadd.f32 0.0, %v4351
    %v4353 = vpop.f32.mrf.mxu0
    %v4354 = vadd.f32 0.0, %v4353
    %4355 = vmatmul.bf16.gmra.mxu0 %v4322
    %v4356 = vpop.f32.mrf.mxu0
    %v4357 = vadd.f32 0.0, %v4356
    %v4358 = vpop.f32.mrf.mxu0
    %v4359 = vadd.f32 0.0, %v4358
    %4360 = vmatmul.bf16.gmra.mxu0 %v4325
    %v4361 = vpop.f32.mrf.mxu0
    %v4362 = vadd.f32 0.0, %v4361
    %v4363 = vpop.f32.mrf.mxu0
    %v4364 = vadd.f32 0.0, %v4363
    %4365 = vmatmul.bf16.gmra.mxu0 %v4328
    %v4366 = vpop.f32.mrf.mxu0
    %v4367 = vadd.f32 0.0, %v4366
    %v4368 = vpop.f32.mrf.mxu0
    %v4369 = vadd.f32 0.0, %v4368
    %4370 = vmatmul.bf16.gmra.mxu0 %v4331
    %v4371 = vpop.f32.mrf.mxu0
    %v4372 = vadd.f32 0.0, %v4371
    %v4373 = vpop.f32.mrf.mxu0
    %v4374 = vadd.f32 0.0, %v4373
    %4375 = vmatmul.bf16.gmra.mxu0 %v4334
    %v4376 = vpop.f32.mrf.mxu0
    %v4377 = vadd.f32 0.0, %v4376
    %v4378 = vpop.f32.mrf.mxu0
    %v4379 = vadd.f32 0.0, %v4378
    %4380 = vmatmul.bf16.gmra.mxu0 %v4337
    %v4381 = vpop.f32.mrf.mxu0
    %v4382 = vadd.f32 0.0, %v4381
    %v4383 = vpop.f32.mrf.mxu0
    %v4384 = vadd.f32 0.0, %v4383
    %4385 = vmatmul.bf16.gmra.mxu0 %v4340
    %v4386 = vpop.f32.mrf.mxu0
    %v4387 = vadd.f32 0.0, %v4386
    %v4388 = vpop.f32.mrf.mxu0
    %v4389 = vadd.f32 0.0, %v4388
    %4390 = vdwg.mxu0
    %v4391 = vadd.f32 %v4005, %v4352
    %v4392 = vadd.f32 %v4006, %v4354
    %v4393 = vadd.f32 %v4007, %v4357
    %v4394 = vadd.f32 %v4008, %v4359
    %v4395 = vadd.f32 %v4009, %v4362
    %v4396 = vadd.f32 %v4010, %v4364
    %v4397 = vadd.f32 %v4011, %v4367
    %v4398 = vadd.f32 %v4012, %v4369
    %v4399 = vadd.f32 %v4013, %v4372
    %v4400 = vadd.f32 %v4014, %v4374
    %v4401 = vadd.f32 %v4015, %v4377
    %v4402 = vadd.f32 %v4016, %v4379
    %v4403 = vadd.f32 %v4017, %v4382
    %v4404 = vadd.f32 %v4018, %v4384
    %v4405 = vadd.f32 %v4019, %v4387
    %v4406 = vadd.f32 %v4020, %v4389
    %v4407 = vld [vmem:[%s86] sm:$0xe]
    %v4408 = vld [vmem:[%s86 + $0x8] sm:$0xe]
    %v4409 = vld [vmem:[%s86 + $0x10] sm:$0xe]
    %v4410 = vld [vmem:[%s86 + $0x18] sm:$0xe]
    %v4411 = vld [vmem:[%s86 + $0x20] sm:$0xe]
    %v4412 = vld [vmem:[%s86 + $0x28] sm:$0xe]
    %v4413 = vld [vmem:[%s86 + $0x30] sm:$0xe]
    %v4414 = vld [vmem:[%s86 + $0x38] sm:$0xe]
    %v4415 = vld [vmem:[%s86 + $0x50] sm:$0xe]
    %v4416 = vld [vmem:[%s86 + $0x58] sm:$0xe]
    %v4417 = vld [vmem:[%s86 + $0x60] sm:$0xe]
    %v4418 = vld [vmem:[%s86 + $0x68] sm:$0xe]
    %v4419 = vld [vmem:[%s86 + $0x70] sm:$0xe]
    %v4420 = vld [vmem:[%s86 + $0x78] sm:$0xe]
    %v4421 = vld [vmem:[%s86 + $0x80] sm:$0xe]
    %v4422 = vld [vmem:[%s86 + $0x88] sm:$0xe]
    %v4455 = vrot.slane %v4407, 5
    %v4456 = vrot.slane %v4455, 4
    %v4457 = vrot.slane %v4022, 5
    %v4458 = vsel %vm1015, %v4456, %v4457
    %v4459 = vrot.slane %v4408, 5
    %v4460 = vrot.slane %v4459, 4
    %v4461 = vrot.slane %v4024, 5
    %v4462 = vsel %vm1015, %v4460, %v4461
    %v4463 = vrot.slane %v4409, 5
    %v4464 = vrot.slane %v4463, 4
    %v4465 = vrot.slane %v4026, 5
    %v4466 = vsel %vm1015, %v4464, %v4465
    %v4467 = vrot.slane %v4410, 5
    %v4468 = vrot.slane %v4467, 4
    %v4469 = vrot.slane %v4028, 5
    %v4470 = vsel %vm1015, %v4468, %v4469
    %v4471 = vrot.slane %v4411, 5
    %v4472 = vrot.slane %v4471, 4
    %v4473 = vrot.slane %v4030, 5
    %v4474 = vsel %vm1015, %v4472, %v4473
    %v4475 = vrot.slane %v4412, 5
    %v4476 = vrot.slane %v4475, 4
    %v4477 = vrot.slane %v4032, 5
    %v4478 = vsel %vm1015, %v4476, %v4477
    %v4479 = vrot.slane %v4413, 5
    %v4480 = vrot.slane %v4479, 4
    %v4481 = vrot.slane %v4034, 5
    %v4482 = vsel %vm1015, %v4480, %v4481
    %v4483 = vrot.slane %v4414, 5
    %v4484 = vrot.slane %v4483, 4
    %v4485 = vrot.slane %v4036, 5
    %v4486 = vsel %vm1015, %v4484, %v4485
    %v4487 = vrot.slane %v4415, 5
    %v4488 = vrot.slane %v4487, 4
    %v4489 = vrot.slane %v4038, 5
    %v4490 = vsel %vm1015, %v4488, %v4489
    %v4491 = vrot.slane %v4416, 5
    %v4492 = vrot.slane %v4491, 4
    %v4493 = vrot.slane %v4040, 5
    %v4494 = vsel %vm1015, %v4492, %v4493
    %v4495 = vrot.slane %v4417, 5
    %v4496 = vrot.slane %v4495, 4
    %v4497 = vrot.slane %v4042, 5
    %v4498 = vsel %vm1015, %v4496, %v4497
    %v4499 = vrot.slane %v4418, 5
    %v4500 = vrot.slane %v4499, 4
    %v4501 = vrot.slane %v4044, 5
    %v4502 = vsel %vm1015, %v4500, %v4501
    %v4503 = vrot.slane %v4419, 5
    %v4504 = vrot.slane %v4503, 4
    %v4505 = vrot.slane %v4046, 5
    %v4506 = vsel %vm1015, %v4504, %v4505
    %v4507 = vrot.slane %v4420, 5
    %v4508 = vrot.slane %v4507, 4
    %v4509 = vrot.slane %v4048, 5
    %v4510 = vsel %vm1015, %v4508, %v4509
    %v4511 = vrot.slane %v4421, 5
    %v4512 = vrot.slane %v4511, 4
    %v4513 = vrot.slane %v4050, 5
    %v4514 = vsel %vm1015, %v4512, %v4513
    %v4515 = vrot.slane %v4422, 5
    %v4516 = vrot.slane %v4515, 4
    %v4517 = vrot.slane %v4052, 5
    %v4518 = vsel %vm1015, %v4516, %v4517
    %s4519 = scalar_lea.vmem [#allocation8], 80
    %v4520 = vld [vmem:[%s4519] sm:$0xf]
    %v4521 = vld [vmem:[%s4519 + $0x4] sm:$0xf]
    %v4522 = vld [vmem:[%s4519 + $0x8] sm:$0xf]
    %v4523 = vld [vmem:[%s4519 + $0xc] sm:$0xf]
    %v4524 = vunpack.c.l.b16 %v4458
    %v4525 = vunpack.c.l.b16 %v4462
    %v4526 = vunpack.c.l.b16 %v4466
    %v4527 = vunpack.c.l.b16 %v4470
    %v4528 = vunpack.c.l.b16 %v4474
    %v4529 = vunpack.c.l.b16 %v4478
    %v4530 = vunpack.c.l.b16 %v4482
    %v4531 = vunpack.c.l.b16 %v4486
    %v4532 = vunpack.c.l.b16 %v4490
    %v4533 = vunpack.c.l.b16 %v4494
    %v4534 = vunpack.c.l.b16 %v4498
    %v4535 = vunpack.c.l.b16 %v4502
    %v4536 = vunpack.c.l.b16 %v4506
    %v4537 = vunpack.c.l.b16 %v4510
    %v4538 = vunpack.c.l.b16 %v4514
    %v4539 = vunpack.c.l.b16 %v4518
    %v4540 = vpack.c.b16 %v4525, %v4524
    %v4541 = vpack.c.b16 %v4527, %v4526
    %v4542 = vpack.c.b16 %v4529, %v4528
    %v4543 = vpack.c.b16 %v4531, %v4530
    %v4544 = vpack.c.b16 %v4533, %v4532
    %v4545 = vpack.c.b16 %v4535, %v4534
    %v4546 = vpack.c.b16 %v4537, %v4536
    %v4547 = vpack.c.b16 %v4539, %v4538
    %v4552 = vunpack.c.l.b16 %v4520
    %v4553 = vunpack.c.l.b16 %v4521
    %v4554 = vunpack.c.l.b16 %v4522
    %v4555 = vunpack.c.l.b16 %v4523
    %v4556 = vpack.c.b16 %v4553, %v4552
    %v4557 = vpack.c.b16 %v4555, %v4554
    %v4561 = vsel %vm766, %v4540, 0
    %v4564 = vsel %vm766, %v4541, 0
    %v4567 = vsel %vm766, %v4542, 0
    %v4570 = vsel %vm766, %v4543, 0
    %v4573 = vsel %vm766, %v4544, 0
    %v4576 = vsel %vm766, %v4545, 0
    %v4579 = vsel %vm766, %v4546, 0
    %v4582 = vsel %vm766, %v4547, 0
    %4584 = vmatpush.bf16.msra.mxu0 0
    %4585 = vmatpush.bf16.msra.mxu0 0
    %4586 = vmatpush.bf16.msra.mxu0 0
    %4587 = vmatpush.bf16.msra.mxu0 0
    %4588 = vmatpush.bf16.msra.mxu0 0
    %4589 = vmatpush.bf16.msra.mxu0 0
    %4590 = vmatpush.bf16.msra.mxu0 %v4557
    %4591 = vmatpush.bf16.msra.mxu0 %v4556
    %4592 = vmatmul.bf16.gmra.mxu0 %v4561
    %v4593 = vpop.f32.mrf.mxu0
    %v4594 = vadd.f32 0.0, %v4593
    %v4595 = vpop.f32.mrf.mxu0
    %v4596 = vadd.f32 0.0, %v4595
    %4597 = vmatmul.bf16.gmra.mxu0 %v4564
    %v4598 = vpop.f32.mrf.mxu0
    %v4599 = vadd.f32 0.0, %v4598
    %v4600 = vpop.f32.mrf.mxu0
    %v4601 = vadd.f32 0.0, %v4600
    %4602 = vmatmul.bf16.gmra.mxu0 %v4567
    %v4603 = vpop.f32.mrf.mxu0
    %v4604 = vadd.f32 0.0, %v4603
    %v4605 = vpop.f32.mrf.mxu0
    %v4606 = vadd.f32 0.0, %v4605
    %4607 = vmatmul.bf16.gmra.mxu0 %v4570
    %v4608 = vpop.f32.mrf.mxu0
    %v4609 = vadd.f32 0.0, %v4608
    %v4610 = vpop.f32.mrf.mxu0
    %v4611 = vadd.f32 0.0, %v4610
    %4612 = vmatmul.bf16.gmra.mxu0 %v4573
    %v4613 = vpop.f32.mrf.mxu0
    %v4614 = vadd.f32 0.0, %v4613
    %v4615 = vpop.f32.mrf.mxu0
    %v4616 = vadd.f32 0.0, %v4615
    %4617 = vmatmul.bf16.gmra.mxu0 %v4576
    %v4618 = vpop.f32.mrf.mxu0
    %v4619 = vadd.f32 0.0, %v4618
    %v4620 = vpop.f32.mrf.mxu0
    %v4621 = vadd.f32 0.0, %v4620
    %4622 = vmatmul.bf16.gmra.mxu0 %v4579
    %v4623 = vpop.f32.mrf.mxu0
    %v4624 = vadd.f32 0.0, %v4623
    %v4625 = vpop.f32.mrf.mxu0
    %v4626 = vadd.f32 0.0, %v4625
    %4627 = vmatmul.bf16.gmra.mxu0 %v4582
    %v4628 = vpop.f32.mrf.mxu0
    %v4629 = vadd.f32 0.0, %v4628
    %v4630 = vpop.f32.mrf.mxu0
    %v4631 = vadd.f32 0.0, %v4630
    %4632 = vdwg.mxu0
    %v4633 = vadd.f32 %v4391, %v4594
    %v4634 = vadd.f32 %v4392, %v4596
    %v4635 = vadd.f32 %v4393, %v4599
    %v4636 = vadd.f32 %v4394, %v4601
    %v4637 = vadd.f32 %v4395, %v4604
    %v4638 = vadd.f32 %v4396, %v4606
    %v4639 = vadd.f32 %v4397, %v4609
    %v4640 = vadd.f32 %v4398, %v4611
    %v4641 = vadd.f32 %v4399, %v4614
    %v4642 = vadd.f32 %v4400, %v4616
    %v4643 = vadd.f32 %v4401, %v4619
    %v4644 = vadd.f32 %v4402, %v4621
    %v4645 = vadd.f32 %v4403, %v4624
    %v4646 = vadd.f32 %v4404, %v4626
    %v4647 = vadd.f32 %v4405, %v4629
    %v4648 = vadd.f32 %v4406, %v4631
    %v4649 = vld [vmem:[%s2000] sm:$0xf]
    %v4650 = vld [vmem:[%s2000 + $0x8] sm:$0xf]
    %v4651 = vld [vmem:[%s2000 + $0x10] sm:$0xf]
    %v4652 = vld [vmem:[%s2000 + $0x18] sm:$0xf]
    %v4653 = vld [vmem:[%s2000 + $0x20] sm:$0xf]
    %v4654 = vld [vmem:[%s2000 + $0x28] sm:$0xf]
    %v4655 = vld [vmem:[%s2000 + $0x30] sm:$0xf]
    %v4656 = vld [vmem:[%s2000 + $0x38] sm:$0xf]
    %v4657 = vld [vmem:[%s2000 + $0x50] sm:$0xf]
    %v4658 = vld [vmem:[%s2000 + $0x58] sm:$0xf]
    %v4659 = vld [vmem:[%s2000 + $0x60] sm:$0xf]
    %v4660 = vld [vmem:[%s2000 + $0x68] sm:$0xf]
    %v4661 = vld [vmem:[%s2000 + $0x70] sm:$0xf]
    %v4662 = vld [vmem:[%s2000 + $0x78] sm:$0xf]
    %v4663 = vld [vmem:[%s2000 + $0x80] sm:$0xf]
    %v4664 = vld [vmem:[%s2000 + $0x88] sm:$0xf]
    %s4665 = scalar_lea.vmem [#allocation8], 96
    %v4666 = vld [vmem:[%s4665] sm:$0xf]
    %v4667 = vld [vmem:[%s4665 + $0x4] sm:$0xf]
    %v4668 = vld [vmem:[%s4665 + $0x8] sm:$0xf]
    %v4669 = vld [vmem:[%s4665 + $0xc] sm:$0xf]
    %v4686 = vunpack.c.l.b16 %v4649
    %v4687 = vunpack.c.l.b16 %v4650
    %v4688 = vunpack.c.l.b16 %v4651
    %v4689 = vunpack.c.l.b16 %v4652
    %v4690 = vunpack.c.l.b16 %v4653
    %v4691 = vunpack.c.l.b16 %v4654
    %v4692 = vunpack.c.l.b16 %v4655
    %v4693 = vunpack.c.l.b16 %v4656
    %v4694 = vunpack.c.l.b16 %v4657
    %v4695 = vunpack.c.l.b16 %v4658
    %v4696 = vunpack.c.l.b16 %v4659
    %v4697 = vunpack.c.l.b16 %v4660
    %v4698 = vunpack.c.l.b16 %v4661
    %v4699 = vunpack.c.l.b16 %v4662
    %v4700 = vunpack.c.l.b16 %v4663
    %v4701 = vunpack.c.l.b16 %v4664
    %v4702 = vpack.c.b16 %v4687, %v4686
    %v4703 = vpack.c.b16 %v4689, %v4688
    %v4704 = vpack.c.b16 %v4691, %v4690
    %v4705 = vpack.c.b16 %v4693, %v4692
    %v4706 = vpack.c.b16 %v4695, %v4694
    %v4707 = vpack.c.b16 %v4697, %v4696
    %v4708 = vpack.c.b16 %v4699, %v4698
    %v4709 = vpack.c.b16 %v4701, %v4700
    %v4714 = vunpack.c.l.b16 %v4666
    %v4715 = vunpack.c.l.b16 %v4667
    %v4716 = vunpack.c.l.b16 %v4668
    %v4717 = vunpack.c.l.b16 %v4669
    %v4718 = vpack.c.b16 %v4715, %v4714
    %v4719 = vpack.c.b16 %v4717, %v4716
    %v4723 = vsel %vm766, %v4702, 0
    %v4726 = vsel %vm766, %v4703, 0
    %v4729 = vsel %vm766, %v4704, 0
    %v4732 = vsel %vm766, %v4705, 0
    %v4735 = vsel %vm766, %v4706, 0
    %v4738 = vsel %vm766, %v4707, 0
    %v4741 = vsel %vm766, %v4708, 0
    %v4744 = vsel %vm766, %v4709, 0
    %4746 = vmatpush.bf16.msra.mxu0 0
    %4747 = vmatpush.bf16.msra.mxu0 0
    %4748 = vmatpush.bf16.msra.mxu0 0
    %4749 = vmatpush.bf16.msra.mxu0 0
    %4750 = vmatpush.bf16.msra.mxu0 0
    %4751 = vmatpush.bf16.msra.mxu0 0
    %4752 = vmatpush.bf16.msra.mxu0 %v4719
    %4753 = vmatpush.bf16.msra.mxu0 %v4718
    %4754 = vmatmul.bf16.gmra.mxu0 %v4723
    %v4755 = vpop.f32.mrf.mxu0
    %v4756 = vadd.f32 0.0, %v4755
    %v4757 = vpop.f32.mrf.mxu0
    %v4758 = vadd.f32 0.0, %v4757
    %4759 = vmatmul.bf16.gmra.mxu0 %v4726
    %v4760 = vpop.f32.mrf.mxu0
    %v4761 = vadd.f32 0.0, %v4760
    %v4762 = vpop.f32.mrf.mxu0
    %v4763 = vadd.f32 0.0, %v4762
    %4764 = vmatmul.bf16.gmra.mxu0 %v4729
    %v4765 = vpop.f32.mrf.mxu0
    %v4766 = vadd.f32 0.0, %v4765
    %v4767 = vpop.f32.mrf.mxu0
    %v4768 = vadd.f32 0.0, %v4767
    %4769 = vmatmul.bf16.gmra.mxu0 %v4732
    %v4770 = vpop.f32.mrf.mxu0
    %v4771 = vadd.f32 0.0, %v4770
    %v4772 = vpop.f32.mrf.mxu0
    %v4773 = vadd.f32 0.0, %v4772
    %4774 = vmatmul.bf16.gmra.mxu0 %v4735
    %v4775 = vpop.f32.mrf.mxu0
    %v4776 = vadd.f32 0.0, %v4775
    %v4777 = vpop.f32.mrf.mxu0
    %v4778 = vadd.f32 0.0, %v4777
    %4779 = vmatmul.bf16.gmra.mxu0 %v4738
    %v4780 = vpop.f32.mrf.mxu0
    %v4781 = vadd.f32 0.0, %v4780
    %v4782 = vpop.f32.mrf.mxu0
    %v4783 = vadd.f32 0.0, %v4782
    %4784 = vmatmul.bf16.gmra.mxu0 %v4741
    %v4785 = vpop.f32.mrf.mxu0
    %v4786 = vadd.f32 0.0, %v4785
    %v4787 = vpop.f32.mrf.mxu0
    %v4788 = vadd.f32 0.0, %v4787
    %4789 = vmatmul.bf16.gmra.mxu0 %v4744
    %v4790 = vpop.f32.mrf.mxu0
    %v4791 = vadd.f32 0.0, %v4790
    %v4792 = vpop.f32.mrf.mxu0
    %v4793 = vadd.f32 0.0, %v4792
    %4794 = vdwg.mxu0
    %v4795 = vadd.f32 %v4633, %v4756
    %v4796 = vadd.f32 %v4634, %v4758
    %v4797 = vadd.f32 %v4635, %v4761
    %v4798 = vadd.f32 %v4636, %v4763
    %v4799 = vadd.f32 %v4637, %v4766
    %v4800 = vadd.f32 %v4638, %v4768
    %v4801 = vadd.f32 %v4639, %v4771
    %v4802 = vadd.f32 %v4640, %v4773
    %v4803 = vadd.f32 %v4641, %v4776
    %v4804 = vadd.f32 %v4642, %v4778
    %v4805 = vadd.f32 %v4643, %v4781
    %v4806 = vadd.f32 %v4644, %v4783
    %v4807 = vadd.f32 %v4645, %v4786
    %v4808 = vadd.f32 %v4646, %v4788
    %v4809 = vadd.f32 %v4647, %v4791
    %v4810 = vadd.f32 %v4648, %v4793
    %v4811 = vld [vmem:[%s2000] sm:$0xf]
    %v4812 = vld [vmem:[%s2000 + $0x4] sm:$0x1]
    %v4813 = vld [vmem:[%s2000 + $0x8] sm:$0xf]
    %v4814 = vld [vmem:[%s2000 + $0xc] sm:$0x1]
    %v4815 = vld [vmem:[%s2000 + $0x10] sm:$0xf]
    %v4816 = vld [vmem:[%s2000 + $0x14] sm:$0x1]
    %v4817 = vld [vmem:[%s2000 + $0x18] sm:$0xf]
    %v4818 = vld [vmem:[%s2000 + $0x1c] sm:$0x1]
    %v4819 = vld [vmem:[%s2000 + $0x20] sm:$0xf]
    %v4820 = vld [vmem:[%s2000 + $0x24] sm:$0x1]
    %v4821 = vld [vmem:[%s2000 + $0x28] sm:$0xf]
    %v4822 = vld [vmem:[%s2000 + $0x2c] sm:$0x1]
    %v4823 = vld [vmem:[%s2000 + $0x30] sm:$0xf]
    %v4824 = vld [vmem:[%s2000 + $0x34] sm:$0x1]
    %v4825 = vld [vmem:[%s2000 + $0x38] sm:$0xf]
    %v4826 = vld [vmem:[%s2000 + $0x3c] sm:$0x1]
    %v4827 = vld [vmem:[%s2000 + $0x50] sm:$0xf]
    %v4828 = vld [vmem:[%s2000 + $0x54] sm:$0x1]
    %v4829 = vld [vmem:[%s2000 + $0x58] sm:$0xf]
    %v4830 = vld [vmem:[%s2000 + $0x5c] sm:$0x1]
    %v4831 = vld [vmem:[%s2000 + $0x60] sm:$0xf]
    %v4832 = vld [vmem:[%s2000 + $0x64] sm:$0x1]
    %v4833 = vld [vmem:[%s2000 + $0x68] sm:$0xf]
    %v4834 = vld [vmem:[%s2000 + $0x6c] sm:$0x1]
    %v4835 = vld [vmem:[%s2000 + $0x70] sm:$0xf]
    %v4836 = vld [vmem:[%s2000 + $0x74] sm:$0x1]
    %v4837 = vld [vmem:[%s2000 + $0x78] sm:$0xf]
    %v4838 = vld [vmem:[%s2000 + $0x7c] sm:$0x1]
    %v4839 = vld [vmem:[%s2000 + $0x80] sm:$0xf]
    %v4840 = vld [vmem:[%s2000 + $0x84] sm:$0x1]
    %v4841 = vld [vmem:[%s2000 + $0x88] sm:$0xf]
    %v4842 = vld [vmem:[%s2000 + $0x8c] sm:$0x1]
    %v4844 = vshrl.u32 %v4811, 16
    %v4846 = vrot.slane %v4844, 4
    %v4847 = vshll.u32 %v4811, 16
    %v4849 = vrot.slane %v4847, 5
    %v4850 = vor.u32 %v4846, %v4849
    %v4851 = vrot.slane %v4850, 4
    %v4853 = vshll.u32 %v4812, 16
    %v4855 = vrot.slane %v4853, 5
    %v4856 = vsel %vm500, %v4851, %v4855
    %v4858 = vshrl.u32 %v4813, 16
    %v4860 = vrot.slane %v4858, 4
    %v4861 = vshll.u32 %v4813, 16
    %v4863 = vrot.slane %v4861, 5
    %v4864 = vor.u32 %v4860, %v4863
    %v4865 = vrot.slane %v4864, 4
    %v4867 = vshll.u32 %v4814, 16
    %v4869 = vrot.slane %v4867, 5
    %v4870 = vsel %vm500, %v4865, %v4869
    %v4872 = vshrl.u32 %v4815, 16
    %v4874 = vrot.slane %v4872, 4
    %v4875 = vshll.u32 %v4815, 16
    %v4877 = vrot.slane %v4875, 5
    %v4878 = vor.u32 %v4874, %v4877
    %v4879 = vrot.slane %v4878, 4
    %v4881 = vshll.u32 %v4816, 16
    %v4883 = vrot.slane %v4881, 5
    %v4884 = vsel %vm500, %v4879, %v4883
    %v4886 = vshrl.u32 %v4817, 16
    %v4888 = vrot.slane %v4886, 4
    %v4889 = vshll.u32 %v4817, 16
    %v4891 = vrot.slane %v4889, 5
    %v4892 = vor.u32 %v4888, %v4891
    %v4893 = vrot.slane %v4892, 4
    %v4895 = vshll.u32 %v4818, 16
    %v4897 = vrot.slane %v4895, 5
    %v4898 = vsel %vm500, %v4893, %v4897
    %v4900 = vshrl.u32 %v4819, 16
    %v4902 = vrot.slane %v4900, 4
    %v4903 = vshll.u32 %v4819, 16
    %v4905 = vrot.slane %v4903, 5
    %v4906 = vor.u32 %v4902, %v4905
    %v4907 = vrot.slane %v4906, 4
    %v4909 = vshll.u32 %v4820, 16
    %v4911 = vrot.slane %v4909, 5
    %v4912 = vsel %vm500, %v4907, %v4911
    %v4914 = vshrl.u32 %v4821, 16
    %v4916 = vrot.slane %v4914, 4
    %v4917 = vshll.u32 %v4821, 16
    %v4919 = vrot.slane %v4917, 5
    %v4920 = vor.u32 %v4916, %v4919
    %v4921 = vrot.slane %v4920, 4
    %v4923 = vshll.u32 %v4822, 16
    %v4925 = vrot.slane %v4923, 5
    %v4926 = vsel %vm500, %v4921, %v4925
    %v4928 = vshrl.u32 %v4823, 16
    %v4930 = vrot.slane %v4928, 4
    %v4931 = vshll.u32 %v4823, 16
    %v4933 = vrot.slane %v4931, 5
    %v4934 = vor.u32 %v4930, %v4933
    %v4935 = vrot.slane %v4934, 4
    %v4937 = vshll.u32 %v4824, 16
    %v4939 = vrot.slane %v4937, 5
    %v4940 = vsel %vm500, %v4935, %v4939
    %v4942 = vshrl.u32 %v4825, 16
    %v4944 = vrot.slane %v4942, 4
    %v4945 = vshll.u32 %v4825, 16
    %v4947 = vrot.slane %v4945, 5
    %v4948 = vor.u32 %v4944, %v4947
    %v4949 = vrot.slane %v4948, 4
    %v4951 = vshll.u32 %v4826, 16
    %v4953 = vrot.slane %v4951, 5
    %v4954 = vsel %vm500, %v4949, %v4953
    %v4956 = vshrl.u32 %v4827, 16
    %v4958 = vrot.slane %v4956, 4
    %v4959 = vshll.u32 %v4827, 16
    %v4961 = vrot.slane %v4959, 5
    %v4962 = vor.u32 %v4958, %v4961
    %v4963 = vrot.slane %v4962, 4
    %v4965 = vshll.u32 %v4828, 16
    %v4967 = vrot.slane %v4965, 5
    %v4968 = vsel %vm500, %v4963, %v4967
    %v4970 = vshrl.u32 %v4829, 16
    %v4972 = vrot.slane %v4970, 4
    %v4973 = vshll.u32 %v4829, 16
    %v4975 = vrot.slane %v4973, 5
    %v4976 = vor.u32 %v4972, %v4975
    %v4977 = vrot.slane %v4976, 4
    %v4979 = vshll.u32 %v4830, 16
    %v4981 = vrot.slane %v4979, 5
    %v4982 = vsel %vm500, %v4977, %v4981
    %v4984 = vshrl.u32 %v4831, 16
    %v4986 = vrot.slane %v4984, 4
    %v4987 = vshll.u32 %v4831, 16
    %v4989 = vrot.slane %v4987, 5
    %v4990 = vor.u32 %v4986, %v4989
    %v4991 = vrot.slane %v4990, 4
    %v4993 = vshll.u32 %v4832, 16
    %v4995 = vrot.slane %v4993, 5
    %v4996 = vsel %vm500, %v4991, %v4995
    %v4998 = vshrl.u32 %v4833, 16
    %v5000 = vrot.slane %v4998, 4
    %v5001 = vshll.u32 %v4833, 16
    %v5003 = vrot.slane %v5001, 5
    %v5004 = vor.u32 %v5000, %v5003
    %v5005 = vrot.slane %v5004, 4
    %v5007 = vshll.u32 %v4834, 16
    %v5009 = vrot.slane %v5007, 5
    %v5010 = vsel %vm500, %v5005, %v5009
    %v5012 = vshrl.u32 %v4835, 16
    %v5014 = vrot.slane %v5012, 4
    %v5015 = vshll.u32 %v4835, 16
    %v5017 = vrot.slane %v5015, 5
    %v5018 = vor.u32 %v5014, %v5017
    %v5019 = vrot.slane %v5018, 4
    %v5021 = vshll.u32 %v4836, 16
    %v5023 = vrot.slane %v5021, 5
    %v5024 = vsel %vm500, %v5019, %v5023
    %v5026 = vshrl.u32 %v4837, 16
    %v5028 = vrot.slane %v5026, 4
    %v5029 = vshll.u32 %v4837, 16
    %v5031 = vrot.slane %v5029, 5
    %v5032 = vor.u32 %v5028, %v5031
    %v5033 = vrot.slane %v5032, 4
    %v5035 = vshll.u32 %v4838, 16
    %v5037 = vrot.slane %v5035, 5
    %v5038 = vsel %vm500, %v5033, %v5037
    %v5040 = vshrl.u32 %v4839, 16
    %v5042 = vrot.slane %v5040, 4
    %v5043 = vshll.u32 %v4839, 16
    %v5045 = vrot.slane %v5043, 5
    %v5046 = vor.u32 %v5042, %v5045
    %v5047 = vrot.slane %v5046, 4
    %v5049 = vshll.u32 %v4840, 16
    %v5051 = vrot.slane %v5049, 5
    %v5052 = vsel %vm500, %v5047, %v5051
    %v5054 = vshrl.u32 %v4841, 16
    %v5056 = vrot.slane %v5054, 4
    %v5057 = vshll.u32 %v4841, 16
    %v5059 = vrot.slane %v5057, 5
    %v5060 = vor.u32 %v5056, %v5059
    %v5061 = vrot.slane %v5060, 4
    %v5063 = vshll.u32 %v4842, 16
    %v5065 = vrot.slane %v5063, 5
    %v5066 = vsel %vm500, %v5061, %v5065
    %s5067 = scalar_lea.vmem [#allocation8], 112
    %v5068 = vld [vmem:[%s5067] sm:$0xf]
    %v5069 = vld [vmem:[%s5067 + $0x4] sm:$0xf]
    %v5070 = vld [vmem:[%s5067 + $0x8] sm:$0xf]
    %v5071 = vld [vmem:[%s5067 + $0xc] sm:$0xf]
    %v5072 = vunpack.c.l.b16 %v4856
    %v5073 = vunpack.c.l.b16 %v4870
    %v5074 = vunpack.c.l.b16 %v4884
    %v5075 = vunpack.c.l.b16 %v4898
    %v5076 = vunpack.c.l.b16 %v4912
    %v5077 = vunpack.c.l.b16 %v4926
    %v5078 = vunpack.c.l.b16 %v4940
    %v5079 = vunpack.c.l.b16 %v4954
    %v5080 = vunpack.c.l.b16 %v4968
    %v5081 = vunpack.c.l.b16 %v4982
    %v5082 = vunpack.c.l.b16 %v4996
    %v5083 = vunpack.c.l.b16 %v5010
    %v5084 = vunpack.c.l.b16 %v5024
    %v5085 = vunpack.c.l.b16 %v5038
    %v5086 = vunpack.c.l.b16 %v5052
    %v5087 = vunpack.c.l.b16 %v5066
    %v5088 = vpack.c.b16 %v5073, %v5072
    %v5089 = vpack.c.b16 %v5075, %v5074
    %v5090 = vpack.c.b16 %v5077, %v5076
    %v5091 = vpack.c.b16 %v5079, %v5078
    %v5092 = vpack.c.b16 %v5081, %v5080
    %v5093 = vpack.c.b16 %v5083, %v5082
    %v5094 = vpack.c.b16 %v5085, %v5084
    %v5095 = vpack.c.b16 %v5087, %v5086
    %v5100 = vunpack.c.l.b16 %v5068
    %v5101 = vunpack.c.l.b16 %v5069
    %v5102 = vunpack.c.l.b16 %v5070
    %v5103 = vunpack.c.l.b16 %v5071
    %v5104 = vpack.c.b16 %v5101, %v5100
    %v5105 = vpack.c.b16 %v5103, %v5102
    %v5109 = vsel %vm766, %v5088, 0
    %v5112 = vsel %vm766, %v5089, 0
    %v5115 = vsel %vm766, %v5090, 0
    %v5118 = vsel %vm766, %v5091, 0
    %v5121 = vsel %vm766, %v5092, 0
    %v5124 = vsel %vm766, %v5093, 0
    %v5127 = vsel %vm766, %v5094, 0
    %v5130 = vsel %vm766, %v5095, 0
    %5132 = vmatpush.bf16.msra.mxu0 0
    %5133 = vmatpush.bf16.msra.mxu0 0
    %5134 = vmatpush.bf16.msra.mxu0 0
    %5135 = vmatpush.bf16.msra.mxu0 0
    %5136 = vmatpush.bf16.msra.mxu0 0
    %5137 = vmatpush.bf16.msra.mxu0 0
    %5138 = vmatpush.bf16.msra.mxu0 %v5105
    %5139 = vmatpush.bf16.msra.mxu0 %v5104
    %5140 = vmatmul.bf16.gmra.mxu0 %v5109
    %v5141 = vpop.f32.mrf.mxu0
    %v5142 = vadd.f32 0.0, %v5141
    %v5143 = vpop.f32.mrf.mxu0
    %v5144 = vadd.f32 0.0, %v5143
    %5145 = vmatmul.bf16.gmra.mxu0 %v5112
    %v5146 = vpop.f32.mrf.mxu0
    %v5147 = vadd.f32 0.0, %v5146
    %v5148 = vpop.f32.mrf.mxu0
    %v5149 = vadd.f32 0.0, %v5148
    %5150 = vmatmul.bf16.gmra.mxu0 %v5115
    %v5151 = vpop.f32.mrf.mxu0
    %v5152 = vadd.f32 0.0, %v5151
    %v5153 = vpop.f32.mrf.mxu0
    %v5154 = vadd.f32 0.0, %v5153
    %5155 = vmatmul.bf16.gmra.mxu0 %v5118
    %v5156 = vpop.f32.mrf.mxu0
    %v5157 = vadd.f32 0.0, %v5156
    %v5158 = vpop.f32.mrf.mxu0
    %v5159 = vadd.f32 0.0, %v5158
    %5160 = vmatmul.bf16.gmra.mxu0 %v5121
    %v5161 = vpop.f32.mrf.mxu0
    %v5162 = vadd.f32 0.0, %v5161
    %v5163 = vpop.f32.mrf.mxu0
    %v5164 = vadd.f32 0.0, %v5163
    %5165 = vmatmul.bf16.gmra.mxu0 %v5124
    %v5166 = vpop.f32.mrf.mxu0
    %v5167 = vadd.f32 0.0, %v5166
    %v5168 = vpop.f32.mrf.mxu0
    %v5169 = vadd.f32 0.0, %v5168
    %5170 = vmatmul.bf16.gmra.mxu0 %v5127
    %v5171 = vpop.f32.mrf.mxu0
    %v5172 = vadd.f32 0.0, %v5171
    %v5173 = vpop.f32.mrf.mxu0
    %v5174 = vadd.f32 0.0, %v5173
    %5175 = vmatmul.bf16.gmra.mxu0 %v5130
    %v5176 = vpop.f32.mrf.mxu0
    %v5177 = vadd.f32 0.0, %v5176
    %v5178 = vpop.f32.mrf.mxu0
    %v5179 = vadd.f32 0.0, %v5178
    %5180 = vdwg.mxu0
    %v5181 = vadd.f32 %v4795, %v5142
    %v5182 = vadd.f32 %v4796, %v5144
    %v5183 = vadd.f32 %v4797, %v5147
    %v5184 = vadd.f32 %v4798, %v5149
    %v5185 = vadd.f32 %v4799, %v5152
    %v5186 = vadd.f32 %v4800, %v5154
    %v5187 = vadd.f32 %v4801, %v5157
    %v5188 = vadd.f32 %v4802, %v5159
    %v5189 = vadd.f32 %v4803, %v5162
    %v5190 = vadd.f32 %v4804, %v5164
    %v5191 = vadd.f32 %v4805, %v5167
    %v5192 = vadd.f32 %v4806, %v5169
    %v5193 = vadd.f32 %v4807, %v5172
    %v5194 = vadd.f32 %v4808, %v5174
    %v5195 = vadd.f32 %v4809, %v5177
    %v5196 = vadd.f32 %v4810, %v5179
    %v5197 = vld [vmem:[%s2000] sm:$0xe]
    %v5198 = vld [vmem:[%s2000 + $0x8] sm:$0xe]
    %v5199 = vld [vmem:[%s2000 + $0x10] sm:$0xe]
    %v5200 = vld [vmem:[%s2000 + $0x18] sm:$0xe]
    %v5201 = vld [vmem:[%s2000 + $0x20] sm:$0xe]
    %v5202 = vld [vmem:[%s2000 + $0x28] sm:$0xe]
    %v5203 = vld [vmem:[%s2000 + $0x30] sm:$0xe]
    %v5204 = vld [vmem:[%s2000 + $0x38] sm:$0xe]
    %v5205 = vld [vmem:[%s2000 + $0x50] sm:$0xe]
    %v5206 = vld [vmem:[%s2000 + $0x58] sm:$0xe]
    %v5207 = vld [vmem:[%s2000 + $0x60] sm:$0xe]
    %v5208 = vld [vmem:[%s2000 + $0x68] sm:$0xe]
    %v5209 = vld [vmem:[%s2000 + $0x70] sm:$0xe]
    %v5210 = vld [vmem:[%s2000 + $0x78] sm:$0xe]
    %v5211 = vld [vmem:[%s2000 + $0x80] sm:$0xe]
    %v5212 = vld [vmem:[%s2000 + $0x88] sm:$0xe]
    %v5245 = vrot.slane %v5197, 5
    %v5246 = vrot.slane %v5245, 4
    %v5247 = vrot.slane %v4812, 5
    %v5248 = vsel %vm1015, %v5246, %v5247
    %v5249 = vrot.slane %v5198, 5
    %v5250 = vrot.slane %v5249, 4
    %v5251 = vrot.slane %v4814, 5
    %v5252 = vsel %vm1015, %v5250, %v5251
    %v5253 = vrot.slane %v5199, 5
    %v5254 = vrot.slane %v5253, 4
    %v5255 = vrot.slane %v4816, 5
    %v5256 = vsel %vm1015, %v5254, %v5255
    %v5257 = vrot.slane %v5200, 5
    %v5258 = vrot.slane %v5257, 4
    %v5259 = vrot.slane %v4818, 5
    %v5260 = vsel %vm1015, %v5258, %v5259
    %v5261 = vrot.slane %v5201, 5
    %v5262 = vrot.slane %v5261, 4
    %v5263 = vrot.slane %v4820, 5
    %v5264 = vsel %vm1015, %v5262, %v5263
    %v5265 = vrot.slane %v5202, 5
    %v5266 = vrot.slane %v5265, 4
    %v5267 = vrot.slane %v4822, 5
    %v5268 = vsel %vm1015, %v5266, %v5267
    %v5269 = vrot.slane %v5203, 5
    %v5270 = vrot.slane %v5269, 4
    %v5271 = vrot.slane %v4824, 5
    %v5272 = vsel %vm1015, %v5270, %v5271
    %v5273 = vrot.slane %v5204, 5
    %v5274 = vrot.slane %v5273, 4
    %v5275 = vrot.slane %v4826, 5
    %v5276 = vsel %vm1015, %v5274, %v5275
    %v5277 = vrot.slane %v5205, 5
    %v5278 = vrot.slane %v5277, 4
    %v5279 = vrot.slane %v4828, 5
    %v5280 = vsel %vm1015, %v5278, %v5279
    %v5281 = vrot.slane %v5206, 5
    %v5282 = vrot.slane %v5281, 4
    %v5283 = vrot.slane %v4830, 5
    %v5284 = vsel %vm1015, %v5282, %v5283
    %v5285 = vrot.slane %v5207, 5
    %v5286 = vrot.slane %v5285, 4
    %v5287 = vrot.slane %v4832, 5
    %v5288 = vsel %vm1015, %v5286, %v5287
    %v5289 = vrot.slane %v5208, 5
    %v5290 = vrot.slane %v5289, 4
    %v5291 = vrot.slane %v4834, 5
    %v5292 = vsel %vm1015, %v5290, %v5291
    %v5293 = vrot.slane %v5209, 5
    %v5294 = vrot.slane %v5293, 4
    %v5295 = vrot.slane %v4836, 5
    %v5296 = vsel %vm1015, %v5294, %v5295
    %v5297 = vrot.slane %v5210, 5
    %v5298 = vrot.slane %v5297, 4
    %v5299 = vrot.slane %v4838, 5
    %v5300 = vsel %vm1015, %v5298, %v5299
    %v5301 = vrot.slane %v5211, 5
    %v5302 = vrot.slane %v5301, 4
    %v5303 = vrot.slane %v4840, 5
    %v5304 = vsel %vm1015, %v5302, %v5303
    %v5305 = vrot.slane %v5212, 5
    %v5306 = vrot.slane %v5305, 4
    %v5307 = vrot.slane %v4842, 5
    %v5308 = vsel %vm1015, %v5306, %v5307
    %s5309 = scalar_lea.vmem [#allocation8], 128
    %v5310 = vld [vmem:[%s5309] sm:$0xf]
    %v5311 = vld [vmem:[%s5309 + $0x4] sm:$0xf]
    %v5312 = vld [vmem:[%s5309 + $0x8] sm:$0xf]
    %v5313 = vld [vmem:[%s5309 + $0xc] sm:$0xf]
    %v5314 = vunpack.c.l.b16 %v5248
    %v5315 = vunpack.c.l.b16 %v5252
    %v5316 = vunpack.c.l.b16 %v5256
    %v5317 = vunpack.c.l.b16 %v5260
    %v5318 = vunpack.c.l.b16 %v5264
    %v5319 = vunpack.c.l.b16 %v5268
    %v5320 = vunpack.c.l.b16 %v5272
    %v5321 = vunpack.c.l.b16 %v5276
    %v5322 = vunpack.c.l.b16 %v5280
    %v5323 = vunpack.c.l.b16 %v5284
    %v5324 = vunpack.c.l.b16 %v5288
    %v5325 = vunpack.c.l.b16 %v5292
    %v5326 = vunpack.c.l.b16 %v5296
    %v5327 = vunpack.c.l.b16 %v5300
    %v5328 = vunpack.c.l.b16 %v5304
    %v5329 = vunpack.c.l.b16 %v5308
    %v5330 = vpack.c.b16 %v5315, %v5314
    %v5331 = vpack.c.b16 %v5317, %v5316
    %v5332 = vpack.c.b16 %v5319, %v5318
    %v5333 = vpack.c.b16 %v5321, %v5320
    %v5334 = vpack.c.b16 %v5323, %v5322
    %v5335 = vpack.c.b16 %v5325, %v5324
    %v5336 = vpack.c.b16 %v5327, %v5326
    %v5337 = vpack.c.b16 %v5329, %v5328
    %v5342 = vunpack.c.l.b16 %v5310
    %v5343 = vunpack.c.l.b16 %v5311
    %v5344 = vunpack.c.l.b16 %v5312
    %v5345 = vunpack.c.l.b16 %v5313
    %v5346 = vpack.c.b16 %v5343, %v5342
    %v5347 = vpack.c.b16 %v5345, %v5344
    %v5351 = vsel %vm766, %v5330, 0
    %v5354 = vsel %vm766, %v5331, 0
    %v5357 = vsel %vm766, %v5332, 0
    %v5360 = vsel %vm766, %v5333, 0
    %v5363 = vsel %vm766, %v5334, 0
    %v5366 = vsel %vm766, %v5335, 0
    %v5369 = vsel %vm766, %v5336, 0
    %v5372 = vsel %vm766, %v5337, 0
    %5374 = vmatpush.bf16.msra.mxu0 0
    %5375 = vmatpush.bf16.msra.mxu0 0
    %5376 = vmatpush.bf16.msra.mxu0 0
    %5377 = vmatpush.bf16.msra.mxu0 0
    %5378 = vmatpush.bf16.msra.mxu0 0
    %5379 = vmatpush.bf16.msra.mxu0 0
    %5380 = vmatpush.bf16.msra.mxu0 %v5347
    %5381 = vmatpush.bf16.msra.mxu0 %v5346
    %5382 = vmatmul.bf16.gmra.mxu0 %v5351
    %v5383 = vpop.f32.mrf.mxu0
    %v5384 = vadd.f32 0.0, %v5383
    %v5385 = vpop.f32.mrf.mxu0
    %v5386 = vadd.f32 0.0, %v5385
    %5387 = vmatmul.bf16.gmra.mxu0 %v5354
    %v5388 = vpop.f32.mrf.mxu0
    %v5389 = vadd.f32 0.0, %v5388
    %v5390 = vpop.f32.mrf.mxu0
    %v5391 = vadd.f32 0.0, %v5390
    %5392 = vmatmul.bf16.gmra.mxu0 %v5357
    %v5393 = vpop.f32.mrf.mxu0
    %v5394 = vadd.f32 0.0, %v5393
    %v5395 = vpop.f32.mrf.mxu0
    %v5396 = vadd.f32 0.0, %v5395
    %5397 = vmatmul.bf16.gmra.mxu0 %v5360
    %v5398 = vpop.f32.mrf.mxu0
    %v5399 = vadd.f32 0.0, %v5398
    %v5400 = vpop.f32.mrf.mxu0
    %v5401 = vadd.f32 0.0, %v5400
    %5402 = vmatmul.bf16.gmra.mxu0 %v5363
    %v5403 = vpop.f32.mrf.mxu0
    %v5404 = vadd.f32 0.0, %v5403
    %v5405 = vpop.f32.mrf.mxu0
    %v5406 = vadd.f32 0.0, %v5405
    %5407 = vmatmul.bf16.gmra.mxu0 %v5366
    %v5408 = vpop.f32.mrf.mxu0
    %v5409 = vadd.f32 0.0, %v5408
    %v5410 = vpop.f32.mrf.mxu0
    %v5411 = vadd.f32 0.0, %v5410
    %5412 = vmatmul.bf16.gmra.mxu0 %v5369
    %v5413 = vpop.f32.mrf.mxu0
    %v5414 = vadd.f32 0.0, %v5413
    %v5415 = vpop.f32.mrf.mxu0
    %v5416 = vadd.f32 0.0, %v5415
    %5417 = vmatmul.bf16.gmra.mxu0 %v5372
    %v5418 = vpop.f32.mrf.mxu0
    %v5419 = vadd.f32 0.0, %v5418
    %v5420 = vpop.f32.mrf.mxu0
    %v5421 = vadd.f32 0.0, %v5420
    %5422 = vdwg.mxu0
    %v5423 = vadd.f32 %v5181, %v5384
    %v5424 = vadd.f32 %v5182, %v5386
    %v5425 = vadd.f32 %v5183, %v5389
    %v5426 = vadd.f32 %v5184, %v5391
    %v5427 = vadd.f32 %v5185, %v5394
    %v5428 = vadd.f32 %v5186, %v5396
    %v5429 = vadd.f32 %v5187, %v5399
    %v5430 = vadd.f32 %v5188, %v5401
    %v5431 = vadd.f32 %v5189, %v5404
    %v5432 = vadd.f32 %v5190, %v5406
    %v5433 = vadd.f32 %v5191, %v5409
    %v5434 = vadd.f32 %v5192, %v5411
    %v5435 = vadd.f32 %v5193, %v5414
    %v5436 = vadd.f32 %v5194, %v5416
    %v5437 = vadd.f32 %v5195, %v5419
    %v5438 = vadd.f32 %v5196, %v5421
    %v5439 = vld [vmem:[%s5] sm:$0x1]
    %v5441 = vperm.slane %v5439, 0
    %v5443 = vmul.f32 %v5423, %v5441
    %v5444 = vmul.f32 %v5424, %v5441
    %v5445 = vmul.f32 %v5425, %v5441
    %v5446 = vmul.f32 %v5426, %v5441
    %v5447 = vmul.f32 %v5427, %v5441
    %v5448 = vmul.f32 %v5428, %v5441
    %v5449 = vmul.f32 %v5429, %v5441
    %v5450 = vmul.f32 %v5430, %v5441
    %v5451 = vmul.f32 %v5431, %v5441
    %v5452 = vmul.f32 %v5432, %v5441
    %v5453 = vmul.f32 %v5433, %v5441
    %v5454 = vmul.f32 %v5434, %v5441
    %v5455 = vmul.f32 %v5435, %v5441
    %v5456 = vmul.f32 %v5436, %v5441
    %v5457 = vmul.f32 %v5437, %v5441
    %v5458 = vmul.f32 %v5438, %v5441
    %v5459 = vld [vmem:[%s6] sm:$0x1]
    %v5461 = vperm.slane %v5459, 0
    %v5463 = vadd.f32 %v5443, %v5461
    %v5464 = vadd.f32 %v5444, %v5461
    %v5465 = vadd.f32 %v5445, %v5461
    %v5466 = vadd.f32 %v5446, %v5461
    %v5467 = vadd.f32 %v5447, %v5461
    %v5468 = vadd.f32 %v5448, %v5461
    %v5469 = vadd.f32 %v5449, %v5461
    %v5470 = vadd.f32 %v5450, %v5461
    %v5471 = vadd.f32 %v5451, %v5461
    %v5472 = vadd.f32 %v5452, %v5461
    %v5473 = vadd.f32 %v5453, %v5461
    %v5474 = vadd.f32 %v5454, %v5461
    %v5475 = vadd.f32 %v5455, %v5461
    %v5476 = vadd.f32 %v5456, %v5461
    %v5477 = vadd.f32 %v5457, %v5461
    %v5478 = vadd.f32 %v5458, %v5461
    %v5479 = vld [vmem:[#allocation3] sm:$0xf]
    %v5480 = vld [vmem:[#allocation3 + $0x4] sm:$0xf]
    %v5481 = vld [vmem:[#allocation3 + $0x8] sm:$0xf]
    %v5482 = vld [vmem:[#allocation3 + $0xc] sm:$0xf]
    %v5483 = vld [vmem:[#allocation3 + $0x10] sm:$0xf]
    %v5484 = vld [vmem:[#allocation3 + $0x14] sm:$0xf]
    %v5485 = vld [vmem:[#allocation3 + $0x18] sm:$0xf]
    %v5486 = vld [vmem:[#allocation3 + $0x1c] sm:$0xf]
    %v5487 = vld [vmem:[#allocation3 + $0x20] sm:$0xf]
    %v5488 = vld [vmem:[#allocation3 + $0x24] sm:$0xf]
    %v5489 = vld [vmem:[#allocation3 + $0x28] sm:$0xf]
    %v5490 = vld [vmem:[#allocation3 + $0x2c] sm:$0xf]
    %v5491 = vld [vmem:[#allocation3 + $0x30] sm:$0xf]
    %v5492 = vld [vmem:[#allocation3 + $0x34] sm:$0xf]
    %v5493 = vld [vmem:[#allocation3 + $0x38] sm:$0xf]
    %v5494 = vld [vmem:[#allocation3 + $0x3c] sm:$0xf]
    %v5495 = vunpack.c.l.bf16 %v5479
    %v5496 = vunpack.c.l.bf16 %v5480
    %v5497 = vunpack.c.l.bf16 %v5481
    %v5498 = vunpack.c.l.bf16 %v5482
    %v5499 = vunpack.c.l.bf16 %v5483
    %v5500 = vunpack.c.l.bf16 %v5484
    %v5501 = vunpack.c.l.bf16 %v5485
    %v5502 = vunpack.c.l.bf16 %v5486
    %v5503 = vunpack.c.l.bf16 %v5487
    %v5504 = vunpack.c.l.bf16 %v5488
    %v5505 = vunpack.c.l.bf16 %v5489
    %v5506 = vunpack.c.l.bf16 %v5490
    %v5507 = vunpack.c.l.bf16 %v5491
    %v5508 = vunpack.c.l.bf16 %v5492
    %v5509 = vunpack.c.l.bf16 %v5493
    %v5510 = vunpack.c.l.bf16 %v5494
    %v5511 = vadd.f32 %v5463, %v5495
    %v5512 = vadd.f32 %v5464, %v5496
    %v5513 = vadd.f32 %v5465, %v5497
    %v5514 = vadd.f32 %v5466, %v5498
    %v5515 = vadd.f32 %v5467, %v5499
    %v5516 = vadd.f32 %v5468, %v5500
    %v5517 = vadd.f32 %v5469, %v5501
    %v5518 = vadd.f32 %v5470, %v5502
    %v5519 = vadd.f32 %v5471, %v5503
    %v5520 = vadd.f32 %v5472, %v5504
    %v5521 = vadd.f32 %v5473, %v5505
    %v5522 = vadd.f32 %v5474, %v5506
    %v5523 = vadd.f32 %v5475, %v5507
    %v5524 = vadd.f32 %v5476, %v5508
    %v5525 = vadd.f32 %v5477, %v5509
    %v5526 = vadd.f32 %v5478, %v5510
    %v5527 = vmax.f32 %v5511, 0.0
    %v5528 = vmax.f32 %v5512, 0.0
    %v5529 = vmax.f32 %v5513, 0.0
    %v5530 = vmax.f32 %v5514, 0.0
    %v5531 = vmax.f32 %v5515, 0.0
    %v5532 = vmax.f32 %v5516, 0.0
    %v5533 = vmax.f32 %v5517, 0.0
    %v5534 = vmax.f32 %v5518, 0.0
    %v5535 = vmax.f32 %v5519, 0.0
    %v5536 = vmax.f32 %v5520, 0.0
    %v5537 = vmax.f32 %v5521, 0.0
    %v5538 = vmax.f32 %v5522, 0.0
    %v5539 = vmax.f32 %v5523, 0.0
    %v5540 = vmax.f32 %v5524, 0.0
    %v5541 = vmax.f32 %v5525, 0.0
    %v5542 = vmax.f32 %v5526, 0.0
    %5543 = vst.msk [vmem:[#allocation9] sm:$0xff] %vm766, %v5527
    %5544 = vst.msk [vmem:[#allocation9 + $0x8] sm:$0xff] %vm766, %v5528
    %5545 = vst.msk [vmem:[#allocation9 + $0x10] sm:$0xff] %vm766, %v5529
    %5546 = vst.msk [vmem:[#allocation9 + $0x18] sm:$0xff] %vm766, %v5530
    %5547 = vst.msk [vmem:[#allocation9 + $0x20] sm:$0xff] %vm766, %v5531
    %5548 = vst.msk [vmem:[#allocation9 + $0x28] sm:$0xff] %vm766, %v5532
    %5549 = vst.msk [vmem:[#allocation9 + $0x30] sm:$0xff] %vm766, %v5533
    %5550 = vst.msk [vmem:[#allocation9 + $0x38] sm:$0xff] %vm766, %v5534
    %5551 = vst.msk [vmem:[#allocation9 + $0x40] sm:$0xff] %vm766, %v5535
    %5552 = vst.msk [vmem:[#allocation9 + $0x48] sm:$0xff] %vm766, %v5536
    %5553 = vst.msk [vmem:[#allocation9 + $0x50] sm:$0xff] %vm766, %v5537
    %5554 = vst.msk [vmem:[#allocation9 + $0x58] sm:$0xff] %vm766, %v5538
    %5555 = vst.msk [vmem:[#allocation9 + $0x60] sm:$0xff] %vm766, %v5539
    %5556 = vst.msk [vmem:[#allocation9 + $0x68] sm:$0xff] %vm766, %v5540
    %5557 = vst.msk [vmem:[#allocation9 + $0x70] sm:$0xff] %vm766, %v5541
    %5558 = vst.msk [vmem:[#allocation9 + $0x78] sm:$0xff] %vm766, %v5542
    // Predicated region
    $region42: #{tpu_custom_call.1} parent=1 // pred_check
      _
    $region43: #{tpu_custom_call.1} parent=1 // pred_check_branch
      %5560 = sbr.rel (0) target = $region45
    $region44: #{tpu_custom_call.1} parent=1 // pred_region
      %5562 = vsyncadd [#allocation5], 0
      %s5563 = sshll.u32 [#allocation9], 4
      %s5564 = int_to_ptr.vmem [resolvable:$true] %s5563
      %s5565 = sshll.u32 %s7, 4
      %s5566 = int_to_ptr.hbm [resolvable:$true] %s5565
      %5571 = dma.vmem_to_hbm [thread:$0]  %s5564, 2048, %s5566, [#allocation5], 128, 128, 8
    $region45: #{tpu_custom_call.1} parent=1 // pred_fallthru
      _
    // Predicated region
    $region46: #{tpu_custom_call.1} parent=1 // pred_check
      _
    $region47: #{tpu_custom_call.1} parent=1 // pred_check_branch
      %5573 = sbr.rel (0) target = $region49
    $region48: #{tpu_custom_call.1} parent=1 // pred_region
      %5575 = dma.done [#allocation5], 2048
    $region49: #{tpu_custom_call.1} parent=1 // pred_fallthru
      _
    %5576 = vsyncpa [#allocation4], 1
    %5577 = vsyncpa [#allocation7], 1
    %5578 = vsyncpa [#allocation5], 1

</llo_original>
